<compile_context>
chip_gen: v7x
topology: tpu7x:2x2x1
jax: 0.10.0
libtpu: 0.0.40
codegen_flags: <defaults>
</compile_context>

<pallas_src>
import numpy as np
import jax
import jax.numpy as jnp
from jax.experimental import pallas as pl
from jax.experimental.pallas import tpu as pltpu

GRID = 16        # grid_size
FEAT = 3         # feature_size
KPAD = 8         # FEAT inputs + 1 constant "bias" column, padded to 8 lanes
TB_DEFAULT = 256 # batch rows per grid step (>=256 keeps the MXU fed; use 128 on v5e)


# ---------------------------------------------------------------------------
# Parameter setup (plain numpy/JAX glue): lower convs to dense matrices.
# ---------------------------------------------------------------------------
def _convT_as_matmul(W, b, in_ch, out_ch, h_in, w_in, k, stride, pad):
    """ConvTranspose2d -> (in_ch*h_in*w_in, out_ch*h_out*w_out) dense matrix."""
    h_out = (h_in - 1) * stride - 2 * pad + k
    w_out = (w_in - 1) * stride - 2 * pad + k
    M = np.zeros((in_ch * h_in * w_in, out_ch * h_out * w_out), np.float32)
    for ci in range(in_ch):
        for iy in range(h_in):
            for ix in range(w_in):
                row = ci * h_in * w_in + iy * w_in + ix
                for co in range(out_ch):
                    for kh in range(k):
                        oy = iy * stride - pad + kh
                        if oy < 0 or oy >= h_out:
                            continue
                        for kw in range(k):
                            ox = ix * stride - pad + kw
                            if ox < 0 or ox >= w_out:
                                continue
                            col = co * h_out * w_out + oy * w_out + ox
                            M[row, col] += W[ci, co, kh, kw]
    bias = np.repeat(b.astype(np.float32), h_out * w_out).reshape(1, -1)
    return M, bias, h_out, w_out


def _conv_as_matmul(W, b, in_ch, out_ch, h, w, k, pad):
    """Conv2d (same padding) -> (in_ch*h*w, out_ch*h*w) dense matrix."""
    M = np.zeros((in_ch * h * w, out_ch * h * w), np.float32)
    for co in range(out_ch):
        for ci in range(in_ch):
            for oy in range(h):
                for ox in range(w):
                    col = co * h * w + oy * w + ox
                    for kh in range(k):
                        iy = oy - pad + kh
                        if iy < 0 or iy >= h:
                            continue
                        for kw in range(k):
                            ix = ox - pad + kw
                            if ix < 0 or ix >= w:
                                continue
                            row = ci * h * w + iy * w + ix
                            M[row, col] += W[co, ci, kh, kw]
    bias = np.repeat(b.astype(np.float32), h * w).reshape(1, -1)
    return M, bias


def _bilinear_1d(in_size, out_size):
    """PyTorch F.interpolate bilinear, align_corners=False, 1-D weights."""
    R = np.zeros((out_size, in_size), np.float32)
    scale = in_size / out_size
    for o in range(out_size):
        src = (o + 0.5) * scale - 0.5
        if src < 0.0:
            src = 0.0
        i0 = int(np.floor(src))
        if i0 > in_size - 1:
            i0 = in_size - 1
        i1 = i0 + 1 if i0 < in_size - 1 else i0
        l1 = src - i0
        R[o, i0] += 1.0 - l1
        R[o, i1] += l1
    return R


def _bilinear_matrix(h_in, w_in, h_out, w_out):
    Ry = _bilinear_1d(h_in, h_out)   # (h_out, h_in)
    Rx = _bilinear_1d(w_in, w_out)   # (w_out, w_in)
    # M[iy*w_in+ix, oy*w_out+ox] = Ry[oy, iy] * Rx[ox, ix]
    M = np.einsum('Oi,Pj->ijOP', Ry, Rx).reshape(h_in * w_in, h_out * w_out)
    return M.astype(np.float32)


def init_params(key):
    ks = jax.random.split(key, 8)
    # Same parameter shapes as the PyTorch module's layers.
    w1 = np.asarray(0.1 * jax.random.normal(ks[0], (FEAT, 64, 4, 4)), np.float32)
    c1 = np.asarray(0.1 * jax.random.normal(ks[1], (64,)), np.float32)
    w2 = np.asarray(0.1 * jax.random.normal(ks[2], (64, 32, 4, 4)), np.float32)
    c2 = np.asarray(0.1 * jax.random.normal(ks[3], (32,)), np.float32)
    w3 = np.asarray(0.1 * jax.random.normal(ks[4], (32, 16, 4, 4)), np.float32)
    c3 = np.asarray(0.1 * jax.random.normal(ks[5], (16,)), np.float32)
    w4 = np.asarray(0.1 * jax.random.normal(ks[6], (1, 16, 3, 3)), np.float32)
    c4 = np.asarray(0.1 * jax.random.normal(ks[7], (1,)), np.float32)

    M1, b1, h, w = _convT_as_matmul(w1, c1, FEAT, 64, 1, 1, 4, 2, 1)   # 1x1 -> 2x2
    M2, b2, h, w = _convT_as_matmul(w2, c2, 64, 32, h, w, 4, 2, 1)     # 2x2 -> 4x4
    M3, b3, h, w = _convT_as_matmul(w3, c3, 32, 16, h, w, 4, 2, 1)     # 4x4 -> 8x8
    M4, b4 = _conv_as_matmul(w4, c4, 16, 1, h, w, 3, 1)                # 8x8 -> 8x8
    M5 = _bilinear_matrix(h, w, GRID, GRID)                            # 8x8 -> GRIDxGRID

    # Pad the tiny first contraction dim (3) up to KPAD rows and fold the first
    # bias into row FEAT (the wrapper feeds a constant 1.0 in that column).
    M1p = np.zeros((KPAD, M1.shape[1]), np.float32)
    M1p[:FEAT] = M1
    M1p[FEAT] = b1[0]

    f32 = lambda a: jnp.asarray(a, jnp.float32)
    bf16 = lambda a: jnp.asarray(a, jnp.bfloat16)
    # (m1, m2, b2, m3, b3, m4, b4, m5)
    return (f32(M1p), bf16(M2), f32(b2), bf16(M3), f32(b3),
            f32(M4), f32(b4), f32(M5))


# ---------------------------------------------------------------------------
# Pallas kernel: the whole decoder + interpolation as 5 MXU matmuls.
# ---------------------------------------------------------------------------
def decoder_kernel(x_ref, m1_ref, m2_ref, b2_ref, m3_ref, b3_ref,
                   m4_ref, b4_ref, m5_ref, o_ref):
    # Layer 1: bias is folded into m1 via the constant-1 input column.
    h = jnp.dot(x_ref[...], m1_ref[...], preferred_element_type=jnp.float32)
    h = jnp.maximum(h, 0.0)                                   # ReLU
    # Layers 2 & 3: bf16 operands, f32 accumulation on the MXU.
    h = jnp.dot(h.astype(jnp.bfloat16), m2_ref[...],
                preferred_element_type=jnp.float32) + b2_ref[...]
    h = jnp.maximum(h, 0.0)                                   # ReLU
    h = jnp.dot(h.astype(jnp.bfloat16), m3_ref[...],
                preferred_element_type=jnp.float32) + b3_ref[...]
    h = jnp.maximum(h, 0.0)                                   # ReLU
    h = jnp.dot(h, m4_ref[...], preferred_element_type=jnp.float32) + b4_ref[...]
    h = pl.reciprocal(1.0 + jnp.exp(-h), approx=True)         # Sigmoid on EUP
    # Bilinear interpolation (linear in its input) as a final matmul.
    o_ref[...] = jnp.dot(h, m5_ref[...], preferred_element_type=jnp.float32)


def game_of_life_predictor(encoded, params, *, tb=TB_DEFAULT):
    """encoded: (B, FEAT) float32 -> (B, GRID, GRID) float32."""
    m1, m2, b2, m3, b3, m4, b4, m5 = params
    B = encoded.shape[0]
    B_pad = ((B + tb - 1) // tb) * tb

    # Pad batch to a block multiple; column FEAT carries the constant 1.0 that
    # multiplies the folded layer-1 bias row.
    x = jnp.zeros((B_pad, KPAD), jnp.float32)
    x = x.at[:B, :FEAT].set(encoded.reshape(B, -1).astype(jnp.float32))
    x = x.at[:, FEAT].set(1.0)

    n_out = GRID * GRID
    weight_bytes = sum(int(np.prod(p.shape)) * int(p.dtype.itemsize) for p in params)
    cost = pl.CostEstimate(
        flops=2 * B_pad * (KPAD * 256 + 256 * 512 + 512 * 1024 + 1024 * 64
                           + 64 * n_out),
        transcendentals=B_pad * 64,
        bytes_accessed=weight_bytes + B_pad * (KPAD * 4 + n_out * 4),
    )

    # Weights/biases: full-array blocks, constant index_map -> DMA'd once,
    # VMEM-resident across all grid steps.
    def w_spec(p):
        return pl.BlockSpec(p.shape, lambda i: (0, 0))

    out = pl.pallas_call(
        decoder_kernel,
        out_shape=jax.ShapeDtypeStruct((B_pad, n_out), jnp.float32),
        grid=(B_pad // tb,),
        in_specs=[pl.BlockSpec((tb, KPAD), lambda i: (i, 0))]
                 + [w_spec(p) for p in params],
        out_specs=pl.BlockSpec((tb, n_out), lambda i: (i, 0)),
        compiler_params=pltpu.CompilerParams(
            dimension_semantics=("parallel",)),
        cost_estimate=cost,
    )(x, *params)
    return out[:B].reshape(B, GRID, GRID)   # squeeze(1) equivalent


def _reference_jnp(encoded, params):
    """Plain-JAX f32 replica of the module math (sanity check only)."""
    m1, m2, b2, m3, b3, m4, b4, m5 = params
    B = encoded.shape[0]
    x = jnp.zeros((B, KPAD), jnp.float32)
    x = x.at[:, :FEAT].set(encoded.reshape(B, -1).astype(jnp.float32))
    x = x.at[:, FEAT].set(1.0)
    h = jnp.maximum(x @ m1, 0.0)
    h = jnp.maximum(h @ m2.astype(jnp.float32) + b2, 0.0)
    h = jnp.maximum(h @ m3.astype(jnp.float32) + b3, 0.0)
    h = jax.nn.sigmoid(h @ m4 + b4)
    return (h @ m5).reshape(B, GRID, GRID)


if __name__ == "__main__":
    key = jax.random.PRNGKey(0)
    k_in, k_par = jax.random.split(key)
    batch = 2
    encoded = jax.random.normal(k_in, (batch, FEAT), jnp.float32)

    params = init_params(k_par)

    out = jax.jit(lambda e, p: game_of_life_predictor(e, p))(encoded, params)
    out = jax.block_until_ready(out)

    ref = _reference_jnp(encoded, params)
    assert out.shape == (batch, GRID, GRID)
    # Tolerance relaxed vs. the pure-f32 reference because M2/M3 and the
    # activations feeding them are bf16 on the MXU (and sigmoid uses the
    # approximate EUP reciprocal).
    assert jnp.allclose(out, ref, atol=2e-2, rtol=2e-2), (
        float(jnp.max(jnp.abs(out - ref))))
    print("KERNEL_OK")
</pallas_src>

<mosaic_0001>
module attributes {stable_mosaic.version = 11 : i64} {
  func.func @decoder_kernel(%arg0: i32, %arg1: memref<256x8xf32, #tpu.memory_space<vmem>>, %arg2: memref<8x256xf32, #tpu.memory_space<vmem>>, %arg3: memref<256x512xbf16, #tpu.memory_space<vmem>>, %arg4: memref<1x512xf32, #tpu.memory_space<vmem>>, %arg5: memref<512x1024xbf16, #tpu.memory_space<vmem>>, %arg6: memref<1x1024xf32, #tpu.memory_space<vmem>>, %arg7: memref<1024x64xf32, #tpu.memory_space<vmem>>, %arg8: memref<1x64xf32, #tpu.memory_space<vmem>>, %arg9: memref<64x256xf32, #tpu.memory_space<vmem>>, %arg10: memref<256x256xf32, #tpu.memory_space<vmem>>) attributes {dimension_semantics = [#tpu.dimension_semantics<parallel>], iteration_bounds = array<i64: 1>, scalar_prefetch = 0 : i64, scratch_operands = 0 : i64, tpu.core_type = #tpu.core_type<tc>, window_params = [{transform_indices = @transform_0, window_bounds = array<i64: 256, 8>}, {pipeline_mode = #tpu.pipeline_mode<synchronous>, transform_indices = @transform_1, window_bounds = array<i64: 8, 256>}, {pipeline_mode = #tpu.pipeline_mode<synchronous>, transform_indices = @transform_2, window_bounds = array<i64: 256, 512>}, {pipeline_mode = #tpu.pipeline_mode<synchronous>, transform_indices = @transform_3, window_bounds = array<i64: 1, 512>}, {pipeline_mode = #tpu.pipeline_mode<synchronous>, transform_indices = @transform_4, window_bounds = array<i64: 512, 1024>}, {pipeline_mode = #tpu.pipeline_mode<synchronous>, transform_indices = @transform_5, window_bounds = array<i64: 1, 1024>}, {pipeline_mode = #tpu.pipeline_mode<synchronous>, transform_indices = @transform_6, window_bounds = array<i64: 1024, 64>}, {pipeline_mode = #tpu.pipeline_mode<synchronous>, transform_indices = @transform_7, window_bounds = array<i64: 1, 64>}, {pipeline_mode = #tpu.pipeline_mode<synchronous>, transform_indices = @transform_8, window_bounds = array<i64: 64, 256>}, {transform_indices = @transform_9, window_bounds = array<i64: 256, 256>}]} {
    %c0 = arith.constant 0 : index
    %c0_0 = arith.constant 0 : index
    %0 = vector.load %arg1[%c0, %c0_0] : memref<256x8xf32, #tpu.memory_space<vmem>>, vector<256x8xf32>
    %c0_1 = arith.constant 0 : index
    %c0_2 = arith.constant 0 : index
    %1 = vector.load %arg2[%c0_1, %c0_2] : memref<8x256xf32, #tpu.memory_space<vmem>>, vector<8x256xf32>
    %cst = arith.constant dense<0.000000e+00> : vector<256x256xf32>
    %2 = tpu.matmul %0, %1, %cst {dimension_numbers = #tpu.dot_dimension_numbers<[1], [0], [0], [1], [0, 0, 1, 1], [], []>} : vector<256x8xf32>, vector<8x256xf32>, vector<256x256xf32> -> vector<256x256xf32>
    %cst_3 = arith.constant 0.000000e+00 : f32
    %3 = vector.broadcast %cst_3 : f32 to vector<256x256xf32>
    %4 = arith.maximumf %2, %3 : vector<256x256xf32>
    %5 = arith.truncf %4 : vector<256x256xf32> to vector<256x256xbf16>
    %c0_4 = arith.constant 0 : index
    %c0_5 = arith.constant 0 : index
    %6 = vector.load %arg3[%c0_4, %c0_5] : memref<256x512xbf16, #tpu.memory_space<vmem>>, vector<256x512xbf16>
    %cst_6 = arith.constant dense<0.000000e+00> : vector<256x512xf32>
    %7 = tpu.matmul %5, %6, %cst_6 {dimension_numbers = #tpu.dot_dimension_numbers<[1], [0], [0], [1], [0, 0, 1, 1], [], []>} : vector<256x256xbf16>, vector<256x512xbf16>, vector<256x512xf32> -> vector<256x512xf32>
    %c0_7 = arith.constant 0 : index
    %c0_8 = arith.constant 0 : index
    %8 = vector.load %arg4[%c0_7, %c0_8] : memref<1x512xf32, #tpu.memory_space<vmem>>, vector<1x512xf32>
    %9 = vector.broadcast %8 : vector<1x512xf32> to vector<256x512xf32>
    %10 = arith.addf %7, %9 : vector<256x512xf32>
    %cst_9 = arith.constant 0.000000e+00 : f32
    %11 = vector.broadcast %cst_9 : f32 to vector<256x512xf32>
    %12 = arith.maximumf %10, %11 : vector<256x512xf32>
    %13 = arith.truncf %12 : vector<256x512xf32> to vector<256x512xbf16>
    %c0_10 = arith.constant 0 : index
    %c0_11 = arith.constant 0 : index
    %14 = vector.load %arg5[%c0_10, %c0_11] : memref<512x1024xbf16, #tpu.memory_space<vmem>>, vector<512x1024xbf16>
    %cst_12 = arith.constant dense<0.000000e+00> : vector<256x1024xf32>
    %15 = tpu.matmul %13, %14, %cst_12 {dimension_numbers = #tpu.dot_dimension_numbers<[1], [0], [0], [1], [0, 0, 1, 1], [], []>} : vector<256x512xbf16>, vector<512x1024xbf16>, vector<256x1024xf32> -> vector<256x1024xf32>
    %c0_13 = arith.constant 0 : index
    %c0_14 = arith.constant 0 : index
    %16 = vector.load %arg6[%c0_13, %c0_14] : memref<1x1024xf32, #tpu.memory_space<vmem>>, vector<1x1024xf32>
    %17 = vector.broadcast %16 : vector<1x1024xf32> to vector<256x1024xf32>
    %18 = arith.addf %15, %17 : vector<256x1024xf32>
    %cst_15 = arith.constant 0.000000e+00 : f32
    %19 = vector.broadcast %cst_15 : f32 to vector<256x1024xf32>
    %20 = arith.maximumf %18, %19 : vector<256x1024xf32>
    %c0_16 = arith.constant 0 : index
    %c0_17 = arith.constant 0 : index
    %21 = vector.load %arg7[%c0_16, %c0_17] : memref<1024x64xf32, #tpu.memory_space<vmem>>, vector<1024x64xf32>
    %cst_18 = arith.constant dense<0.000000e+00> : vector<256x64xf32>
    %22 = tpu.matmul %20, %21, %cst_18 {dimension_numbers = #tpu.dot_dimension_numbers<[1], [0], [0], [1], [0, 0, 1, 1], [], []>} : vector<256x1024xf32>, vector<1024x64xf32>, vector<256x64xf32> -> vector<256x64xf32>
    %c0_19 = arith.constant 0 : index
    %c0_20 = arith.constant 0 : index
    %23 = vector.load %arg8[%c0_19, %c0_20] : memref<1x64xf32, #tpu.memory_space<vmem>>, vector<1x64xf32>
    %24 = vector.broadcast %23 : vector<1x64xf32> to vector<256x64xf32>
    %25 = arith.addf %22, %24 : vector<256x64xf32>
    %cst_21 = arith.constant 0.000000e+00 : f32
    %26 = vector.broadcast %cst_21 : f32 to vector<256x64xf32>
    %27 = arith.subf %26, %25 : vector<256x64xf32>
    %28 = math.exp %27 : vector<256x64xf32>
    %cst_22 = arith.constant 1.000000e+00 : f32
    %29 = vector.broadcast %cst_22 : f32 to vector<256x64xf32>
    %30 = arith.addf %29, %28 : vector<256x64xf32>
    %31 = tpu.reciprocal %30 {approx = true} : vector<256x64xf32> -> vector<256x64xf32>
    %c0_23 = arith.constant 0 : index
    %c0_24 = arith.constant 0 : index
    %32 = vector.load %arg9[%c0_23, %c0_24] : memref<64x256xf32, #tpu.memory_space<vmem>>, vector<64x256xf32>
    %cst_25 = arith.constant dense<0.000000e+00> : vector<256x256xf32>
    %33 = tpu.matmul %31, %32, %cst_25 {dimension_numbers = #tpu.dot_dimension_numbers<[1], [0], [0], [1], [0, 0, 1, 1], [], []>} : vector<256x64xf32>, vector<64x256xf32>, vector<256x256xf32> -> vector<256x256xf32>
    %c0_26 = arith.constant 0 : index
    %c0_27 = arith.constant 0 : index
    %34 = vector.load %arg10[%c0_26, %c0_27] : memref<256x256xf32, #tpu.memory_space<vmem>>, vector<256x256xf32>
    tpu.vector_store %arg10[%c0_26, %c0_27], %33 {strides = array<i32>} : memref<256x256xf32, #tpu.memory_space<vmem>>, vector<256x256xf32>,
    return
  }
  func.func @transform_0(%arg0: i32) -> (i32, i32) {
    %c0_i32 = arith.constant 0 : i32
    %c0_i32_0 = arith.constant 0 : i32
    return %arg0, %c0_i32 : i32, i32
  }
  func.func @transform_1(%arg0: i32) -> (i32, i32) {
    %c0_i32 = arith.constant 0 : i32
    %c0_i32_0 = arith.constant 0 : i32
    %c0_i32_1 = arith.constant 0 : i32
    return %c0_i32, %c0_i32_0 : i32, i32
  }
  func.func @transform_2(%arg0: i32) -> (i32, i32) {
    %c0_i32 = arith.constant 0 : i32
    %c0_i32_0 = arith.constant 0 : i32
    %c0_i32_1 = arith.constant 0 : i32
    return %c0_i32, %c0_i32_0 : i32, i32
  }
  func.func @transform_3(%arg0: i32) -> (i32, i32) {
    %c0_i32 = arith.constant 0 : i32
    %c0_i32_0 = arith.constant 0 : i32
    %c0_i32_1 = arith.constant 0 : i32
    return %c0_i32, %c0_i32_0 : i32, i32
  }
  func.func @transform_4(%arg0: i32) -> (i32, i32) {
    %c0_i32 = arith.constant 0 : i32
    %c0_i32_0 = arith.constant 0 : i32
    %c0_i32_1 = arith.constant 0 : i32
    return %c0_i32, %c0_i32_0 : i32, i32
  }
  func.func @transform_5(%arg0: i32) -> (i32, i32) {
    %c0_i32 = arith.constant 0 : i32
    %c0_i32_0 = arith.constant 0 : i32
    %c0_i32_1 = arith.constant 0 : i32
    return %c0_i32, %c0_i32_0 : i32, i32
  }
  func.func @transform_6(%arg0: i32) -> (i32, i32) {
    %c0_i32 = arith.constant 0 : i32
    %c0_i32_0 = arith.constant 0 : i32
    %c0_i32_1 = arith.constant 0 : i32
    return %c0_i32, %c0_i32_0 : i32, i32
  }
  func.func @transform_7(%arg0: i32) -> (i32, i32) {
    %c0_i32 = arith.constant 0 : i32
    %c0_i32_0 = arith.constant 0 : i32
    %c0_i32_1 = arith.constant 0 : i32
    return %c0_i32, %c0_i32_0 : i32, i32
  }
  func.func @transform_8(%arg0: i32) -> (i32, i32) {
    %c0_i32 = arith.constant 0 : i32
    %c0_i32_0 = arith.constant 0 : i32
    %c0_i32_1 = arith.constant 0 : i32
    return %c0_i32, %c0_i32_0 : i32, i32
  }
  func.func @transform_9(%arg0: i32) -> (i32, i32) {
    %c0_i32 = arith.constant 0 : i32
    %c0_i32_0 = arith.constant 0 : i32
    return %arg0, %c0_i32 : i32, i32
  }
}

</mosaic_0001>

<llo_original>
// kernel: _lambda_.1
$region0: #{_lambda_.1}
  #allocation0 [shape = 'u32[]', space=smem, size = 0x4, offset = 0x4, fixed_abs, tag = 'smem constant byte address 0x4 - core index']
  #allocation1 [shape = 'u32[144,128]{1,0:T(1,128)}', space=vmem, size = 0x12000, scoped, tag = 'internal scratch']
  %s0 = inlined_call_operand.vmem [shape: f32[256,8], index: 0, kind: input, shape index: {}]
  %s1 = inlined_call_operand.vmem [shape: f32[8,256], index: 1, kind: input, shape index: {}]
  %s2 = inlined_call_operand.hbm [shape: bf16[256,512], index: 2, kind: input, shape index: {}]
  %s3 = inlined_call_operand.vmem [shape: f32[1,512], index: 3, kind: input, shape index: {}]
  %s4 = inlined_call_operand.vmem [shape: bf16[512,1024], index: 4, kind: input, shape index: {}]
  %s5 = inlined_call_operand.vmem [shape: f32[1,1024], index: 5, kind: input, shape index: {}]
  %s6 = inlined_call_operand.vmem [shape: f32[1024,64], index: 6, kind: input, shape index: {}]
  %s7 = inlined_call_operand.vmem [shape: f32[1,64], index: 7, kind: input, shape index: {}]
  %s8 = inlined_call_operand.hbm [shape: f32[64,256], index: 8, kind: input, shape index: {}]
  %s9 = inlined_call_operand.vmem [shape: f32[256,256], index: 9, kind: output, shape index: {}]
  %s10 = sld [smem:[#allocation0]]
  $region54: #{_lambda_.1} parent=0
    _
  %s12 = ssub.s32 1, %s10
  %s13 = scalar_select 0, %s12, %s10
  $region1: #{_lambda_.1} parent=0
    #allocation2 [shape = 'u8[262144]{0}', space=vmem, size = 0x40000, scoped, tag = 'input window, operand 2, single buffered']
    #allocation3 [shape = 's32[1]{0}', space=sflag, size = 0x4, scoped, tag = 'scoped memory for _lambda_.1']
    #allocation4 [shape = 'u8[65536]{0}', space=vmem, size = 0x10000, scoped, tag = 'input window, operand 8, single buffered']
    #allocation5 [shape = 's32[1]{0}', space=sflag, size = 0x4, scoped, tag = 'scoped memory for _lambda_.1']
    %14 = vsyncpa [#allocation3], 0
    %15 = vsyncpa [#allocation5], 0
    // Predicated region
    $region2: #{_lambda_.1} parent=1 // pred_check
      _
    $region3: #{_lambda_.1} parent=1 // pred_check_branch
      %17 = sbr.rel (0) target = $region5
    $region4: #{_lambda_.1} parent=1 // pred_region
      _
    $region5: #{_lambda_.1} parent=1 // pred_fallthru
      _
    // Predicated region
    $region6: #{_lambda_.1} parent=1 // pred_check
      _
    $region7: #{_lambda_.1} parent=1 // pred_check_branch
      %19 = sbr.rel (0) target = $region9
    $region8: #{_lambda_.1} parent=1 // pred_region
      _
    $region9: #{_lambda_.1} parent=1 // pred_fallthru
      _
    // Predicated region
    $region10: #{_lambda_.1} parent=1 // pred_check
      _
    $region11: #{_lambda_.1} parent=1 // pred_check_branch
      %21 = sbr.rel (0) target = $region13
    $region12: #{_lambda_.1} parent=1 // pred_region
      %s23 = ssub.s32 8192, 8192
      %24 = vsyncadd [#allocation3], %s23
      %s25 = sshll.u32 [#allocation2], 4
      %s26 = int_to_ptr.vmem [resolvable:$true] %s25
      %31 = dma.hbm_to_vmem [thread:$0]  %s2, 8192, %s26, [#allocation3], 256, 256, 16
    $region13: #{_lambda_.1} parent=1 // pred_fallthru
      _
    // Predicated region
    $region14: #{_lambda_.1} parent=1 // pred_check
      _
    $region15: #{_lambda_.1} parent=1 // pred_check_branch
      %33 = sbr.rel (0) target = $region17
    $region16: #{_lambda_.1} parent=1 // pred_region
      _
    $region17: #{_lambda_.1} parent=1 // pred_fallthru
      _
    // Predicated region
    $region18: #{_lambda_.1} parent=1 // pred_check
      _
    $region19: #{_lambda_.1} parent=1 // pred_check_branch
      %35 = sbr.rel (0) target = $region21
    $region20: #{_lambda_.1} parent=1 // pred_region
      _
    $region21: #{_lambda_.1} parent=1 // pred_fallthru
      _
    // Predicated region
    $region22: #{_lambda_.1} parent=1 // pred_check
      _
    $region23: #{_lambda_.1} parent=1 // pred_check_branch
      %37 = sbr.rel (0) target = $region25
    $region24: #{_lambda_.1} parent=1 // pred_region
      _
    $region25: #{_lambda_.1} parent=1 // pred_fallthru
      _
    // Predicated region
    $region26: #{_lambda_.1} parent=1 // pred_check
      _
    $region27: #{_lambda_.1} parent=1 // pred_check_branch
      %39 = sbr.rel (0) target = $region29
    $region28: #{_lambda_.1} parent=1 // pred_region
      _
    $region29: #{_lambda_.1} parent=1 // pred_fallthru
      _
    // Predicated region
    $region30: #{_lambda_.1} parent=1 // pred_check
      _
    $region31: #{_lambda_.1} parent=1 // pred_check_branch
      %41 = sbr.rel (0) target = $region33
    $region32: #{_lambda_.1} parent=1 // pred_region
      _
    $region33: #{_lambda_.1} parent=1 // pred_fallthru
      _
    // Predicated region
    $region34: #{_lambda_.1} parent=1 // pred_check
      _
    $region35: #{_lambda_.1} parent=1 // pred_check_branch
      %43 = sbr.rel (0) target = $region37
    $region36: #{_lambda_.1} parent=1 // pred_region
      %s45 = ssub.s32 2048, 2048
      %46 = vsyncadd [#allocation5], %s45
      %s47 = sshll.u32 [#allocation4], 4
      %s48 = int_to_ptr.vmem [resolvable:$true] %s47
      %53 = dma.hbm_to_vmem [thread:$0]  %s8, 2048, %s48, [#allocation5], 256, 256, 16
    $region37: #{_lambda_.1} parent=1 // pred_fallthru
      _
    // Predicated region
    $region38: #{_lambda_.1} parent=1 // pred_check
      _
    $region39: #{_lambda_.1} parent=1 // pred_check_branch
      %55 = sbr.rel (0) target = $region41
    $region40: #{_lambda_.1} parent=1 // pred_region
      %56 = dma.done [#allocation3], 8192
    $region41: #{_lambda_.1} parent=1 // pred_fallthru
      _
    // Predicated region
    $region42: #{_lambda_.1} parent=1 // pred_check
      _
    $region43: #{_lambda_.1} parent=1 // pred_check_branch
      %58 = sbr.rel (0) target = $region45
    $region44: #{_lambda_.1} parent=1 // pred_region
      %59 = dma.done [#allocation5], 2048
    $region45: #{_lambda_.1} parent=1 // pred_fallthru
      _
    %v60 = vld [vmem:[%s0] sm:$0xff]
    %v61 = vld [vmem:[%s0 + $0x8] sm:$0xff]
    %v62 = vld [vmem:[%s0 + $0x10] sm:$0xff]
    %v63 = vld [vmem:[%s0 + $0x18] sm:$0xff]
    %v64 = vld [vmem:[%s0 + $0x20] sm:$0xff]
    %v65 = vld [vmem:[%s0 + $0x28] sm:$0xff]
    %v66 = vld [vmem:[%s0 + $0x30] sm:$0xff]
    %v67 = vld [vmem:[%s0 + $0x38] sm:$0xff]
    %v68 = vld [vmem:[%s0 + $0x40] sm:$0xff]
    %v69 = vld [vmem:[%s0 + $0x48] sm:$0xff]
    %v70 = vld [vmem:[%s0 + $0x50] sm:$0xff]
    %v71 = vld [vmem:[%s0 + $0x58] sm:$0xff]
    %v72 = vld [vmem:[%s0 + $0x60] sm:$0xff]
    %v73 = vld [vmem:[%s0 + $0x68] sm:$0xff]
    %v74 = vld [vmem:[%s0 + $0x70] sm:$0xff]
    %v75 = vld [vmem:[%s0 + $0x78] sm:$0xff]
    %v76 = vld [vmem:[%s0 + $0x80] sm:$0xff]
    %v77 = vld [vmem:[%s0 + $0x88] sm:$0xff]
    %v78 = vld [vmem:[%s0 + $0x90] sm:$0xff]
    %v79 = vld [vmem:[%s0 + $0x98] sm:$0xff]
    %v80 = vld [vmem:[%s0 + $0xa0] sm:$0xff]
    %v81 = vld [vmem:[%s0 + $0xa8] sm:$0xff]
    %v82 = vld [vmem:[%s0 + $0xb0] sm:$0xff]
    %v83 = vld [vmem:[%s0 + $0xb8] sm:$0xff]
    %v84 = vld [vmem:[%s0 + $0xc0] sm:$0xff]
    %v85 = vld [vmem:[%s0 + $0xc8] sm:$0xff]
    %v86 = vld [vmem:[%s0 + $0xd0] sm:$0xff]
    %v87 = vld [vmem:[%s0 + $0xd8] sm:$0xff]
    %v88 = vld [vmem:[%s0 + $0xe0] sm:$0xff]
    %v89 = vld [vmem:[%s0 + $0xe8] sm:$0xff]
    %v90 = vld [vmem:[%s0 + $0xf0] sm:$0xff]
    %v91 = vld [vmem:[%s0 + $0xf8] sm:$0xff]
    %v92 = vld [vmem:[%s1] sm:$0xff]
    %v93 = vld [vmem:[%s1 + $0x8] sm:$0xff]
    %vm94 = vcmask 64512
    %v96 = vsel %vm94, %v60, 0
    %v99 = vsel %vm94, %v61, 0
    %v102 = vsel %vm94, %v62, 0
    %v105 = vsel %vm94, %v63, 0
    %v108 = vsel %vm94, %v64, 0
    %v111 = vsel %vm94, %v65, 0
    %v114 = vsel %vm94, %v66, 0
    %v117 = vsel %vm94, %v67, 0
    %v120 = vsel %vm94, %v68, 0
    %v123 = vsel %vm94, %v69, 0
    %v126 = vsel %vm94, %v70, 0
    %v129 = vsel %vm94, %v71, 0
    %v132 = vsel %vm94, %v72, 0
    %v135 = vsel %vm94, %v73, 0
    %v138 = vsel %vm94, %v74, 0
    %v141 = vsel %vm94, %v75, 0
    %v144 = vsel %vm94, %v76, 0
    %v147 = vsel %vm94, %v77, 0
    %v150 = vsel %vm94, %v78, 0
    %v153 = vsel %vm94, %v79, 0
    %v156 = vsel %vm94, %v80, 0
    %v159 = vsel %vm94, %v81, 0
    %v162 = vsel %vm94, %v82, 0
    %v165 = vsel %vm94, %v83, 0
    %v168 = vsel %vm94, %v84, 0
    %v171 = vsel %vm94, %v85, 0
    %v174 = vsel %vm94, %v86, 0
    %v177 = vsel %vm94, %v87, 0
    %v180 = vsel %vm94, %v88, 0
    %v183 = vsel %vm94, %v89, 0
    %v186 = vsel %vm94, %v90, 0
    %v189 = vsel %vm94, %v91, 0
    %191 = vmatprep.subr.mxu0 %v93
    %192 = vmatpush1.msra.mxu0 %v92
    %193 = vmatprep.subr.mxu0 0.0
    %194 = vmatpush1.msra.mxu0 0.0
    %195 = vmatprep.subr.mxu0 0.0
    %196 = vmatpush1.msra.mxu0 0.0
    %197 = vmatprep.subr.mxu0 0.0
    %198 = vmatpush1.msra.mxu0 0.0
    %199 = vmatprep.subr.mxu0 0.0
    %200 = vmatpush1.msra.mxu0 0.0
    %201 = vmatprep.subr.mxu0 0.0
    %202 = vmatpush1.msra.mxu0 0.0
    %203 = vmatprep.subr.mxu0 0.0
    %204 = vmatpush1.msra.mxu0 0.0
    %205 = vmatprep.subr.mxu0 0.0
    %206 = vmatpush1.msra.mxu0 0.0
    %207 = vmatprep.subr.mxu0 0.0
    %208 = vmatpush1.msra.mxu0 0.0
    %209 = vmatprep.subr.mxu0 0.0
    %210 = vmatpush1.msra.mxu0 0.0
    %211 = vmatprep.subr.mxu0 0.0
    %212 = vmatpush1.msra.mxu0 0.0
    %213 = vmatprep.subr.mxu0 0.0
    %214 = vmatpush1.msra.mxu0 0.0
    %215 = vmatprep.subr.mxu0 0.0
    %216 = vmatpush1.msra.mxu0 0.0
    %217 = vmatprep.subr.mxu0 0.0
    %218 = vmatpush1.msra.mxu0 0.0
    %219 = vmatprep.subr.mxu0 0.0
    %220 = vmatpush1.msra.mxu0 0.0
    %221 = vmatprep.subr.mxu0 0.0
    %222 = vmatpush1.msra.mxu0 0.0
    %223 = vmatprep.subr.mxu0 0.0
    %224 = vmatpush1.msra.mxu0 0.0
    %225 = vmatprep.subr.mxu0 0.0
    %226 = vmatpush1.msra.mxu0 0.0
    %227 = vmatprep.subr.mxu0 0.0
    %228 = vmatpush1.msra.mxu0 0.0
    %229 = vmatprep.subr.mxu0 0.0
    %230 = vmatpush1.msra.mxu0 0.0
    %231 = vmatprep.subr.mxu0 0.0
    %232 = vmatpush1.msra.mxu0 0.0
    %233 = vmatprep.subr.mxu0 0.0
    %234 = vmatpush1.msra.mxu0 0.0
    %235 = vmatprep.subr.mxu0 0.0
    %236 = vmatpush1.msra.mxu0 0.0
    %237 = vmatprep.subr.mxu0 0.0
    %238 = vmatpush1.msra.mxu0 0.0
    %239 = vmatprep.subr.mxu0 0.0
    %240 = vmatpush1.msra.mxu0 0.0
    %241 = vmatprep.subr.mxu0 0.0
    %242 = vmatpush1.msra.mxu0 0.0
    %243 = vmatprep.subr.mxu0 0.0
    %244 = vmatpush1.msra.mxu0 0.0
    %245 = vmatprep.subr.mxu0 0.0
    %246 = vmatpush1.msra.mxu0 0.0
    %247 = vmatprep.subr.mxu0 0.0
    %248 = vmatpush1.msra.mxu0 0.0
    %249 = vmatprep.subr.mxu0 0.0
    %250 = vmatpush1.msra.mxu0 0.0
    %251 = vmatprep.subr.mxu0 0.0
    %252 = vmatpush1.msra.mxu0 0.0
    %253 = vmatprep.subr.mxu0 0.0
    %254 = vmatpush1.msra.mxu0 0.0
    %255 = vmatprep.mubr.f32.mxu0 0.0
    %256 = vmatmul.mubr.f32.gmra.mrb[0].mxu0 %v96
    %v257 = vpop.f32.mrb[0].mxu0
    %v258 = vadd.f32 0.0, %v257
    %v259 = vpop.f32.mrb[0].mxu0
    %v260 = vadd.f32 0.0, %v259
    %261 = vmatprep.mubr.f32.mxu0 0.0
    %262 = vmatmul.mubr.f32.gmra.mrb[0].mxu0 %v99
    %v263 = vpop.f32.mrb[0].mxu0
    %v264 = vadd.f32 0.0, %v263
    %v265 = vpop.f32.mrb[0].mxu0
    %v266 = vadd.f32 0.0, %v265
    %267 = vmatprep.mubr.f32.mxu0 0.0
    %268 = vmatmul.mubr.f32.gmra.mrb[0].mxu0 %v102
    %v269 = vpop.f32.mrb[0].mxu0
    %v270 = vadd.f32 0.0, %v269
    %v271 = vpop.f32.mrb[0].mxu0
    %v272 = vadd.f32 0.0, %v271
    %273 = vmatprep.mubr.f32.mxu0 0.0
    %274 = vmatmul.mubr.f32.gmra.mrb[0].mxu0 %v105
    %v275 = vpop.f32.mrb[0].mxu0
    %v276 = vadd.f32 0.0, %v275
    %v277 = vpop.f32.mrb[0].mxu0
    %v278 = vadd.f32 0.0, %v277
    %279 = vmatprep.mubr.f32.mxu0 0.0
    %280 = vmatmul.mubr.f32.gmra.mrb[0].mxu0 %v108
    %v281 = vpop.f32.mrb[0].mxu0
    %v282 = vadd.f32 0.0, %v281
    %v283 = vpop.f32.mrb[0].mxu0
    %v284 = vadd.f32 0.0, %v283
    %285 = vmatprep.mubr.f32.mxu0 0.0
    %286 = vmatmul.mubr.f32.gmra.mrb[0].mxu0 %v111
    %v287 = vpop.f32.mrb[0].mxu0
    %v288 = vadd.f32 0.0, %v287
    %v289 = vpop.f32.mrb[0].mxu0
    %v290 = vadd.f32 0.0, %v289
    %291 = vmatprep.mubr.f32.mxu0 0.0
    %292 = vmatmul.mubr.f32.gmra.mrb[0].mxu0 %v114
    %v293 = vpop.f32.mrb[0].mxu0
    %v294 = vadd.f32 0.0, %v293
    %v295 = vpop.f32.mrb[0].mxu0
    %v296 = vadd.f32 0.0, %v295
    %297 = vmatprep.mubr.f32.mxu0 0.0
    %298 = vmatmul.mubr.f32.gmra.mrb[0].mxu0 %v117
    %v299 = vpop.f32.mrb[0].mxu0
    %v300 = vadd.f32 0.0, %v299
    %v301 = vpop.f32.mrb[0].mxu0
    %v302 = vadd.f32 0.0, %v301
    %303 = vmatprep.mubr.f32.mxu0 0.0
    %304 = vmatmul.mubr.f32.gmra.mrb[0].mxu0 %v120
    %v305 = vpop.f32.mrb[0].mxu0
    %v306 = vadd.f32 0.0, %v305
    %v307 = vpop.f32.mrb[0].mxu0
    %v308 = vadd.f32 0.0, %v307
    %309 = vmatprep.mubr.f32.mxu0 0.0
    %310 = vmatmul.mubr.f32.gmra.mrb[0].mxu0 %v123
    %v311 = vpop.f32.mrb[0].mxu0
    %v312 = vadd.f32 0.0, %v311
    %v313 = vpop.f32.mrb[0].mxu0
    %v314 = vadd.f32 0.0, %v313
    %315 = vmatprep.mubr.f32.mxu0 0.0
    %316 = vmatmul.mubr.f32.gmra.mrb[0].mxu0 %v126
    %v317 = vpop.f32.mrb[0].mxu0
    %v318 = vadd.f32 0.0, %v317
    %v319 = vpop.f32.mrb[0].mxu0
    %v320 = vadd.f32 0.0, %v319
    %321 = vmatprep.mubr.f32.mxu0 0.0
    %322 = vmatmul.mubr.f32.gmra.mrb[0].mxu0 %v129
    %v323 = vpop.f32.mrb[0].mxu0
    %v324 = vadd.f32 0.0, %v323
    %v325 = vpop.f32.mrb[0].mxu0
    %v326 = vadd.f32 0.0, %v325
    %327 = vmatprep.mubr.f32.mxu0 0.0
    %328 = vmatmul.mubr.f32.gmra.mrb[0].mxu0 %v132
    %v329 = vpop.f32.mrb[0].mxu0
    %v330 = vadd.f32 0.0, %v329
    %v331 = vpop.f32.mrb[0].mxu0
    %v332 = vadd.f32 0.0, %v331
    %333 = vmatprep.mubr.f32.mxu0 0.0
    %334 = vmatmul.mubr.f32.gmra.mrb[0].mxu0 %v135
    %v335 = vpop.f32.mrb[0].mxu0
    %v336 = vadd.f32 0.0, %v335
    %v337 = vpop.f32.mrb[0].mxu0
    %v338 = vadd.f32 0.0, %v337
    %339 = vmatprep.mubr.f32.mxu0 0.0
    %340 = vmatmul.mubr.f32.gmra.mrb[0].mxu0 %v138
    %v341 = vpop.f32.mrb[0].mxu0
    %v342 = vadd.f32 0.0, %v341
    %v343 = vpop.f32.mrb[0].mxu0
    %v344 = vadd.f32 0.0, %v343
    %345 = vmatprep.mubr.f32.mxu0 0.0
    %346 = vmatmul.mubr.f32.gmra.mrb[0].mxu0 %v141
    %v347 = vpop.f32.mrb[0].mxu0
    %v348 = vadd.f32 0.0, %v347
    %v349 = vpop.f32.mrb[0].mxu0
    %v350 = vadd.f32 0.0, %v349
    %351 = vmatprep.mubr.f32.mxu0 0.0
    %352 = vmatmul.mubr.f32.gmra.mrb[0].mxu0 %v144
    %v353 = vpop.f32.mrb[0].mxu0
    %v354 = vadd.f32 0.0, %v353
    %v355 = vpop.f32.mrb[0].mxu0
    %v356 = vadd.f32 0.0, %v355
    %357 = vmatprep.mubr.f32.mxu0 0.0
    %358 = vmatmul.mubr.f32.gmra.mrb[0].mxu0 %v147
    %v359 = vpop.f32.mrb[0].mxu0
    %v360 = vadd.f32 0.0, %v359
    %v361 = vpop.f32.mrb[0].mxu0
    %v362 = vadd.f32 0.0, %v361
    %363 = vmatprep.mubr.f32.mxu0 0.0
    %364 = vmatmul.mubr.f32.gmra.mrb[0].mxu0 %v150
    %v365 = vpop.f32.mrb[0].mxu0
    %v366 = vadd.f32 0.0, %v365
    %v367 = vpop.f32.mrb[0].mxu0
    %v368 = vadd.f32 0.0, %v367
    %369 = vmatprep.mubr.f32.mxu0 0.0
    %370 = vmatmul.mubr.f32.gmra.mrb[0].mxu0 %v153
    %v371 = vpop.f32.mrb[0].mxu0
    %v372 = vadd.f32 0.0, %v371
    %v373 = vpop.f32.mrb[0].mxu0
    %v374 = vadd.f32 0.0, %v373
    %375 = vmatprep.mubr.f32.mxu0 0.0
    %376 = vmatmul.mubr.f32.gmra.mrb[0].mxu0 %v156
    %v377 = vpop.f32.mrb[0].mxu0
    %v378 = vadd.f32 0.0, %v377
    %v379 = vpop.f32.mrb[0].mxu0
    %v380 = vadd.f32 0.0, %v379
    %381 = vmatprep.mubr.f32.mxu0 0.0
    %382 = vmatmul.mubr.f32.gmra.mrb[0].mxu0 %v159
    %v383 = vpop.f32.mrb[0].mxu0
    %v384 = vadd.f32 0.0, %v383
    %v385 = vpop.f32.mrb[0].mxu0
    %v386 = vadd.f32 0.0, %v385
    %387 = vmatprep.mubr.f32.mxu0 0.0
    %388 = vmatmul.mubr.f32.gmra.mrb[0].mxu0 %v162
    %v389 = vpop.f32.mrb[0].mxu0
    %v390 = vadd.f32 0.0, %v389
    %v391 = vpop.f32.mrb[0].mxu0
    %v392 = vadd.f32 0.0, %v391
    %393 = vmatprep.mubr.f32.mxu0 0.0
    %394 = vmatmul.mubr.f32.gmra.mrb[0].mxu0 %v165
    %v395 = vpop.f32.mrb[0].mxu0
    %v396 = vadd.f32 0.0, %v395
    %v397 = vpop.f32.mrb[0].mxu0
    %v398 = vadd.f32 0.0, %v397
    %399 = vmatprep.mubr.f32.mxu0 0.0
    %400 = vmatmul.mubr.f32.gmra.mrb[0].mxu0 %v168
    %v401 = vpop.f32.mrb[0].mxu0
    %v402 = vadd.f32 0.0, %v401
    %v403 = vpop.f32.mrb[0].mxu0
    %v404 = vadd.f32 0.0, %v403
    %405 = vmatprep.mubr.f32.mxu0 0.0
    %406 = vmatmul.mubr.f32.gmra.mrb[0].mxu0 %v171
    %v407 = vpop.f32.mrb[0].mxu0
    %v408 = vadd.f32 0.0, %v407
    %v409 = vpop.f32.mrb[0].mxu0
    %v410 = vadd.f32 0.0, %v409
    %411 = vmatprep.mubr.f32.mxu0 0.0
    %412 = vmatmul.mubr.f32.gmra.mrb[0].mxu0 %v174
    %v413 = vpop.f32.mrb[0].mxu0
    %v414 = vadd.f32 0.0, %v413
    %v415 = vpop.f32.mrb[0].mxu0
    %v416 = vadd.f32 0.0, %v415
    %417 = vmatprep.mubr.f32.mxu0 0.0
    %418 = vmatmul.mubr.f32.gmra.mrb[0].mxu0 %v177
    %v419 = vpop.f32.mrb[0].mxu0
    %v420 = vadd.f32 0.0, %v419
    %v421 = vpop.f32.mrb[0].mxu0
    %v422 = vadd.f32 0.0, %v421
    %423 = vmatprep.mubr.f32.mxu0 0.0
    %424 = vmatmul.mubr.f32.gmra.mrb[0].mxu0 %v180
    %v425 = vpop.f32.mrb[0].mxu0
    %v426 = vadd.f32 0.0, %v425
    %v427 = vpop.f32.mrb[0].mxu0
    %v428 = vadd.f32 0.0, %v427
    %429 = vmatprep.mubr.f32.mxu0 0.0
    %430 = vmatmul.mubr.f32.gmra.mrb[0].mxu0 %v183
    %v431 = vpop.f32.mrb[0].mxu0
    %v432 = vadd.f32 0.0, %v431
    %v433 = vpop.f32.mrb[0].mxu0
    %v434 = vadd.f32 0.0, %v433
    %435 = vmatprep.mubr.f32.mxu0 0.0
    %436 = vmatmul.mubr.f32.gmra.mrb[0].mxu0 %v186
    %v437 = vpop.f32.mrb[0].mxu0
    %v438 = vadd.f32 0.0, %v437
    %v439 = vpop.f32.mrb[0].mxu0
    %v440 = vadd.f32 0.0, %v439
    %441 = vmatprep.mubr.f32.mxu0 0.0
    %442 = vmatmul.mubr.f32.gmra.mrb[0].mxu0 %v189
    %v443 = vpop.f32.mrb[0].mxu0
    %v444 = vadd.f32 0.0, %v443
    %v445 = vpop.f32.mrb[0].mxu0
    %v446 = vadd.f32 0.0, %v445
    %447 = vdwg.mxu0
    %v448 = vmax.f32 %v258, 0.0
    %v449 = vmax.f32 %v260, 0.0
    %v450 = vmax.f32 %v264, 0.0
    %v451 = vmax.f32 %v266, 0.0
    %v452 = vmax.f32 %v270, 0.0
    %v453 = vmax.f32 %v272, 0.0
    %v454 = vmax.f32 %v276, 0.0
    %v455 = vmax.f32 %v278, 0.0
    %v456 = vmax.f32 %v282, 0.0
    %v457 = vmax.f32 %v284, 0.0
    %v458 = vmax.f32 %v288, 0.0
    %v459 = vmax.f32 %v290, 0.0
    %v460 = vmax.f32 %v294, 0.0
    %v461 = vmax.f32 %v296, 0.0
    %v462 = vmax.f32 %v300, 0.0
    %v463 = vmax.f32 %v302, 0.0
    %v464 = vmax.f32 %v306, 0.0
    %v465 = vmax.f32 %v308, 0.0
    %v466 = vmax.f32 %v312, 0.0
    %v467 = vmax.f32 %v314, 0.0
    %v468 = vmax.f32 %v318, 0.0
    %v469 = vmax.f32 %v320, 0.0
    %v470 = vmax.f32 %v324, 0.0
    %v471 = vmax.f32 %v326, 0.0
    %v472 = vmax.f32 %v330, 0.0
    %v473 = vmax.f32 %v332, 0.0
    %v474 = vmax.f32 %v336, 0.0
    %v475 = vmax.f32 %v338, 0.0
    %v476 = vmax.f32 %v342, 0.0
    %v477 = vmax.f32 %v344, 0.0
    %v478 = vmax.f32 %v348, 0.0
    %v479 = vmax.f32 %v350, 0.0
    %v480 = vmax.f32 %v354, 0.0
    %v481 = vmax.f32 %v356, 0.0
    %v482 = vmax.f32 %v360, 0.0
    %v483 = vmax.f32 %v362, 0.0
    %v484 = vmax.f32 %v366, 0.0
    %v485 = vmax.f32 %v368, 0.0
    %v486 = vmax.f32 %v372, 0.0
    %v487 = vmax.f32 %v374, 0.0
    %v488 = vmax.f32 %v378, 0.0
    %v489 = vmax.f32 %v380, 0.0
    %v490 = vmax.f32 %v384, 0.0
    %v491 = vmax.f32 %v386, 0.0
    %v492 = vmax.f32 %v390, 0.0
    %v493 = vmax.f32 %v392, 0.0
    %v494 = vmax.f32 %v396, 0.0
    %v495 = vmax.f32 %v398, 0.0
    %v496 = vmax.f32 %v402, 0.0
    %v497 = vmax.f32 %v404, 0.0
    %v498 = vmax.f32 %v408, 0.0
    %v499 = vmax.f32 %v410, 0.0
    %v500 = vmax.f32 %v414, 0.0
    %v501 = vmax.f32 %v416, 0.0
    %v502 = vmax.f32 %v420, 0.0
    %v503 = vmax.f32 %v422, 0.0
    %v504 = vmax.f32 %v426, 0.0
    %v505 = vmax.f32 %v428, 0.0
    %v506 = vmax.f32 %v432, 0.0
    %v507 = vmax.f32 %v434, 0.0
    %v508 = vmax.f32 %v438, 0.0
    %v509 = vmax.f32 %v440, 0.0
    %v510 = vmax.f32 %v444, 0.0
    %v511 = vmax.f32 %v446, 0.0
    %v512 = vpack.c.bf16 %v450, %v448
    %v513 = vpack.c.bf16 %v451, %v449
    %v514 = vpack.c.bf16 %v454, %v452
    %v515 = vpack.c.bf16 %v455, %v453
    %v516 = vpack.c.bf16 %v458, %v456
    %v517 = vpack.c.bf16 %v459, %v457
    %v518 = vpack.c.bf16 %v462, %v460
    %v519 = vpack.c.bf16 %v463, %v461
    %v520 = vpack.c.bf16 %v466, %v464
    %v521 = vpack.c.bf16 %v467, %v465
    %v522 = vpack.c.bf16 %v470, %v468
    %v523 = vpack.c.bf16 %v471, %v469
    %v524 = vpack.c.bf16 %v474, %v472
    %v525 = vpack.c.bf16 %v475, %v473
    %v526 = vpack.c.bf16 %v478, %v476
    %v527 = vpack.c.bf16 %v479, %v477
    %v528 = vpack.c.bf16 %v482, %v480
    %v529 = vpack.c.bf16 %v483, %v481
    %v530 = vpack.c.bf16 %v486, %v484
    %v531 = vpack.c.bf16 %v487, %v485
    %v532 = vpack.c.bf16 %v490, %v488
    %v533 = vpack.c.bf16 %v491, %v489
    %v534 = vpack.c.bf16 %v494, %v492
    %v535 = vpack.c.bf16 %v495, %v493
    %v536 = vpack.c.bf16 %v498, %v496
    %v537 = vpack.c.bf16 %v499, %v497
    %v538 = vpack.c.bf16 %v502, %v500
    %v539 = vpack.c.bf16 %v503, %v501
    %v540 = vpack.c.bf16 %v506, %v504
    %v541 = vpack.c.bf16 %v507, %v505
    %v542 = vpack.c.bf16 %v510, %v508
    %v543 = vpack.c.bf16 %v511, %v509
    %v544 = vld [vmem:[#allocation2] sm:$0xff]
    %v545 = vld [vmem:[#allocation2 + $0x8] sm:$0xff]
    %v546 = vld [vmem:[#allocation2 + $0x10] sm:$0xff]
    %v547 = vld [vmem:[#allocation2 + $0x18] sm:$0xff]
    %v548 = vld [vmem:[#allocation2 + $0x20] sm:$0xff]
    %v549 = vld [vmem:[#allocation2 + $0x28] sm:$0xff]
    %v550 = vld [vmem:[#allocation2 + $0x30] sm:$0xff]
    %v551 = vld [vmem:[#allocation2 + $0x38] sm:$0xff]
    %v552 = vld [vmem:[#allocation2 + $0x40] sm:$0xff]
    %v553 = vld [vmem:[#allocation2 + $0x48] sm:$0xff]
    %v554 = vld [vmem:[#allocation2 + $0x50] sm:$0xff]
    %v555 = vld [vmem:[#allocation2 + $0x58] sm:$0xff]
    %v556 = vld [vmem:[#allocation2 + $0x60] sm:$0xff]
    %v557 = vld [vmem:[#allocation2 + $0x68] sm:$0xff]
    %v558 = vld [vmem:[#allocation2 + $0x70] sm:$0xff]
    %v559 = vld [vmem:[#allocation2 + $0x78] sm:$0xff]
    %v560 = vld [vmem:[#allocation2 + $0x80] sm:$0xff]
    %v561 = vld [vmem:[#allocation2 + $0x88] sm:$0xff]
    %v562 = vld [vmem:[#allocation2 + $0x90] sm:$0xff]
    %v563 = vld [vmem:[#allocation2 + $0x98] sm:$0xff]
    %v564 = vld [vmem:[#allocation2 + $0xa0] sm:$0xff]
    %v565 = vld [vmem:[#allocation2 + $0xa8] sm:$0xff]
    %v566 = vld [vmem:[#allocation2 + $0xb0] sm:$0xff]
    %v567 = vld [vmem:[#allocation2 + $0xb8] sm:$0xff]
    %v568 = vld [vmem:[#allocation2 + $0xc0] sm:$0xff]
    %v569 = vld [vmem:[#allocation2 + $0xc8] sm:$0xff]
    %v570 = vld [vmem:[#allocation2 + $0xd0] sm:$0xff]
    %v571 = vld [vmem:[#allocation2 + $0xd8] sm:$0xff]
    %v572 = vld [vmem:[#allocation2 + $0xe0] sm:$0xff]
    %v573 = vld [vmem:[#allocation2 + $0xe8] sm:$0xff]
    %v574 = vld [vmem:[#allocation2 + $0xf0] sm:$0xff]
    %v575 = vld [vmem:[#allocation2 + $0xf8] sm:$0xff]
    %v576 = vld [vmem:[#allocation2 + $0x100] sm:$0xff]
    %v577 = vld [vmem:[#allocation2 + $0x108] sm:$0xff]
    %v578 = vld [vmem:[#allocation2 + $0x110] sm:$0xff]
    %v579 = vld [vmem:[#allocation2 + $0x118] sm:$0xff]
    %v580 = vld [vmem:[#allocation2 + $0x120] sm:$0xff]
    %v581 = vld [vmem:[#allocation2 + $0x128] sm:$0xff]
    %v582 = vld [vmem:[#allocation2 + $0x130] sm:$0xff]
    %v583 = vld [vmem:[#allocation2 + $0x138] sm:$0xff]
    %v584 = vld [vmem:[#allocation2 + $0x140] sm:$0xff]
    %v585 = vld [vmem:[#allocation2 + $0x148] sm:$0xff]
    %v586 = vld [vmem:[#allocation2 + $0x150] sm:$0xff]
    %v587 = vld [vmem:[#allocation2 + $0x158] sm:$0xff]
    %v588 = vld [vmem:[#allocation2 + $0x160] sm:$0xff]
    %v589 = vld [vmem:[#allocation2 + $0x168] sm:$0xff]
    %v590 = vld [vmem:[#allocation2 + $0x170] sm:$0xff]
    %v591 = vld [vmem:[#allocation2 + $0x178] sm:$0xff]
    %v592 = vld [vmem:[#allocation2 + $0x180] sm:$0xff]
    %v593 = vld [vmem:[#allocation2 + $0x188] sm:$0xff]
    %v594 = vld [vmem:[#allocation2 + $0x190] sm:$0xff]
    %v595 = vld [vmem:[#allocation2 + $0x198] sm:$0xff]
    %v596 = vld [vmem:[#allocation2 + $0x1a0] sm:$0xff]
    %v597 = vld [vmem:[#allocation2 + $0x1a8] sm:$0xff]
    %v598 = vld [vmem:[#allocation2 + $0x1b0] sm:$0xff]
    %v599 = vld [vmem:[#allocation2 + $0x1b8] sm:$0xff]
    %v600 = vld [vmem:[#allocation2 + $0x1c0] sm:$0xff]
    %v601 = vld [vmem:[#allocation2 + $0x1c8] sm:$0xff]
    %v602 = vld [vmem:[#allocation2 + $0x1d0] sm:$0xff]
    %v603 = vld [vmem:[#allocation2 + $0x1d8] sm:$0xff]
    %v604 = vld [vmem:[#allocation2 + $0x1e0] sm:$0xff]
    %v605 = vld [vmem:[#allocation2 + $0x1e8] sm:$0xff]
    %v606 = vld [vmem:[#allocation2 + $0x1f0] sm:$0xff]
    %v607 = vld [vmem:[#allocation2 + $0x1f8] sm:$0xff]
    %v608 = vld [vmem:[%s3] sm:$0xf]
    %v610 = vlaneseq
    %v611 = vshrl.u32 %v610, 7
    %v612 = vsub.s32 0, %v611
    %v613 = vrot.slane %v608, %v612
    %v614 = vlaneseq
    %v615 = vshrl.u32 %v614, 7
    %v616 = vsub.s32 1, %v615
    %v617 = vrot.slane %v608, %v616
    %v618 = vlaneseq
    %v619 = vshrl.u32 %v618, 7
    %v620 = vsub.s32 2, %v619
    %v621 = vrot.slane %v608, %v620
    %v622 = vlaneseq
    %v623 = vshrl.u32 %v622, 7
    %v624 = vsub.s32 3, %v623
    %v625 = vrot.slane %v608, %v624
    %v694 = vunpack.c.l.b16 %v544
    %v695 = vunpack.c.h.b16 %v544
    %v696 = vunpack.c.l.b16 %v545
    %v697 = vunpack.c.h.b16 %v545
    %v698 = vunpack.c.l.b16 %v546
    %v699 = vunpack.c.h.b16 %v546
    %v700 = vunpack.c.l.b16 %v547
    %v701 = vunpack.c.h.b16 %v547
    %v702 = vunpack.c.l.b16 %v548
    %v703 = vunpack.c.h.b16 %v548
    %v704 = vunpack.c.l.b16 %v549
    %v705 = vunpack.c.h.b16 %v549
    %v706 = vunpack.c.l.b16 %v550
    %v707 = vunpack.c.h.b16 %v550
    %v708 = vunpack.c.l.b16 %v551
    %v709 = vunpack.c.h.b16 %v551
    %v710 = vunpack.c.l.b16 %v552
    %v711 = vunpack.c.h.b16 %v552
    %v712 = vunpack.c.l.b16 %v553
    %v713 = vunpack.c.h.b16 %v553
    %v714 = vunpack.c.l.b16 %v554
    %v715 = vunpack.c.h.b16 %v554
    %v716 = vunpack.c.l.b16 %v555
    %v717 = vunpack.c.h.b16 %v555
    %v718 = vunpack.c.l.b16 %v556
    %v719 = vunpack.c.h.b16 %v556
    %v720 = vunpack.c.l.b16 %v557
    %v721 = vunpack.c.h.b16 %v557
    %v722 = vunpack.c.l.b16 %v558
    %v723 = vunpack.c.h.b16 %v558
    %v724 = vunpack.c.l.b16 %v559
    %v725 = vunpack.c.h.b16 %v559
    %v726 = vunpack.c.l.b16 %v560
    %v727 = vunpack.c.h.b16 %v560
    %v728 = vunpack.c.l.b16 %v561
    %v729 = vunpack.c.h.b16 %v561
    %v730 = vunpack.c.l.b16 %v562
    %v731 = vunpack.c.h.b16 %v562
    %v732 = vunpack.c.l.b16 %v563
    %v733 = vunpack.c.h.b16 %v563
    %v734 = vunpack.c.l.b16 %v564
    %v735 = vunpack.c.h.b16 %v564
    %v736 = vunpack.c.l.b16 %v565
    %v737 = vunpack.c.h.b16 %v565
    %v738 = vunpack.c.l.b16 %v566
    %v739 = vunpack.c.h.b16 %v566
    %v740 = vunpack.c.l.b16 %v567
    %v741 = vunpack.c.h.b16 %v567
    %v742 = vunpack.c.l.b16 %v568
    %v743 = vunpack.c.h.b16 %v568
    %v744 = vunpack.c.l.b16 %v569
    %v745 = vunpack.c.h.b16 %v569
    %v746 = vunpack.c.l.b16 %v570
    %v747 = vunpack.c.h.b16 %v570
    %v748 = vunpack.c.l.b16 %v571
    %v749 = vunpack.c.h.b16 %v571
    %v750 = vunpack.c.l.b16 %v572
    %v751 = vunpack.c.h.b16 %v572
    %v752 = vunpack.c.l.b16 %v573
    %v753 = vunpack.c.h.b16 %v573
    %v754 = vunpack.c.l.b16 %v574
    %v755 = vunpack.c.h.b16 %v574
    %v756 = vunpack.c.l.b16 %v575
    %v757 = vunpack.c.h.b16 %v575
    %v758 = vunpack.c.l.b16 %v576
    %v759 = vunpack.c.h.b16 %v576
    %v760 = vunpack.c.l.b16 %v577
    %v761 = vunpack.c.h.b16 %v577
    %v762 = vunpack.c.l.b16 %v578
    %v763 = vunpack.c.h.b16 %v578
    %v764 = vunpack.c.l.b16 %v579
    %v765 = vunpack.c.h.b16 %v579
    %v766 = vunpack.c.l.b16 %v580
    %v767 = vunpack.c.h.b16 %v580
    %v768 = vunpack.c.l.b16 %v581
    %v769 = vunpack.c.h.b16 %v581
    %v770 = vunpack.c.l.b16 %v582
    %v771 = vunpack.c.h.b16 %v582
    %v772 = vunpack.c.l.b16 %v583
    %v773 = vunpack.c.h.b16 %v583
    %v774 = vunpack.c.l.b16 %v584
    %v775 = vunpack.c.h.b16 %v584
    %v776 = vunpack.c.l.b16 %v585
    %v777 = vunpack.c.h.b16 %v585
    %v778 = vunpack.c.l.b16 %v586
    %v779 = vunpack.c.h.b16 %v586
    %v780 = vunpack.c.l.b16 %v587
    %v781 = vunpack.c.h.b16 %v587
    %v782 = vunpack.c.l.b16 %v588
    %v783 = vunpack.c.h.b16 %v588
    %v784 = vunpack.c.l.b16 %v589
    %v785 = vunpack.c.h.b16 %v589
    %v786 = vunpack.c.l.b16 %v590
    %v787 = vunpack.c.h.b16 %v590
    %v788 = vunpack.c.l.b16 %v591
    %v789 = vunpack.c.h.b16 %v591
    %v790 = vunpack.c.l.b16 %v592
    %v791 = vunpack.c.h.b16 %v592
    %v792 = vunpack.c.l.b16 %v593
    %v793 = vunpack.c.h.b16 %v593
    %v794 = vunpack.c.l.b16 %v594
    %v795 = vunpack.c.h.b16 %v594
    %v796 = vunpack.c.l.b16 %v595
    %v797 = vunpack.c.h.b16 %v595
    %v798 = vunpack.c.l.b16 %v596
    %v799 = vunpack.c.h.b16 %v596
    %v800 = vunpack.c.l.b16 %v597
    %v801 = vunpack.c.h.b16 %v597
    %v802 = vunpack.c.l.b16 %v598
    %v803 = vunpack.c.h.b16 %v598
    %v804 = vunpack.c.l.b16 %v599
    %v805 = vunpack.c.h.b16 %v599
    %v806 = vunpack.c.l.b16 %v600
    %v807 = vunpack.c.h.b16 %v600
    %v808 = vunpack.c.l.b16 %v601
    %v809 = vunpack.c.h.b16 %v601
    %v810 = vunpack.c.l.b16 %v602
    %v811 = vunpack.c.h.b16 %v602
    %v812 = vunpack.c.l.b16 %v603
    %v813 = vunpack.c.h.b16 %v603
    %v814 = vunpack.c.l.b16 %v604
    %v815 = vunpack.c.h.b16 %v604
    %v816 = vunpack.c.l.b16 %v605
    %v817 = vunpack.c.h.b16 %v605
    %v818 = vunpack.c.l.b16 %v606
    %v819 = vunpack.c.h.b16 %v606
    %v820 = vunpack.c.l.b16 %v607
    %v821 = vunpack.c.h.b16 %v607
    %v822 = vpack.c.b16 %v698, %v694
    %v823 = vpack.c.b16 %v699, %v695
    %v824 = vpack.c.b16 %v700, %v696
    %v825 = vpack.c.b16 %v701, %v697
    %v826 = vpack.c.b16 %v706, %v702
    %v827 = vpack.c.b16 %v707, %v703
    %v828 = vpack.c.b16 %v708, %v704
    %v829 = vpack.c.b16 %v709, %v705
    %v830 = vpack.c.b16 %v714, %v710
    %v831 = vpack.c.b16 %v715, %v711
    %v832 = vpack.c.b16 %v716, %v712
    %v833 = vpack.c.b16 %v717, %v713
    %v834 = vpack.c.b16 %v722, %v718
    %v835 = vpack.c.b16 %v723, %v719
    %v836 = vpack.c.b16 %v724, %v720
    %v837 = vpack.c.b16 %v725, %v721
    %v838 = vpack.c.b16 %v730, %v726
    %v839 = vpack.c.b16 %v731, %v727
    %v840 = vpack.c.b16 %v732, %v728
    %v841 = vpack.c.b16 %v733, %v729
    %v842 = vpack.c.b16 %v738, %v734
    %v843 = vpack.c.b16 %v739, %v735
    %v844 = vpack.c.b16 %v740, %v736
    %v845 = vpack.c.b16 %v741, %v737
    %v846 = vpack.c.b16 %v746, %v742
    %v847 = vpack.c.b16 %v747, %v743
    %v848 = vpack.c.b16 %v748, %v744
    %v849 = vpack.c.b16 %v749, %v745
    %v850 = vpack.c.b16 %v754, %v750
    %v851 = vpack.c.b16 %v755, %v751
    %v852 = vpack.c.b16 %v756, %v752
    %v853 = vpack.c.b16 %v757, %v753
    %v854 = vpack.c.b16 %v762, %v758
    %v855 = vpack.c.b16 %v763, %v759
    %v856 = vpack.c.b16 %v764, %v760
    %v857 = vpack.c.b16 %v765, %v761
    %v858 = vpack.c.b16 %v770, %v766
    %v859 = vpack.c.b16 %v771, %v767
    %v860 = vpack.c.b16 %v772, %v768
    %v861 = vpack.c.b16 %v773, %v769
    %v862 = vpack.c.b16 %v778, %v774
    %v863 = vpack.c.b16 %v779, %v775
    %v864 = vpack.c.b16 %v780, %v776
    %v865 = vpack.c.b16 %v781, %v777
    %v866 = vpack.c.b16 %v786, %v782
    %v867 = vpack.c.b16 %v787, %v783
    %v868 = vpack.c.b16 %v788, %v784
    %v869 = vpack.c.b16 %v789, %v785
    %v870 = vpack.c.b16 %v794, %v790
    %v871 = vpack.c.b16 %v795, %v791
    %v872 = vpack.c.b16 %v796, %v792
    %v873 = vpack.c.b16 %v797, %v793
    %v874 = vpack.c.b16 %v802, %v798
    %v875 = vpack.c.b16 %v803, %v799
    %v876 = vpack.c.b16 %v804, %v800
    %v877 = vpack.c.b16 %v805, %v801
    %v878 = vpack.c.b16 %v810, %v806
    %v879 = vpack.c.b16 %v811, %v807
    %v880 = vpack.c.b16 %v812, %v808
    %v881 = vpack.c.b16 %v813, %v809
    %v882 = vpack.c.b16 %v818, %v814
    %v883 = vpack.c.b16 %v819, %v815
    %v884 = vpack.c.b16 %v820, %v816
    %v885 = vpack.c.b16 %v821, %v817
    %950 = vmatprep.subr.bf16.mxu0 %v823
    %951 = vmatpush1.bf16.msra.mxu0 %v822
    %952 = vmatprep.subr.bf16.mxu0 %v827
    %953 = vmatpush1.bf16.msra.mxu0 %v826
    %954 = vmatprep.subr.bf16.mxu0 %v831
    %955 = vmatpush1.bf16.msra.mxu0 %v830
    %956 = vmatprep.subr.bf16.mxu0 %v835
    %957 = vmatpush1.bf16.msra.mxu0 %v834
    %958 = vmatprep.subr.bf16.mxu0 %v839
    %959 = vmatpush1.bf16.msra.mxu0 %v838
    %960 = vmatprep.subr.bf16.mxu0 %v843
    %961 = vmatpush1.bf16.msra.mxu0 %v842
    %962 = vmatprep.subr.bf16.mxu0 %v847
    %963 = vmatpush1.bf16.msra.mxu0 %v846
    %964 = vmatprep.subr.bf16.mxu0 %v851
    %965 = vmatpush1.bf16.msra.mxu0 %v850
    %966 = vmatprep.subr.bf16.mxu0 %v855
    %967 = vmatpush1.bf16.msra.mxu0 %v854
    %968 = vmatprep.subr.bf16.mxu0 %v859
    %969 = vmatpush1.bf16.msra.mxu0 %v858
    %970 = vmatprep.subr.bf16.mxu0 %v863
    %971 = vmatpush1.bf16.msra.mxu0 %v862
    %972 = vmatprep.subr.bf16.mxu0 %v867
    %973 = vmatpush1.bf16.msra.mxu0 %v866
    %974 = vmatprep.subr.bf16.mxu0 %v871
    %975 = vmatpush1.bf16.msra.mxu0 %v870
    %976 = vmatprep.subr.bf16.mxu0 %v875
    %977 = vmatpush1.bf16.msra.mxu0 %v874
    %978 = vmatprep.subr.bf16.mxu0 %v879
    %979 = vmatpush1.bf16.msra.mxu0 %v878
    %980 = vmatprep.subr.bf16.mxu0 %v883
    %981 = vmatpush1.bf16.msra.mxu0 %v882
    %982 = vmatprep.mubr.bf16.mxu0 %v513
    %983 = vmatmul.mubr.bf16.gmra.mrb[0].mxu0 %v512
    %v984 = vpop.f32.mrb[0].mxu0
    %v985 = vadd.f32 %v613, %v984
    %v986 = vpop.f32.mrb[0].mxu0
    %v987 = vadd.f32 %v617, %v986
    %v988 = vpop.f32.mrb[0].mxu0
    %v989 = vadd.f32 %v613, %v988
    %v990 = vpop.f32.mrb[0].mxu0
    %v991 = vadd.f32 %v617, %v990
    %992 = vmatprep.mubr.bf16.mxu0 %v515
    %993 = vmatmul.mubr.bf16.gmra.mrb[0].mxu0 %v514
    %v994 = vpop.f32.mrb[0].mxu0
    %v995 = vadd.f32 %v613, %v994
    %v996 = vpop.f32.mrb[0].mxu0
    %v997 = vadd.f32 %v617, %v996
    %v998 = vpop.f32.mrb[0].mxu0
    %v999 = vadd.f32 %v613, %v998
    %v1000 = vpop.f32.mrb[0].mxu0
    %v1001 = vadd.f32 %v617, %v1000
    %1002 = vmatprep.mubr.bf16.mxu0 %v517
    %1003 = vmatmul.mubr.bf16.gmra.mrb[0].mxu0 %v516
    %v1004 = vpop.f32.mrb[0].mxu0
    %v1005 = vadd.f32 %v613, %v1004
    %v1006 = vpop.f32.mrb[0].mxu0
    %v1007 = vadd.f32 %v617, %v1006
    %v1008 = vpop.f32.mrb[0].mxu0
    %v1009 = vadd.f32 %v613, %v1008
    %v1010 = vpop.f32.mrb[0].mxu0
    %v1011 = vadd.f32 %v617, %v1010
    %1012 = vmatprep.mubr.bf16.mxu0 %v519
    %1013 = vmatmul.mubr.bf16.gmra.mrb[0].mxu0 %v518
    %v1014 = vpop.f32.mrb[0].mxu0
    %v1015 = vadd.f32 %v613, %v1014
    %v1016 = vpop.f32.mrb[0].mxu0
    %v1017 = vadd.f32 %v617, %v1016
    %v1018 = vpop.f32.mrb[0].mxu0
    %v1019 = vadd.f32 %v613, %v1018
    %v1020 = vpop.f32.mrb[0].mxu0
    %v1021 = vadd.f32 %v617, %v1020
    %1022 = vmatprep.mubr.bf16.mxu0 %v521
    %1023 = vmatmul.mubr.bf16.gmra.mrb[0].mxu0 %v520
    %v1024 = vpop.f32.mrb[0].mxu0
    %v1025 = vadd.f32 %v613, %v1024
    %v1026 = vpop.f32.mrb[0].mxu0
    %v1027 = vadd.f32 %v617, %v1026
    %v1028 = vpop.f32.mrb[0].mxu0
    %v1029 = vadd.f32 %v613, %v1028
    %v1030 = vpop.f32.mrb[0].mxu0
    %v1031 = vadd.f32 %v617, %v1030
    %1032 = vmatprep.mubr.bf16.mxu0 %v523
    %1033 = vmatmul.mubr.bf16.gmra.mrb[0].mxu0 %v522
    %v1034 = vpop.f32.mrb[0].mxu0
    %v1035 = vadd.f32 %v613, %v1034
    %v1036 = vpop.f32.mrb[0].mxu0
    %v1037 = vadd.f32 %v617, %v1036
    %v1038 = vpop.f32.mrb[0].mxu0
    %v1039 = vadd.f32 %v613, %v1038
    %v1040 = vpop.f32.mrb[0].mxu0
    %v1041 = vadd.f32 %v617, %v1040
    %1042 = vmatprep.mubr.bf16.mxu0 %v525
    %1043 = vmatmul.mubr.bf16.gmra.mrb[0].mxu0 %v524
    %v1044 = vpop.f32.mrb[0].mxu0
    %v1045 = vadd.f32 %v613, %v1044
    %v1046 = vpop.f32.mrb[0].mxu0
    %v1047 = vadd.f32 %v617, %v1046
    %v1048 = vpop.f32.mrb[0].mxu0
    %v1049 = vadd.f32 %v613, %v1048
    %v1050 = vpop.f32.mrb[0].mxu0
    %v1051 = vadd.f32 %v617, %v1050
    %1052 = vmatprep.mubr.bf16.mxu0 %v527
    %1053 = vmatmul.mubr.bf16.gmra.mrb[0].mxu0 %v526
    %v1054 = vpop.f32.mrb[0].mxu0
    %v1055 = vadd.f32 %v613, %v1054
    %v1056 = vpop.f32.mrb[0].mxu0
    %v1057 = vadd.f32 %v617, %v1056
    %v1058 = vpop.f32.mrb[0].mxu0
    %v1059 = vadd.f32 %v613, %v1058
    %v1060 = vpop.f32.mrb[0].mxu0
    %v1061 = vadd.f32 %v617, %v1060
    %1062 = vmatprep.mubr.bf16.mxu0 %v529
    %1063 = vmatmul.mubr.bf16.gmra.mrb[0].mxu0 %v528
    %v1064 = vpop.f32.mrb[0].mxu0
    %v1065 = vadd.f32 %v613, %v1064
    %v1066 = vpop.f32.mrb[0].mxu0
    %v1067 = vadd.f32 %v617, %v1066
    %v1068 = vpop.f32.mrb[0].mxu0
    %v1069 = vadd.f32 %v613, %v1068
    %v1070 = vpop.f32.mrb[0].mxu0
    %v1071 = vadd.f32 %v617, %v1070
    %1072 = vmatprep.mubr.bf16.mxu0 %v531
    %1073 = vmatmul.mubr.bf16.gmra.mrb[0].mxu0 %v530
    %v1074 = vpop.f32.mrb[0].mxu0
    %v1075 = vadd.f32 %v613, %v1074
    %v1076 = vpop.f32.mrb[0].mxu0
    %v1077 = vadd.f32 %v617, %v1076
    %v1078 = vpop.f32.mrb[0].mxu0
    %v1079 = vadd.f32 %v613, %v1078
    %v1080 = vpop.f32.mrb[0].mxu0
    %v1081 = vadd.f32 %v617, %v1080
    %1082 = vmatprep.mubr.bf16.mxu0 %v533
    %1083 = vmatmul.mubr.bf16.gmra.mrb[0].mxu0 %v532
    %v1084 = vpop.f32.mrb[0].mxu0
    %v1085 = vadd.f32 %v613, %v1084
    %v1086 = vpop.f32.mrb[0].mxu0
    %v1087 = vadd.f32 %v617, %v1086
    %v1088 = vpop.f32.mrb[0].mxu0
    %v1089 = vadd.f32 %v613, %v1088
    %v1090 = vpop.f32.mrb[0].mxu0
    %v1091 = vadd.f32 %v617, %v1090
    %1092 = vmatprep.mubr.bf16.mxu0 %v535
    %1093 = vmatmul.mubr.bf16.gmra.mrb[0].mxu0 %v534
    %v1094 = vpop.f32.mrb[0].mxu0
    %v1095 = vadd.f32 %v613, %v1094
    %v1096 = vpop.f32.mrb[0].mxu0
    %v1097 = vadd.f32 %v617, %v1096
    %v1098 = vpop.f32.mrb[0].mxu0
    %v1099 = vadd.f32 %v613, %v1098
    %v1100 = vpop.f32.mrb[0].mxu0
    %v1101 = vadd.f32 %v617, %v1100
    %1102 = vmatprep.mubr.bf16.mxu0 %v537
    %1103 = vmatmul.mubr.bf16.gmra.mrb[0].mxu0 %v536
    %v1104 = vpop.f32.mrb[0].mxu0
    %v1105 = vadd.f32 %v613, %v1104
    %v1106 = vpop.f32.mrb[0].mxu0
    %v1107 = vadd.f32 %v617, %v1106
    %v1108 = vpop.f32.mrb[0].mxu0
    %v1109 = vadd.f32 %v613, %v1108
    %v1110 = vpop.f32.mrb[0].mxu0
    %v1111 = vadd.f32 %v617, %v1110
    %1112 = vmatprep.mubr.bf16.mxu0 %v539
    %1113 = vmatmul.mubr.bf16.gmra.mrb[0].mxu0 %v538
    %v1114 = vpop.f32.mrb[0].mxu0
    %v1115 = vadd.f32 %v613, %v1114
    %v1116 = vpop.f32.mrb[0].mxu0
    %v1117 = vadd.f32 %v617, %v1116
    %v1118 = vpop.f32.mrb[0].mxu0
    %v1119 = vadd.f32 %v613, %v1118
    %v1120 = vpop.f32.mrb[0].mxu0
    %v1121 = vadd.f32 %v617, %v1120
    %1122 = vmatprep.mubr.bf16.mxu0 %v541
    %1123 = vmatmul.mubr.bf16.gmra.mrb[0].mxu0 %v540
    %v1124 = vpop.f32.mrb[0].mxu0
    %v1125 = vadd.f32 %v613, %v1124
    %v1126 = vpop.f32.mrb[0].mxu0
    %v1127 = vadd.f32 %v617, %v1126
    %v1128 = vpop.f32.mrb[0].mxu0
    %v1129 = vadd.f32 %v613, %v1128
    %v1130 = vpop.f32.mrb[0].mxu0
    %v1131 = vadd.f32 %v617, %v1130
    %1132 = vmatprep.mubr.bf16.mxu0 %v543
    %1133 = vmatmul.mubr.bf16.gmra.mrb[0].mxu0 %v542
    %v1134 = vpop.f32.mrb[0].mxu0
    %v1135 = vadd.f32 %v613, %v1134
    %v1136 = vpop.f32.mrb[0].mxu0
    %v1137 = vadd.f32 %v617, %v1136
    %v1138 = vpop.f32.mrb[0].mxu0
    %v1139 = vadd.f32 %v613, %v1138
    %v1140 = vpop.f32.mrb[0].mxu0
    %v1141 = vadd.f32 %v617, %v1140
    %1142 = vdwg.mxu0
    %1143 = vmatprep.subr.bf16.mxu0 %v825
    %1144 = vmatpush1.bf16.msra.mxu0 %v824
    %1145 = vmatprep.subr.bf16.mxu0 %v829
    %1146 = vmatpush1.bf16.msra.mxu0 %v828
    %1147 = vmatprep.subr.bf16.mxu0 %v833
    %1148 = vmatpush1.bf16.msra.mxu0 %v832
    %1149 = vmatprep.subr.bf16.mxu0 %v837
    %1150 = vmatpush1.bf16.msra.mxu0 %v836
    %1151 = vmatprep.subr.bf16.mxu0 %v841
    %1152 = vmatpush1.bf16.msra.mxu0 %v840
    %1153 = vmatprep.subr.bf16.mxu0 %v845
    %1154 = vmatpush1.bf16.msra.mxu0 %v844
    %1155 = vmatprep.subr.bf16.mxu0 %v849
    %1156 = vmatpush1.bf16.msra.mxu0 %v848
    %1157 = vmatprep.subr.bf16.mxu0 %v853
    %1158 = vmatpush1.bf16.msra.mxu0 %v852
    %1159 = vmatprep.subr.bf16.mxu0 %v857
    %1160 = vmatpush1.bf16.msra.mxu0 %v856
    %1161 = vmatprep.subr.bf16.mxu0 %v861
    %1162 = vmatpush1.bf16.msra.mxu0 %v860
    %1163 = vmatprep.subr.bf16.mxu0 %v865
    %1164 = vmatpush1.bf16.msra.mxu0 %v864
    %1165 = vmatprep.subr.bf16.mxu0 %v869
    %1166 = vmatpush1.bf16.msra.mxu0 %v868
    %1167 = vmatprep.subr.bf16.mxu0 %v873
    %1168 = vmatpush1.bf16.msra.mxu0 %v872
    %1169 = vmatprep.subr.bf16.mxu0 %v877
    %1170 = vmatpush1.bf16.msra.mxu0 %v876
    %1171 = vmatprep.subr.bf16.mxu0 %v881
    %1172 = vmatpush1.bf16.msra.mxu0 %v880
    %1173 = vmatprep.subr.bf16.mxu0 %v885
    %1174 = vmatpush1.bf16.msra.mxu0 %v884
    %1175 = vmatprep.mubr.bf16.mxu0 %v513
    %1176 = vmatmul.mubr.bf16.gmra.mrb[0].mxu0 %v512
    %v1177 = vpop.f32.mrb[0].mxu0
    %v1178 = vadd.f32 %v621, %v1177
    %v1179 = vpop.f32.mrb[0].mxu0
    %v1180 = vadd.f32 %v625, %v1179
    %v1181 = vpop.f32.mrb[0].mxu0
    %v1182 = vadd.f32 %v621, %v1181
    %v1183 = vpop.f32.mrb[0].mxu0
    %v1184 = vadd.f32 %v625, %v1183
    %1185 = vmatprep.mubr.bf16.mxu0 %v515
    %1186 = vmatmul.mubr.bf16.gmra.mrb[0].mxu0 %v514
    %v1187 = vpop.f32.mrb[0].mxu0
    %v1188 = vadd.f32 %v621, %v1187
    %v1189 = vpop.f32.mrb[0].mxu0
    %v1190 = vadd.f32 %v625, %v1189
    %v1191 = vpop.f32.mrb[0].mxu0
    %v1192 = vadd.f32 %v621, %v1191
    %v1193 = vpop.f32.mrb[0].mxu0
    %v1194 = vadd.f32 %v625, %v1193
    %1195 = vmatprep.mubr.bf16.mxu0 %v517
    %1196 = vmatmul.mubr.bf16.gmra.mrb[0].mxu0 %v516
    %v1197 = vpop.f32.mrb[0].mxu0
    %v1198 = vadd.f32 %v621, %v1197
    %v1199 = vpop.f32.mrb[0].mxu0
    %v1200 = vadd.f32 %v625, %v1199
    %v1201 = vpop.f32.mrb[0].mxu0
    %v1202 = vadd.f32 %v621, %v1201
    %v1203 = vpop.f32.mrb[0].mxu0
    %v1204 = vadd.f32 %v625, %v1203
    %1205 = vmatprep.mubr.bf16.mxu0 %v519
    %1206 = vmatmul.mubr.bf16.gmra.mrb[0].mxu0 %v518
    %v1207 = vpop.f32.mrb[0].mxu0
    %v1208 = vadd.f32 %v621, %v1207
    %v1209 = vpop.f32.mrb[0].mxu0
    %v1210 = vadd.f32 %v625, %v1209
    %v1211 = vpop.f32.mrb[0].mxu0
    %v1212 = vadd.f32 %v621, %v1211
    %v1213 = vpop.f32.mrb[0].mxu0
    %v1214 = vadd.f32 %v625, %v1213
    %1215 = vmatprep.mubr.bf16.mxu0 %v521
    %1216 = vmatmul.mubr.bf16.gmra.mrb[0].mxu0 %v520
    %v1217 = vpop.f32.mrb[0].mxu0
    %v1218 = vadd.f32 %v621, %v1217
    %v1219 = vpop.f32.mrb[0].mxu0
    %v1220 = vadd.f32 %v625, %v1219
    %v1221 = vpop.f32.mrb[0].mxu0
    %v1222 = vadd.f32 %v621, %v1221
    %v1223 = vpop.f32.mrb[0].mxu0
    %v1224 = vadd.f32 %v625, %v1223
    %1225 = vmatprep.mubr.bf16.mxu0 %v523
    %1226 = vmatmul.mubr.bf16.gmra.mrb[0].mxu0 %v522
    %v1227 = vpop.f32.mrb[0].mxu0
    %v1228 = vadd.f32 %v621, %v1227
    %v1229 = vpop.f32.mrb[0].mxu0
    %v1230 = vadd.f32 %v625, %v1229
    %v1231 = vpop.f32.mrb[0].mxu0
    %v1232 = vadd.f32 %v621, %v1231
    %v1233 = vpop.f32.mrb[0].mxu0
    %v1234 = vadd.f32 %v625, %v1233
    %1235 = vmatprep.mubr.bf16.mxu0 %v525
    %1236 = vmatmul.mubr.bf16.gmra.mrb[0].mxu0 %v524
    %v1237 = vpop.f32.mrb[0].mxu0
    %v1238 = vadd.f32 %v621, %v1237
    %v1239 = vpop.f32.mrb[0].mxu0
    %v1240 = vadd.f32 %v625, %v1239
    %v1241 = vpop.f32.mrb[0].mxu0
    %v1242 = vadd.f32 %v621, %v1241
    %v1243 = vpop.f32.mrb[0].mxu0
    %v1244 = vadd.f32 %v625, %v1243
    %1245 = vmatprep.mubr.bf16.mxu0 %v527
    %1246 = vmatmul.mubr.bf16.gmra.mrb[0].mxu0 %v526
    %v1247 = vpop.f32.mrb[0].mxu0
    %v1248 = vadd.f32 %v621, %v1247
    %v1249 = vpop.f32.mrb[0].mxu0
    %v1250 = vadd.f32 %v625, %v1249
    %v1251 = vpop.f32.mrb[0].mxu0
    %v1252 = vadd.f32 %v621, %v1251
    %v1253 = vpop.f32.mrb[0].mxu0
    %v1254 = vadd.f32 %v625, %v1253
    %1255 = vmatprep.mubr.bf16.mxu0 %v529
    %1256 = vmatmul.mubr.bf16.gmra.mrb[0].mxu0 %v528
    %v1257 = vpop.f32.mrb[0].mxu0
    %v1258 = vadd.f32 %v621, %v1257
    %v1259 = vpop.f32.mrb[0].mxu0
    %v1260 = vadd.f32 %v625, %v1259
    %v1261 = vpop.f32.mrb[0].mxu0
    %v1262 = vadd.f32 %v621, %v1261
    %v1263 = vpop.f32.mrb[0].mxu0
    %v1264 = vadd.f32 %v625, %v1263
    %1265 = vmatprep.mubr.bf16.mxu0 %v531
    %1266 = vmatmul.mubr.bf16.gmra.mrb[0].mxu0 %v530
    %v1267 = vpop.f32.mrb[0].mxu0
    %v1268 = vadd.f32 %v621, %v1267
    %v1269 = vpop.f32.mrb[0].mxu0
    %v1270 = vadd.f32 %v625, %v1269
    %v1271 = vpop.f32.mrb[0].mxu0
    %v1272 = vadd.f32 %v621, %v1271
    %v1273 = vpop.f32.mrb[0].mxu0
    %v1274 = vadd.f32 %v625, %v1273
    %1275 = vmatprep.mubr.bf16.mxu0 %v533
    %1276 = vmatmul.mubr.bf16.gmra.mrb[0].mxu0 %v532
    %v1277 = vpop.f32.mrb[0].mxu0
    %v1278 = vadd.f32 %v621, %v1277
    %v1279 = vpop.f32.mrb[0].mxu0
    %v1280 = vadd.f32 %v625, %v1279
    %v1281 = vpop.f32.mrb[0].mxu0
    %v1282 = vadd.f32 %v621, %v1281
    %v1283 = vpop.f32.mrb[0].mxu0
    %v1284 = vadd.f32 %v625, %v1283
    %1285 = vmatprep.mubr.bf16.mxu0 %v535
    %1286 = vmatmul.mubr.bf16.gmra.mrb[0].mxu0 %v534
    %v1287 = vpop.f32.mrb[0].mxu0
    %v1288 = vadd.f32 %v621, %v1287
    %v1289 = vpop.f32.mrb[0].mxu0
    %v1290 = vadd.f32 %v625, %v1289
    %v1291 = vpop.f32.mrb[0].mxu0
    %v1292 = vadd.f32 %v621, %v1291
    %v1293 = vpop.f32.mrb[0].mxu0
    %v1294 = vadd.f32 %v625, %v1293
    %1295 = vmatprep.mubr.bf16.mxu0 %v537
    %1296 = vmatmul.mubr.bf16.gmra.mrb[0].mxu0 %v536
    %v1297 = vpop.f32.mrb[0].mxu0
    %v1298 = vadd.f32 %v621, %v1297
    %v1299 = vpop.f32.mrb[0].mxu0
    %v1300 = vadd.f32 %v625, %v1299
    %v1301 = vpop.f32.mrb[0].mxu0
    %v1302 = vadd.f32 %v621, %v1301
    %v1303 = vpop.f32.mrb[0].mxu0
    %v1304 = vadd.f32 %v625, %v1303
    %1305 = vmatprep.mubr.bf16.mxu0 %v539
    %1306 = vmatmul.mubr.bf16.gmra.mrb[0].mxu0 %v538
    %v1307 = vpop.f32.mrb[0].mxu0
    %v1308 = vadd.f32 %v621, %v1307
    %v1309 = vpop.f32.mrb[0].mxu0
    %v1310 = vadd.f32 %v625, %v1309
    %v1311 = vpop.f32.mrb[0].mxu0
    %v1312 = vadd.f32 %v621, %v1311
    %v1313 = vpop.f32.mrb[0].mxu0
    %v1314 = vadd.f32 %v625, %v1313
    %1315 = vmatprep.mubr.bf16.mxu0 %v541
    %1316 = vmatmul.mubr.bf16.gmra.mrb[0].mxu0 %v540
    %v1317 = vpop.f32.mrb[0].mxu0
    %v1318 = vadd.f32 %v621, %v1317
    %v1319 = vpop.f32.mrb[0].mxu0
    %v1320 = vadd.f32 %v625, %v1319
    %v1321 = vpop.f32.mrb[0].mxu0
    %v1322 = vadd.f32 %v621, %v1321
    %v1323 = vpop.f32.mrb[0].mxu0
    %v1324 = vadd.f32 %v625, %v1323
    %1325 = vmatprep.mubr.bf16.mxu0 %v543
    %1326 = vmatmul.mubr.bf16.gmra.mrb[0].mxu0 %v542
    %v1327 = vpop.f32.mrb[0].mxu0
    %v1328 = vadd.f32 %v621, %v1327
    %v1329 = vpop.f32.mrb[0].mxu0
    %v1330 = vadd.f32 %v625, %v1329
    %v1331 = vpop.f32.mrb[0].mxu0
    %v1332 = vadd.f32 %v621, %v1331
    %v1333 = vpop.f32.mrb[0].mxu0
    %v1334 = vadd.f32 %v625, %v1333
    %1335 = vdwg.mxu0
    %v1336 = vmax.f32 %v985, 0.0
    %v1337 = vmax.f32 %v987, 0.0
    %v1338 = vmax.f32 %v1178, 0.0
    %v1339 = vmax.f32 %v1180, 0.0
    %v1340 = vmax.f32 %v989, 0.0
    %v1341 = vmax.f32 %v991, 0.0
    %v1342 = vmax.f32 %v1182, 0.0
    %v1343 = vmax.f32 %v1184, 0.0
    %v1344 = vmax.f32 %v995, 0.0
    %v1345 = vmax.f32 %v997, 0.0
    %v1346 = vmax.f32 %v1188, 0.0
    %v1347 = vmax.f32 %v1190, 0.0
    %v1348 = vmax.f32 %v999, 0.0
    %v1349 = vmax.f32 %v1001, 0.0
    %v1350 = vmax.f32 %v1192, 0.0
    %v1351 = vmax.f32 %v1194, 0.0
    %v1352 = vmax.f32 %v1005, 0.0
    %v1353 = vmax.f32 %v1007, 0.0
    %v1354 = vmax.f32 %v1198, 0.0
    %v1355 = vmax.f32 %v1200, 0.0
    %v1356 = vmax.f32 %v1009, 0.0
    %v1357 = vmax.f32 %v1011, 0.0
    %v1358 = vmax.f32 %v1202, 0.0
    %v1359 = vmax.f32 %v1204, 0.0
    %v1360 = vmax.f32 %v1015, 0.0
    %v1361 = vmax.f32 %v1017, 0.0
    %v1362 = vmax.f32 %v1208, 0.0
    %v1363 = vmax.f32 %v1210, 0.0
    %v1364 = vmax.f32 %v1019, 0.0
    %v1365 = vmax.f32 %v1021, 0.0
    %v1366 = vmax.f32 %v1212, 0.0
    %v1367 = vmax.f32 %v1214, 0.0
    %v1368 = vmax.f32 %v1025, 0.0
    %v1369 = vmax.f32 %v1027, 0.0
    %v1370 = vmax.f32 %v1218, 0.0
    %v1371 = vmax.f32 %v1220, 0.0
    %v1372 = vmax.f32 %v1029, 0.0
    %v1373 = vmax.f32 %v1031, 0.0
    %v1374 = vmax.f32 %v1222, 0.0
    %v1375 = vmax.f32 %v1224, 0.0
    %v1376 = vmax.f32 %v1035, 0.0
    %v1377 = vmax.f32 %v1037, 0.0
    %v1378 = vmax.f32 %v1228, 0.0
    %v1379 = vmax.f32 %v1230, 0.0
    %v1380 = vmax.f32 %v1039, 0.0
    %v1381 = vmax.f32 %v1041, 0.0
    %v1382 = vmax.f32 %v1232, 0.0
    %v1383 = vmax.f32 %v1234, 0.0
    %v1384 = vmax.f32 %v1045, 0.0
    %v1385 = vmax.f32 %v1047, 0.0
    %v1386 = vmax.f32 %v1238, 0.0
    %v1387 = vmax.f32 %v1240, 0.0
    %v1388 = vmax.f32 %v1049, 0.0
    %v1389 = vmax.f32 %v1051, 0.0
    %v1390 = vmax.f32 %v1242, 0.0
    %v1391 = vmax.f32 %v1244, 0.0
    %v1392 = vmax.f32 %v1055, 0.0
    %v1393 = vmax.f32 %v1057, 0.0
    %v1394 = vmax.f32 %v1248, 0.0
    %v1395 = vmax.f32 %v1250, 0.0
    %v1396 = vmax.f32 %v1059, 0.0
    %v1397 = vmax.f32 %v1061, 0.0
    %v1398 = vmax.f32 %v1252, 0.0
    %v1399 = vmax.f32 %v1254, 0.0
    %v1400 = vmax.f32 %v1065, 0.0
    %v1401 = vmax.f32 %v1067, 0.0
    %v1402 = vmax.f32 %v1258, 0.0
    %v1403 = vmax.f32 %v1260, 0.0
    %v1404 = vmax.f32 %v1069, 0.0
    %v1405 = vmax.f32 %v1071, 0.0
    %v1406 = vmax.f32 %v1262, 0.0
    %v1407 = vmax.f32 %v1264, 0.0
    %v1408 = vmax.f32 %v1075, 0.0
    %v1409 = vmax.f32 %v1077, 0.0
    %v1410 = vmax.f32 %v1268, 0.0
    %v1411 = vmax.f32 %v1270, 0.0
    %v1412 = vmax.f32 %v1079, 0.0
    %v1413 = vmax.f32 %v1081, 0.0
    %v1414 = vmax.f32 %v1272, 0.0
    %v1415 = vmax.f32 %v1274, 0.0
    %v1416 = vmax.f32 %v1085, 0.0
    %v1417 = vmax.f32 %v1087, 0.0
    %v1418 = vmax.f32 %v1278, 0.0
    %v1419 = vmax.f32 %v1280, 0.0
    %v1420 = vmax.f32 %v1089, 0.0
    %v1421 = vmax.f32 %v1091, 0.0
    %v1422 = vmax.f32 %v1282, 0.0
    %v1423 = vmax.f32 %v1284, 0.0
    %v1424 = vmax.f32 %v1095, 0.0
    %v1425 = vmax.f32 %v1097, 0.0
    %v1426 = vmax.f32 %v1288, 0.0
    %v1427 = vmax.f32 %v1290, 0.0
    %v1428 = vmax.f32 %v1099, 0.0
    %v1429 = vmax.f32 %v1101, 0.0
    %v1430 = vmax.f32 %v1292, 0.0
    %v1431 = vmax.f32 %v1294, 0.0
    %v1432 = vmax.f32 %v1105, 0.0
    %v1433 = vmax.f32 %v1107, 0.0
    %v1434 = vmax.f32 %v1298, 0.0
    %v1435 = vmax.f32 %v1300, 0.0
    %v1436 = vmax.f32 %v1109, 0.0
    %v1437 = vmax.f32 %v1111, 0.0
    %v1438 = vmax.f32 %v1302, 0.0
    %v1439 = vmax.f32 %v1304, 0.0
    %v1440 = vmax.f32 %v1115, 0.0
    %v1441 = vmax.f32 %v1117, 0.0
    %v1442 = vmax.f32 %v1308, 0.0
    %v1443 = vmax.f32 %v1310, 0.0
    %v1444 = vmax.f32 %v1119, 0.0
    %v1445 = vmax.f32 %v1121, 0.0
    %v1446 = vmax.f32 %v1312, 0.0
    %v1447 = vmax.f32 %v1314, 0.0
    %v1448 = vmax.f32 %v1125, 0.0
    %v1449 = vmax.f32 %v1127, 0.0
    %v1450 = vmax.f32 %v1318, 0.0
    %v1451 = vmax.f32 %v1320, 0.0
    %v1452 = vmax.f32 %v1129, 0.0
    %v1453 = vmax.f32 %v1131, 0.0
    %v1454 = vmax.f32 %v1322, 0.0
    %v1455 = vmax.f32 %v1324, 0.0
    %v1456 = vmax.f32 %v1135, 0.0
    %v1457 = vmax.f32 %v1137, 0.0
    %v1458 = vmax.f32 %v1328, 0.0
    %v1459 = vmax.f32 %v1330, 0.0
    %v1460 = vmax.f32 %v1139, 0.0
    %v1461 = vmax.f32 %v1141, 0.0
    %v1462 = vmax.f32 %v1332, 0.0
    %v1463 = vmax.f32 %v1334, 0.0
    %v1464 = vpack.c.bf16 %v1340, %v1336
    %v1465 = vpack.c.bf16 %v1341, %v1337
    %v1466 = vpack.c.bf16 %v1342, %v1338
    %v1467 = vpack.c.bf16 %v1343, %v1339
    %v1468 = vpack.c.bf16 %v1348, %v1344
    %v1469 = vpack.c.bf16 %v1349, %v1345
    %v1470 = vpack.c.bf16 %v1350, %v1346
    %v1471 = vpack.c.bf16 %v1351, %v1347
    %v1472 = vpack.c.bf16 %v1356, %v1352
    %v1473 = vpack.c.bf16 %v1357, %v1353
    %v1474 = vpack.c.bf16 %v1358, %v1354
    %v1475 = vpack.c.bf16 %v1359, %v1355
    %v1476 = vpack.c.bf16 %v1364, %v1360
    %v1477 = vpack.c.bf16 %v1365, %v1361
    %v1478 = vpack.c.bf16 %v1366, %v1362
    %v1479 = vpack.c.bf16 %v1367, %v1363
    %v1480 = vpack.c.bf16 %v1372, %v1368
    %v1481 = vpack.c.bf16 %v1373, %v1369
    %v1482 = vpack.c.bf16 %v1374, %v1370
    %v1483 = vpack.c.bf16 %v1375, %v1371
    %v1484 = vpack.c.bf16 %v1380, %v1376
    %v1485 = vpack.c.bf16 %v1381, %v1377
    %v1486 = vpack.c.bf16 %v1382, %v1378
    %v1487 = vpack.c.bf16 %v1383, %v1379
    %v1488 = vpack.c.bf16 %v1388, %v1384
    %v1489 = vpack.c.bf16 %v1389, %v1385
    %v1490 = vpack.c.bf16 %v1390, %v1386
    %v1491 = vpack.c.bf16 %v1391, %v1387
    %v1492 = vpack.c.bf16 %v1396, %v1392
    %v1493 = vpack.c.bf16 %v1397, %v1393
    %v1494 = vpack.c.bf16 %v1398, %v1394
    %v1495 = vpack.c.bf16 %v1399, %v1395
    %v1496 = vpack.c.bf16 %v1404, %v1400
    %v1497 = vpack.c.bf16 %v1405, %v1401
    %v1498 = vpack.c.bf16 %v1406, %v1402
    %v1499 = vpack.c.bf16 %v1407, %v1403
    %v1500 = vpack.c.bf16 %v1412, %v1408
    %v1501 = vpack.c.bf16 %v1413, %v1409
    %v1502 = vpack.c.bf16 %v1414, %v1410
    %v1503 = vpack.c.bf16 %v1415, %v1411
    %v1504 = vpack.c.bf16 %v1420, %v1416
    %v1505 = vpack.c.bf16 %v1421, %v1417
    %v1506 = vpack.c.bf16 %v1422, %v1418
    %v1507 = vpack.c.bf16 %v1423, %v1419
    %v1508 = vpack.c.bf16 %v1428, %v1424
    %v1509 = vpack.c.bf16 %v1429, %v1425
    %v1510 = vpack.c.bf16 %v1430, %v1426
    %v1511 = vpack.c.bf16 %v1431, %v1427
    %v1512 = vpack.c.bf16 %v1436, %v1432
    %v1513 = vpack.c.bf16 %v1437, %v1433
    %v1514 = vpack.c.bf16 %v1438, %v1434
    %v1515 = vpack.c.bf16 %v1439, %v1435
    %v1516 = vpack.c.bf16 %v1444, %v1440
    %v1517 = vpack.c.bf16 %v1445, %v1441
    %v1518 = vpack.c.bf16 %v1446, %v1442
    %v1519 = vpack.c.bf16 %v1447, %v1443
    %v1520 = vpack.c.bf16 %v1452, %v1448
    %v1521 = vpack.c.bf16 %v1453, %v1449
    %v1522 = vpack.c.bf16 %v1454, %v1450
    %v1523 = vpack.c.bf16 %v1455, %v1451
    %v1524 = vpack.c.bf16 %v1460, %v1456
    %v1525 = vpack.c.bf16 %v1461, %v1457
    %v1526 = vpack.c.bf16 %v1462, %v1458
    %v1527 = vpack.c.bf16 %v1463, %v1459
    %v1528 = vld [vmem:[%s4] sm:$0xff]
    %v1529 = vld [vmem:[%s4 + $0x8] sm:$0xff]
    %v1530 = vld [vmem:[%s4 + $0x10] sm:$0xff]
    %v1531 = vld [vmem:[%s4 + $0x18] sm:$0xff]
    %v1532 = vld [vmem:[%s4 + $0x20] sm:$0xff]
    %v1533 = vld [vmem:[%s4 + $0x28] sm:$0xff]
    %v1534 = vld [vmem:[%s4 + $0x30] sm:$0xff]
    %v1535 = vld [vmem:[%s4 + $0x38] sm:$0xff]
    %v1536 = vld [vmem:[%s4 + $0x40] sm:$0xff]
    %v1537 = vld [vmem:[%s4 + $0x48] sm:$0xff]
    %v1538 = vld [vmem:[%s4 + $0x50] sm:$0xff]
    %v1539 = vld [vmem:[%s4 + $0x58] sm:$0xff]
    %v1540 = vld [vmem:[%s4 + $0x60] sm:$0xff]
    %v1541 = vld [vmem:[%s4 + $0x68] sm:$0xff]
    %v1542 = vld [vmem:[%s4 + $0x70] sm:$0xff]
    %v1543 = vld [vmem:[%s4 + $0x78] sm:$0xff]
    %v1544 = vld [vmem:[%s4 + $0x80] sm:$0xff]
    %v1545 = vld [vmem:[%s4 + $0x88] sm:$0xff]
    %v1546 = vld [vmem:[%s4 + $0x90] sm:$0xff]
    %v1547 = vld [vmem:[%s4 + $0x98] sm:$0xff]
    %v1548 = vld [vmem:[%s4 + $0xa0] sm:$0xff]
    %v1549 = vld [vmem:[%s4 + $0xa8] sm:$0xff]
    %v1550 = vld [vmem:[%s4 + $0xb0] sm:$0xff]
    %v1551 = vld [vmem:[%s4 + $0xb8] sm:$0xff]
    %v1552 = vld [vmem:[%s4 + $0xc0] sm:$0xff]
    %v1553 = vld [vmem:[%s4 + $0xc8] sm:$0xff]
    %v1554 = vld [vmem:[%s4 + $0xd0] sm:$0xff]
    %v1555 = vld [vmem:[%s4 + $0xd8] sm:$0xff]
    %v1556 = vld [vmem:[%s4 + $0xe0] sm:$0xff]
    %v1557 = vld [vmem:[%s4 + $0xe8] sm:$0xff]
    %v1558 = vld [vmem:[%s4 + $0xf0] sm:$0xff]
    %v1559 = vld [vmem:[%s4 + $0xf8] sm:$0xff]
    %v1560 = vld [vmem:[%s4 + $0x100] sm:$0xff]
    %v1561 = vld [vmem:[%s4 + $0x108] sm:$0xff]
    %v1562 = vld [vmem:[%s4 + $0x110] sm:$0xff]
    %v1563 = vld [vmem:[%s4 + $0x118] sm:$0xff]
    %v1564 = vld [vmem:[%s4 + $0x120] sm:$0xff]
    %v1565 = vld [vmem:[%s4 + $0x128] sm:$0xff]
    %v1566 = vld [vmem:[%s4 + $0x130] sm:$0xff]
    %v1567 = vld [vmem:[%s4 + $0x138] sm:$0xff]
    %v1568 = vld [vmem:[%s4 + $0x140] sm:$0xff]
    %v1569 = vld [vmem:[%s4 + $0x148] sm:$0xff]
    %v1570 = vld [vmem:[%s4 + $0x150] sm:$0xff]
    %v1571 = vld [vmem:[%s4 + $0x158] sm:$0xff]
    %v1572 = vld [vmem:[%s4 + $0x160] sm:$0xff]
    %v1573 = vld [vmem:[%s4 + $0x168] sm:$0xff]
    %v1574 = vld [vmem:[%s4 + $0x170] sm:$0xff]
    %v1575 = vld [vmem:[%s4 + $0x178] sm:$0xff]
    %v1576 = vld [vmem:[%s4 + $0x180] sm:$0xff]
    %v1577 = vld [vmem:[%s4 + $0x188] sm:$0xff]
    %v1578 = vld [vmem:[%s4 + $0x190] sm:$0xff]
    %v1579 = vld [vmem:[%s4 + $0x198] sm:$0xff]
    %v1580 = vld [vmem:[%s4 + $0x1a0] sm:$0xff]
    %v1581 = vld [vmem:[%s4 + $0x1a8] sm:$0xff]
    %v1582 = vld [vmem:[%s4 + $0x1b0] sm:$0xff]
    %v1583 = vld [vmem:[%s4 + $0x1b8] sm:$0xff]
    %v1584 = vld [vmem:[%s4 + $0x1c0] sm:$0xff]
    %v1585 = vld [vmem:[%s4 + $0x1c8] sm:$0xff]
    %v1586 = vld [vmem:[%s4 + $0x1d0] sm:$0xff]
    %v1587 = vld [vmem:[%s4 + $0x1d8] sm:$0xff]
    %v1588 = vld [vmem:[%s4 + $0x1e0] sm:$0xff]
    %v1589 = vld [vmem:[%s4 + $0x1e8] sm:$0xff]
    %v1590 = vld [vmem:[%s4 + $0x1f0] sm:$0xff]
    %v1591 = vld [vmem:[%s4 + $0x1f8] sm:$0xff]
    %v1592 = vld [vmem:[%s4 + $0x200] sm:$0xff]
    %v1593 = vld [vmem:[%s4 + $0x208] sm:$0xff]
    %v1594 = vld [vmem:[%s4 + $0x210] sm:$0xff]
    %v1595 = vld [vmem:[%s4 + $0x218] sm:$0xff]
    %v1596 = vld [vmem:[%s4 + $0x220] sm:$0xff]
    %v1597 = vld [vmem:[%s4 + $0x228] sm:$0xff]
    %v1598 = vld [vmem:[%s4 + $0x230] sm:$0xff]
    %v1599 = vld [vmem:[%s4 + $0x238] sm:$0xff]
    %v1600 = vld [vmem:[%s4 + $0x240] sm:$0xff]
    %v1601 = vld [vmem:[%s4 + $0x248] sm:$0xff]
    %v1602 = vld [vmem:[%s4 + $0x250] sm:$0xff]
    %v1603 = vld [vmem:[%s4 + $0x258] sm:$0xff]
    %v1604 = vld [vmem:[%s4 + $0x260] sm:$0xff]
    %v1605 = vld [vmem:[%s4 + $0x268] sm:$0xff]
    %v1606 = vld [vmem:[%s4 + $0x270] sm:$0xff]
    %v1607 = vld [vmem:[%s4 + $0x278] sm:$0xff]
    %v1608 = vld [vmem:[%s4 + $0x280] sm:$0xff]
    %v1609 = vld [vmem:[%s4 + $0x288] sm:$0xff]
    %v1610 = vld [vmem:[%s4 + $0x290] sm:$0xff]
    %v1611 = vld [vmem:[%s4 + $0x298] sm:$0xff]
    %v1612 = vld [vmem:[%s4 + $0x2a0] sm:$0xff]
    %v1613 = vld [vmem:[%s4 + $0x2a8] sm:$0xff]
    %v1614 = vld [vmem:[%s4 + $0x2b0] sm:$0xff]
    %v1615 = vld [vmem:[%s4 + $0x2b8] sm:$0xff]
    %v1616 = vld [vmem:[%s4 + $0x2c0] sm:$0xff]
    %v1617 = vld [vmem:[%s4 + $0x2c8] sm:$0xff]
    %v1618 = vld [vmem:[%s4 + $0x2d0] sm:$0xff]
    %v1619 = vld [vmem:[%s4 + $0x2d8] sm:$0xff]
    %v1620 = vld [vmem:[%s4 + $0x2e0] sm:$0xff]
    %v1621 = vld [vmem:[%s4 + $0x2e8] sm:$0xff]
    %v1622 = vld [vmem:[%s4 + $0x2f0] sm:$0xff]
    %v1623 = vld [vmem:[%s4 + $0x2f8] sm:$0xff]
    %v1624 = vld [vmem:[%s4 + $0x300] sm:$0xff]
    %v1625 = vld [vmem:[%s4 + $0x308] sm:$0xff]
    %v1626 = vld [vmem:[%s4 + $0x310] sm:$0xff]
    %v1627 = vld [vmem:[%s4 + $0x318] sm:$0xff]
    %v1628 = vld [vmem:[%s4 + $0x320] sm:$0xff]
    %v1629 = vld [vmem:[%s4 + $0x328] sm:$0xff]
    %v1630 = vld [vmem:[%s4 + $0x330] sm:$0xff]
    %v1631 = vld [vmem:[%s4 + $0x338] sm:$0xff]
    %v1632 = vld [vmem:[%s4 + $0x340] sm:$0xff]
    %v1633 = vld [vmem:[%s4 + $0x348] sm:$0xff]
    %v1634 = vld [vmem:[%s4 + $0x350] sm:$0xff]
    %v1635 = vld [vmem:[%s4 + $0x358] sm:$0xff]
    %v1636 = vld [vmem:[%s4 + $0x360] sm:$0xff]
    %v1637 = vld [vmem:[%s4 + $0x368] sm:$0xff]
    %v1638 = vld [vmem:[%s4 + $0x370] sm:$0xff]
    %v1639 = vld [vmem:[%s4 + $0x378] sm:$0xff]
    %v1640 = vld [vmem:[%s4 + $0x380] sm:$0xff]
    %v1641 = vld [vmem:[%s4 + $0x388] sm:$0xff]
    %v1642 = vld [vmem:[%s4 + $0x390] sm:$0xff]
    %v1643 = vld [vmem:[%s4 + $0x398] sm:$0xff]
    %v1644 = vld [vmem:[%s4 + $0x3a0] sm:$0xff]
    %v1645 = vld [vmem:[%s4 + $0x3a8] sm:$0xff]
    %v1646 = vld [vmem:[%s4 + $0x3b0] sm:$0xff]
    %v1647 = vld [vmem:[%s4 + $0x3b8] sm:$0xff]
    %v1648 = vld [vmem:[%s4 + $0x3c0] sm:$0xff]
    %v1649 = vld [vmem:[%s4 + $0x3c8] sm:$0xff]
    %v1650 = vld [vmem:[%s4 + $0x3d0] sm:$0xff]
    %v1651 = vld [vmem:[%s4 + $0x3d8] sm:$0xff]
    %v1652 = vld [vmem:[%s4 + $0x3e0] sm:$0xff]
    %v1653 = vld [vmem:[%s4 + $0x3e8] sm:$0xff]
    %v1654 = vld [vmem:[%s4 + $0x3f0] sm:$0xff]
    %v1655 = vld [vmem:[%s4 + $0x3f8] sm:$0xff]
    %v1656 = vld [vmem:[%s4 + $0x400] sm:$0xff]
    %v1657 = vld [vmem:[%s4 + $0x408] sm:$0xff]
    %v1658 = vld [vmem:[%s4 + $0x410] sm:$0xff]
    %v1659 = vld [vmem:[%s4 + $0x418] sm:$0xff]
    %v1660 = vld [vmem:[%s4 + $0x420] sm:$0xff]
    %v1661 = vld [vmem:[%s4 + $0x428] sm:$0xff]
    %v1662 = vld [vmem:[%s4 + $0x430] sm:$0xff]
    %v1663 = vld [vmem:[%s4 + $0x438] sm:$0xff]
    %v1664 = vld [vmem:[%s4 + $0x440] sm:$0xff]
    %v1665 = vld [vmem:[%s4 + $0x448] sm:$0xff]
    %v1666 = vld [vmem:[%s4 + $0x450] sm:$0xff]
    %v1667 = vld [vmem:[%s4 + $0x458] sm:$0xff]
    %v1668 = vld [vmem:[%s4 + $0x460] sm:$0xff]
    %v1669 = vld [vmem:[%s4 + $0x468] sm:$0xff]
    %v1670 = vld [vmem:[%s4 + $0x470] sm:$0xff]
    %v1671 = vld [vmem:[%s4 + $0x478] sm:$0xff]
    %v1672 = vld [vmem:[%s4 + $0x480] sm:$0xff]
    %v1673 = vld [vmem:[%s4 + $0x488] sm:$0xff]
    %v1674 = vld [vmem:[%s4 + $0x490] sm:$0xff]
    %v1675 = vld [vmem:[%s4 + $0x498] sm:$0xff]
    %v1676 = vld [vmem:[%s4 + $0x4a0] sm:$0xff]
    %v1677 = vld [vmem:[%s4 + $0x4a8] sm:$0xff]
    %v1678 = vld [vmem:[%s4 + $0x4b0] sm:$0xff]
    %v1679 = vld [vmem:[%s4 + $0x4b8] sm:$0xff]
    %v1680 = vld [vmem:[%s4 + $0x4c0] sm:$0xff]
    %v1681 = vld [vmem:[%s4 + $0x4c8] sm:$0xff]
    %v1682 = vld [vmem:[%s4 + $0x4d0] sm:$0xff]
    %v1683 = vld [vmem:[%s4 + $0x4d8] sm:$0xff]
    %v1684 = vld [vmem:[%s4 + $0x4e0] sm:$0xff]
    %v1685 = vld [vmem:[%s4 + $0x4e8] sm:$0xff]
    %v1686 = vld [vmem:[%s4 + $0x4f0] sm:$0xff]
    %v1687 = vld [vmem:[%s4 + $0x4f8] sm:$0xff]
    %v1688 = vld [vmem:[%s4 + $0x500] sm:$0xff]
    %v1689 = vld [vmem:[%s4 + $0x508] sm:$0xff]
    %v1690 = vld [vmem:[%s4 + $0x510] sm:$0xff]
    %v1691 = vld [vmem:[%s4 + $0x518] sm:$0xff]
    %v1692 = vld [vmem:[%s4 + $0x520] sm:$0xff]
    %v1693 = vld [vmem:[%s4 + $0x528] sm:$0xff]
    %v1694 = vld [vmem:[%s4 + $0x530] sm:$0xff]
    %v1695 = vld [vmem:[%s4 + $0x538] sm:$0xff]
    %v1696 = vld [vmem:[%s4 + $0x540] sm:$0xff]
    %v1697 = vld [vmem:[%s4 + $0x548] sm:$0xff]
    %v1698 = vld [vmem:[%s4 + $0x550] sm:$0xff]
    %v1699 = vld [vmem:[%s4 + $0x558] sm:$0xff]
    %v1700 = vld [vmem:[%s4 + $0x560] sm:$0xff]
    %v1701 = vld [vmem:[%s4 + $0x568] sm:$0xff]
    %v1702 = vld [vmem:[%s4 + $0x570] sm:$0xff]
    %v1703 = vld [vmem:[%s4 + $0x578] sm:$0xff]
    %v1704 = vld [vmem:[%s4 + $0x580] sm:$0xff]
    %v1705 = vld [vmem:[%s4 + $0x588] sm:$0xff]
    %v1706 = vld [vmem:[%s4 + $0x590] sm:$0xff]
    %v1707 = vld [vmem:[%s4 + $0x598] sm:$0xff]
    %v1708 = vld [vmem:[%s4 + $0x5a0] sm:$0xff]
    %v1709 = vld [vmem:[%s4 + $0x5a8] sm:$0xff]
    %v1710 = vld [vmem:[%s4 + $0x5b0] sm:$0xff]
    %v1711 = vld [vmem:[%s4 + $0x5b8] sm:$0xff]
    %v1712 = vld [vmem:[%s4 + $0x5c0] sm:$0xff]
    %v1713 = vld [vmem:[%s4 + $0x5c8] sm:$0xff]
    %v1714 = vld [vmem:[%s4 + $0x5d0] sm:$0xff]
    %v1715 = vld [vmem:[%s4 + $0x5d8] sm:$0xff]
    %v1716 = vld [vmem:[%s4 + $0x5e0] sm:$0xff]
    %v1717 = vld [vmem:[%s4 + $0x5e8] sm:$0xff]
    %v1718 = vld [vmem:[%s4 + $0x5f0] sm:$0xff]
    %v1719 = vld [vmem:[%s4 + $0x5f8] sm:$0xff]
    %v1720 = vld [vmem:[%s4 + $0x600] sm:$0xff]
    %v1721 = vld [vmem:[%s4 + $0x608] sm:$0xff]
    %v1722 = vld [vmem:[%s4 + $0x610] sm:$0xff]
    %v1723 = vld [vmem:[%s4 + $0x618] sm:$0xff]
    %v1724 = vld [vmem:[%s4 + $0x620] sm:$0xff]
    %v1725 = vld [vmem:[%s4 + $0x628] sm:$0xff]
    %v1726 = vld [vmem:[%s4 + $0x630] sm:$0xff]
    %v1727 = vld [vmem:[%s4 + $0x638] sm:$0xff]
    %v1728 = vld [vmem:[%s4 + $0x640] sm:$0xff]
    %v1729 = vld [vmem:[%s4 + $0x648] sm:$0xff]
    %v1730 = vld [vmem:[%s4 + $0x650] sm:$0xff]
    %v1731 = vld [vmem:[%s4 + $0x658] sm:$0xff]
    %v1732 = vld [vmem:[%s4 + $0x660] sm:$0xff]
    %v1733 = vld [vmem:[%s4 + $0x668] sm:$0xff]
    %v1734 = vld [vmem:[%s4 + $0x670] sm:$0xff]
    %v1735 = vld [vmem:[%s4 + $0x678] sm:$0xff]
    %v1736 = vld [vmem:[%s4 + $0x680] sm:$0xff]
    %v1737 = vld [vmem:[%s4 + $0x688] sm:$0xff]
    %v1738 = vld [vmem:[%s4 + $0x690] sm:$0xff]
    %v1739 = vld [vmem:[%s4 + $0x698] sm:$0xff]
    %v1740 = vld [vmem:[%s4 + $0x6a0] sm:$0xff]
    %v1741 = vld [vmem:[%s4 + $0x6a8] sm:$0xff]
    %v1742 = vld [vmem:[%s4 + $0x6b0] sm:$0xff]
    %v1743 = vld [vmem:[%s4 + $0x6b8] sm:$0xff]
    %v1744 = vld [vmem:[%s4 + $0x6c0] sm:$0xff]
    %v1745 = vld [vmem:[%s4 + $0x6c8] sm:$0xff]
    %v1746 = vld [vmem:[%s4 + $0x6d0] sm:$0xff]
    %v1747 = vld [vmem:[%s4 + $0x6d8] sm:$0xff]
    %v1748 = vld [vmem:[%s4 + $0x6e0] sm:$0xff]
    %v1749 = vld [vmem:[%s4 + $0x6e8] sm:$0xff]
    %v1750 = vld [vmem:[%s4 + $0x6f0] sm:$0xff]
    %v1751 = vld [vmem:[%s4 + $0x6f8] sm:$0xff]
    %v1752 = vld [vmem:[%s4 + $0x700] sm:$0xff]
    %v1753 = vld [vmem:[%s4 + $0x708] sm:$0xff]
    %v1754 = vld [vmem:[%s4 + $0x710] sm:$0xff]
    %v1755 = vld [vmem:[%s4 + $0x718] sm:$0xff]
    %v1756 = vld [vmem:[%s4 + $0x720] sm:$0xff]
    %v1757 = vld [vmem:[%s4 + $0x728] sm:$0xff]
    %v1758 = vld [vmem:[%s4 + $0x730] sm:$0xff]
    %v1759 = vld [vmem:[%s4 + $0x738] sm:$0xff]
    %v1760 = vld [vmem:[%s4 + $0x740] sm:$0xff]
    %v1761 = vld [vmem:[%s4 + $0x748] sm:$0xff]
    %v1762 = vld [vmem:[%s4 + $0x750] sm:$0xff]
    %v1763 = vld [vmem:[%s4 + $0x758] sm:$0xff]
    %v1764 = vld [vmem:[%s4 + $0x760] sm:$0xff]
    %v1765 = vld [vmem:[%s4 + $0x768] sm:$0xff]
    %v1766 = vld [vmem:[%s4 + $0x770] sm:$0xff]
    %v1767 = vld [vmem:[%s4 + $0x778] sm:$0xff]
    %v1768 = vld [vmem:[%s4 + $0x780] sm:$0xff]
    %v1769 = vld [vmem:[%s4 + $0x788] sm:$0xff]
    %v1770 = vld [vmem:[%s4 + $0x790] sm:$0xff]
    %v1771 = vld [vmem:[%s4 + $0x798] sm:$0xff]
    %v1772 = vld [vmem:[%s4 + $0x7a0] sm:$0xff]
    %v1773 = vld [vmem:[%s4 + $0x7a8] sm:$0xff]
    %v1774 = vld [vmem:[%s4 + $0x7b0] sm:$0xff]
    %v1775 = vld [vmem:[%s4 + $0x7b8] sm:$0xff]
    %v1776 = vld [vmem:[%s4 + $0x7c0] sm:$0xff]
    %v1777 = vld [vmem:[%s4 + $0x7c8] sm:$0xff]
    %v1778 = vld [vmem:[%s4 + $0x7d0] sm:$0xff]
    %v1779 = vld [vmem:[%s4 + $0x7d8] sm:$0xff]
    %v1780 = vld [vmem:[%s4 + $0x7e0] sm:$0xff]
    %v1781 = vld [vmem:[%s4 + $0x7e8] sm:$0xff]
    %v1782 = vld [vmem:[%s4 + $0x7f0] sm:$0xff]
    %v1783 = vld [vmem:[%s4 + $0x7f8] sm:$0xff]
    %v1784 = vld [vmem:[%s5] sm:$0xff]
    %v1786 = vlaneseq
    %v1787 = vshrl.u32 %v1786, 7
    %v1788 = vsub.s32 0, %v1787
    %v1789 = vrot.slane %v1784, %v1788
    %v1790 = vlaneseq
    %v1791 = vshrl.u32 %v1790, 7
    %v1792 = vsub.s32 1, %v1791
    %v1793 = vrot.slane %v1784, %v1792
    %v1794 = vlaneseq
    %v1795 = vshrl.u32 %v1794, 7
    %v1796 = vsub.s32 2, %v1795
    %v1797 = vrot.slane %v1784, %v1796
    %v1798 = vlaneseq
    %v1799 = vshrl.u32 %v1798, 7
    %v1800 = vsub.s32 3, %v1799
    %v1801 = vrot.slane %v1784, %v1800
    %v1802 = vlaneseq
    %v1803 = vshrl.u32 %v1802, 7
    %v1804 = vsub.s32 4, %v1803
    %v1805 = vrot.slane %v1784, %v1804
    %v1806 = vlaneseq
    %v1807 = vshrl.u32 %v1806, 7
    %v1808 = vsub.s32 5, %v1807
    %v1809 = vrot.slane %v1784, %v1808
    %v1810 = vlaneseq
    %v1811 = vshrl.u32 %v1810, 7
    %v1812 = vsub.s32 6, %v1811
    %v1813 = vrot.slane %v1784, %v1812
    %v1814 = vlaneseq
    %v1815 = vshrl.u32 %v1814, 7
    %v1816 = vsub.s32 7, %v1815
    %v1817 = vrot.slane %v1784, %v1816
    %v2082 = vunpack.c.l.b16 %v1528
    %v2083 = vunpack.c.h.b16 %v1528
    %v2084 = vunpack.c.l.b16 %v1529
    %v2085 = vunpack.c.h.b16 %v1529
    %v2086 = vunpack.c.l.b16 %v1530
    %v2087 = vunpack.c.h.b16 %v1530
    %v2088 = vunpack.c.l.b16 %v1531
    %v2089 = vunpack.c.h.b16 %v1531
    %v2090 = vunpack.c.l.b16 %v1532
    %v2091 = vunpack.c.h.b16 %v1532
    %v2092 = vunpack.c.l.b16 %v1533
    %v2093 = vunpack.c.h.b16 %v1533
    %v2094 = vunpack.c.l.b16 %v1534
    %v2095 = vunpack.c.h.b16 %v1534
    %v2096 = vunpack.c.l.b16 %v1535
    %v2097 = vunpack.c.h.b16 %v1535
    %v2098 = vunpack.c.l.b16 %v1536
    %v2099 = vunpack.c.h.b16 %v1536
    %v2100 = vunpack.c.l.b16 %v1537
    %v2101 = vunpack.c.h.b16 %v1537
    %v2102 = vunpack.c.l.b16 %v1538
    %v2103 = vunpack.c.h.b16 %v1538
    %v2104 = vunpack.c.l.b16 %v1539
    %v2105 = vunpack.c.h.b16 %v1539
    %v2106 = vunpack.c.l.b16 %v1540
    %v2107 = vunpack.c.h.b16 %v1540
    %v2108 = vunpack.c.l.b16 %v1541
    %v2109 = vunpack.c.h.b16 %v1541
    %v2110 = vunpack.c.l.b16 %v1542
    %v2111 = vunpack.c.h.b16 %v1542
    %v2112 = vunpack.c.l.b16 %v1543
    %v2113 = vunpack.c.h.b16 %v1543
    %v2114 = vunpack.c.l.b16 %v1544
    %v2115 = vunpack.c.h.b16 %v1544
    %v2116 = vunpack.c.l.b16 %v1545
    %v2117 = vunpack.c.h.b16 %v1545
    %v2118 = vunpack.c.l.b16 %v1546
    %v2119 = vunpack.c.h.b16 %v1546
    %v2120 = vunpack.c.l.b16 %v1547
    %v2121 = vunpack.c.h.b16 %v1547
    %v2122 = vunpack.c.l.b16 %v1548
    %v2123 = vunpack.c.h.b16 %v1548
    %v2124 = vunpack.c.l.b16 %v1549
    %v2125 = vunpack.c.h.b16 %v1549
    %v2126 = vunpack.c.l.b16 %v1550
    %v2127 = vunpack.c.h.b16 %v1550
    %v2128 = vunpack.c.l.b16 %v1551
    %v2129 = vunpack.c.h.b16 %v1551
    %v2130 = vunpack.c.l.b16 %v1552
    %v2131 = vunpack.c.h.b16 %v1552
    %v2132 = vunpack.c.l.b16 %v1553
    %v2133 = vunpack.c.h.b16 %v1553
    %v2134 = vunpack.c.l.b16 %v1554
    %v2135 = vunpack.c.h.b16 %v1554
    %v2136 = vunpack.c.l.b16 %v1555
    %v2137 = vunpack.c.h.b16 %v1555
    %v2138 = vunpack.c.l.b16 %v1556
    %v2139 = vunpack.c.h.b16 %v1556
    %v2140 = vunpack.c.l.b16 %v1557
    %v2141 = vunpack.c.h.b16 %v1557
    %v2142 = vunpack.c.l.b16 %v1558
    %v2143 = vunpack.c.h.b16 %v1558
    %v2144 = vunpack.c.l.b16 %v1559
    %v2145 = vunpack.c.h.b16 %v1559
    %v2146 = vunpack.c.l.b16 %v1560
    %v2147 = vunpack.c.h.b16 %v1560
    %v2148 = vunpack.c.l.b16 %v1561
    %v2149 = vunpack.c.h.b16 %v1561
    %v2150 = vunpack.c.l.b16 %v1562
    %v2151 = vunpack.c.h.b16 %v1562
    %v2152 = vunpack.c.l.b16 %v1563
    %v2153 = vunpack.c.h.b16 %v1563
    %v2154 = vunpack.c.l.b16 %v1564
    %v2155 = vunpack.c.h.b16 %v1564
    %v2156 = vunpack.c.l.b16 %v1565
    %v2157 = vunpack.c.h.b16 %v1565
    %v2158 = vunpack.c.l.b16 %v1566
    %v2159 = vunpack.c.h.b16 %v1566
    %v2160 = vunpack.c.l.b16 %v1567
    %v2161 = vunpack.c.h.b16 %v1567
    %v2162 = vunpack.c.l.b16 %v1568
    %v2163 = vunpack.c.h.b16 %v1568
    %v2164 = vunpack.c.l.b16 %v1569
    %v2165 = vunpack.c.h.b16 %v1569
    %v2166 = vunpack.c.l.b16 %v1570
    %v2167 = vunpack.c.h.b16 %v1570
    %v2168 = vunpack.c.l.b16 %v1571
    %v2169 = vunpack.c.h.b16 %v1571
    %v2170 = vunpack.c.l.b16 %v1572
    %v2171 = vunpack.c.h.b16 %v1572
    %v2172 = vunpack.c.l.b16 %v1573
    %v2173 = vunpack.c.h.b16 %v1573
    %v2174 = vunpack.c.l.b16 %v1574
    %v2175 = vunpack.c.h.b16 %v1574
    %v2176 = vunpack.c.l.b16 %v1575
    %v2177 = vunpack.c.h.b16 %v1575
    %v2178 = vunpack.c.l.b16 %v1576
    %v2179 = vunpack.c.h.b16 %v1576
    %v2180 = vunpack.c.l.b16 %v1577
    %v2181 = vunpack.c.h.b16 %v1577
    %v2182 = vunpack.c.l.b16 %v1578
    %v2183 = vunpack.c.h.b16 %v1578
    %v2184 = vunpack.c.l.b16 %v1579
    %v2185 = vunpack.c.h.b16 %v1579
    %v2186 = vunpack.c.l.b16 %v1580
    %v2187 = vunpack.c.h.b16 %v1580
    %v2188 = vunpack.c.l.b16 %v1581
    %v2189 = vunpack.c.h.b16 %v1581
    %v2190 = vunpack.c.l.b16 %v1582
    %v2191 = vunpack.c.h.b16 %v1582
    %v2192 = vunpack.c.l.b16 %v1583
    %v2193 = vunpack.c.h.b16 %v1583
    %v2194 = vunpack.c.l.b16 %v1584
    %v2195 = vunpack.c.h.b16 %v1584
    %v2196 = vunpack.c.l.b16 %v1585
    %v2197 = vunpack.c.h.b16 %v1585
    %v2198 = vunpack.c.l.b16 %v1586
    %v2199 = vunpack.c.h.b16 %v1586
    %v2200 = vunpack.c.l.b16 %v1587
    %v2201 = vunpack.c.h.b16 %v1587
    %v2202 = vunpack.c.l.b16 %v1588
    %v2203 = vunpack.c.h.b16 %v1588
    %v2204 = vunpack.c.l.b16 %v1589
    %v2205 = vunpack.c.h.b16 %v1589
    %v2206 = vunpack.c.l.b16 %v1590
    %v2207 = vunpack.c.h.b16 %v1590
    %v2208 = vunpack.c.l.b16 %v1591
    %v2209 = vunpack.c.h.b16 %v1591
    %v2210 = vunpack.c.l.b16 %v1592
    %v2211 = vunpack.c.h.b16 %v1592
    %v2212 = vunpack.c.l.b16 %v1593
    %v2213 = vunpack.c.h.b16 %v1593
    %v2214 = vunpack.c.l.b16 %v1594
    %v2215 = vunpack.c.h.b16 %v1594
    %v2216 = vunpack.c.l.b16 %v1595
    %v2217 = vunpack.c.h.b16 %v1595
    %v2218 = vunpack.c.l.b16 %v1596
    %v2219 = vunpack.c.h.b16 %v1596
    %v2220 = vunpack.c.l.b16 %v1597
    %v2221 = vunpack.c.h.b16 %v1597
    %v2222 = vunpack.c.l.b16 %v1598
    %v2223 = vunpack.c.h.b16 %v1598
    %v2224 = vunpack.c.l.b16 %v1599
    %v2225 = vunpack.c.h.b16 %v1599
    %v2226 = vunpack.c.l.b16 %v1600
    %v2227 = vunpack.c.h.b16 %v1600
    %v2228 = vunpack.c.l.b16 %v1601
    %v2229 = vunpack.c.h.b16 %v1601
    %v2230 = vunpack.c.l.b16 %v1602
    %v2231 = vunpack.c.h.b16 %v1602
    %v2232 = vunpack.c.l.b16 %v1603
    %v2233 = vunpack.c.h.b16 %v1603
    %v2234 = vunpack.c.l.b16 %v1604
    %v2235 = vunpack.c.h.b16 %v1604
    %v2236 = vunpack.c.l.b16 %v1605
    %v2237 = vunpack.c.h.b16 %v1605
    %v2238 = vunpack.c.l.b16 %v1606
    %v2239 = vunpack.c.h.b16 %v1606
    %v2240 = vunpack.c.l.b16 %v1607
    %v2241 = vunpack.c.h.b16 %v1607
    %v2242 = vunpack.c.l.b16 %v1608
    %v2243 = vunpack.c.h.b16 %v1608
    %v2244 = vunpack.c.l.b16 %v1609
    %v2245 = vunpack.c.h.b16 %v1609
    %v2246 = vunpack.c.l.b16 %v1610
    %v2247 = vunpack.c.h.b16 %v1610
    %v2248 = vunpack.c.l.b16 %v1611
    %v2249 = vunpack.c.h.b16 %v1611
    %v2250 = vunpack.c.l.b16 %v1612
    %v2251 = vunpack.c.h.b16 %v1612
    %v2252 = vunpack.c.l.b16 %v1613
    %v2253 = vunpack.c.h.b16 %v1613
    %v2254 = vunpack.c.l.b16 %v1614
    %v2255 = vunpack.c.h.b16 %v1614
    %v2256 = vunpack.c.l.b16 %v1615
    %v2257 = vunpack.c.h.b16 %v1615
    %v2258 = vunpack.c.l.b16 %v1616
    %v2259 = vunpack.c.h.b16 %v1616
    %v2260 = vunpack.c.l.b16 %v1617
    %v2261 = vunpack.c.h.b16 %v1617
    %v2262 = vunpack.c.l.b16 %v1618
    %v2263 = vunpack.c.h.b16 %v1618
    %v2264 = vunpack.c.l.b16 %v1619
    %v2265 = vunpack.c.h.b16 %v1619
    %v2266 = vunpack.c.l.b16 %v1620
    %v2267 = vunpack.c.h.b16 %v1620
    %v2268 = vunpack.c.l.b16 %v1621
    %v2269 = vunpack.c.h.b16 %v1621
    %v2270 = vunpack.c.l.b16 %v1622
    %v2271 = vunpack.c.h.b16 %v1622
    %v2272 = vunpack.c.l.b16 %v1623
    %v2273 = vunpack.c.h.b16 %v1623
    %v2274 = vunpack.c.l.b16 %v1624
    %v2275 = vunpack.c.h.b16 %v1624
    %v2276 = vunpack.c.l.b16 %v1625
    %v2277 = vunpack.c.h.b16 %v1625
    %v2278 = vunpack.c.l.b16 %v1626
    %v2279 = vunpack.c.h.b16 %v1626
    %v2280 = vunpack.c.l.b16 %v1627
    %v2281 = vunpack.c.h.b16 %v1627
    %v2282 = vunpack.c.l.b16 %v1628
    %v2283 = vunpack.c.h.b16 %v1628
    %v2284 = vunpack.c.l.b16 %v1629
    %v2285 = vunpack.c.h.b16 %v1629
    %v2286 = vunpack.c.l.b16 %v1630
    %v2287 = vunpack.c.h.b16 %v1630
    %v2288 = vunpack.c.l.b16 %v1631
    %v2289 = vunpack.c.h.b16 %v1631
    %v2290 = vunpack.c.l.b16 %v1632
    %v2291 = vunpack.c.h.b16 %v1632
    %v2292 = vunpack.c.l.b16 %v1633
    %v2293 = vunpack.c.h.b16 %v1633
    %v2294 = vunpack.c.l.b16 %v1634
    %v2295 = vunpack.c.h.b16 %v1634
    %v2296 = vunpack.c.l.b16 %v1635
    %v2297 = vunpack.c.h.b16 %v1635
    %v2298 = vunpack.c.l.b16 %v1636
    %v2299 = vunpack.c.h.b16 %v1636
    %v2300 = vunpack.c.l.b16 %v1637
    %v2301 = vunpack.c.h.b16 %v1637
    %v2302 = vunpack.c.l.b16 %v1638
    %v2303 = vunpack.c.h.b16 %v1638
    %v2304 = vunpack.c.l.b16 %v1639
    %v2305 = vunpack.c.h.b16 %v1639
    %v2306 = vunpack.c.l.b16 %v1640
    %v2307 = vunpack.c.h.b16 %v1640
    %v2308 = vunpack.c.l.b16 %v1641
    %v2309 = vunpack.c.h.b16 %v1641
    %v2310 = vunpack.c.l.b16 %v1642
    %v2311 = vunpack.c.h.b16 %v1642
    %v2312 = vunpack.c.l.b16 %v1643
    %v2313 = vunpack.c.h.b16 %v1643
    %v2314 = vunpack.c.l.b16 %v1644
    %v2315 = vunpack.c.h.b16 %v1644
    %v2316 = vunpack.c.l.b16 %v1645
    %v2317 = vunpack.c.h.b16 %v1645
    %v2318 = vunpack.c.l.b16 %v1646
    %v2319 = vunpack.c.h.b16 %v1646
    %v2320 = vunpack.c.l.b16 %v1647
    %v2321 = vunpack.c.h.b16 %v1647
    %v2322 = vunpack.c.l.b16 %v1648
    %v2323 = vunpack.c.h.b16 %v1648
    %v2324 = vunpack.c.l.b16 %v1649
    %v2325 = vunpack.c.h.b16 %v1649
    %v2326 = vunpack.c.l.b16 %v1650
    %v2327 = vunpack.c.h.b16 %v1650
    %v2328 = vunpack.c.l.b16 %v1651
    %v2329 = vunpack.c.h.b16 %v1651
    %v2330 = vunpack.c.l.b16 %v1652
    %v2331 = vunpack.c.h.b16 %v1652
    %v2332 = vunpack.c.l.b16 %v1653
    %v2333 = vunpack.c.h.b16 %v1653
    %v2334 = vunpack.c.l.b16 %v1654
    %v2335 = vunpack.c.h.b16 %v1654
    %v2336 = vunpack.c.l.b16 %v1655
    %v2337 = vunpack.c.h.b16 %v1655
    %v2338 = vunpack.c.l.b16 %v1656
    %v2339 = vunpack.c.h.b16 %v1656
    %v2340 = vunpack.c.l.b16 %v1657
    %v2341 = vunpack.c.h.b16 %v1657
    %v2342 = vunpack.c.l.b16 %v1658
    %v2343 = vunpack.c.h.b16 %v1658
    %v2344 = vunpack.c.l.b16 %v1659
    %v2345 = vunpack.c.h.b16 %v1659
    %v2346 = vunpack.c.l.b16 %v1660
    %v2347 = vunpack.c.h.b16 %v1660
    %v2348 = vunpack.c.l.b16 %v1661
    %v2349 = vunpack.c.h.b16 %v1661
    %v2350 = vunpack.c.l.b16 %v1662
    %v2351 = vunpack.c.h.b16 %v1662
    %v2352 = vunpack.c.l.b16 %v1663
    %v2353 = vunpack.c.h.b16 %v1663
    %v2354 = vunpack.c.l.b16 %v1664
    %v2355 = vunpack.c.h.b16 %v1664
    %v2356 = vunpack.c.l.b16 %v1665
    %v2357 = vunpack.c.h.b16 %v1665
    %v2358 = vunpack.c.l.b16 %v1666
    %v2359 = vunpack.c.h.b16 %v1666
    %v2360 = vunpack.c.l.b16 %v1667
    %v2361 = vunpack.c.h.b16 %v1667
    %v2362 = vunpack.c.l.b16 %v1668
    %v2363 = vunpack.c.h.b16 %v1668
    %v2364 = vunpack.c.l.b16 %v1669
    %v2365 = vunpack.c.h.b16 %v1669
    %v2366 = vunpack.c.l.b16 %v1670
    %v2367 = vunpack.c.h.b16 %v1670
    %v2368 = vunpack.c.l.b16 %v1671
    %v2369 = vunpack.c.h.b16 %v1671
    %v2370 = vunpack.c.l.b16 %v1672
    %v2371 = vunpack.c.h.b16 %v1672
    %v2372 = vunpack.c.l.b16 %v1673
    %v2373 = vunpack.c.h.b16 %v1673
    %v2374 = vunpack.c.l.b16 %v1674
    %v2375 = vunpack.c.h.b16 %v1674
    %v2376 = vunpack.c.l.b16 %v1675
    %v2377 = vunpack.c.h.b16 %v1675
    %v2378 = vunpack.c.l.b16 %v1676
    %v2379 = vunpack.c.h.b16 %v1676
    %v2380 = vunpack.c.l.b16 %v1677
    %v2381 = vunpack.c.h.b16 %v1677
    %v2382 = vunpack.c.l.b16 %v1678
    %v2383 = vunpack.c.h.b16 %v1678
    %v2384 = vunpack.c.l.b16 %v1679
    %v2385 = vunpack.c.h.b16 %v1679
    %v2386 = vunpack.c.l.b16 %v1680
    %v2387 = vunpack.c.h.b16 %v1680
    %v2388 = vunpack.c.l.b16 %v1681
    %v2389 = vunpack.c.h.b16 %v1681
    %v2390 = vunpack.c.l.b16 %v1682
    %v2391 = vunpack.c.h.b16 %v1682
    %v2392 = vunpack.c.l.b16 %v1683
    %v2393 = vunpack.c.h.b16 %v1683
    %v2394 = vunpack.c.l.b16 %v1684
    %v2395 = vunpack.c.h.b16 %v1684
    %v2396 = vunpack.c.l.b16 %v1685
    %v2397 = vunpack.c.h.b16 %v1685
    %v2398 = vunpack.c.l.b16 %v1686
    %v2399 = vunpack.c.h.b16 %v1686
    %v2400 = vunpack.c.l.b16 %v1687
    %v2401 = vunpack.c.h.b16 %v1687
    %v2402 = vunpack.c.l.b16 %v1688
    %v2403 = vunpack.c.h.b16 %v1688
    %v2404 = vunpack.c.l.b16 %v1689
    %v2405 = vunpack.c.h.b16 %v1689
    %v2406 = vunpack.c.l.b16 %v1690
    %v2407 = vunpack.c.h.b16 %v1690
    %v2408 = vunpack.c.l.b16 %v1691
    %v2409 = vunpack.c.h.b16 %v1691
    %v2410 = vunpack.c.l.b16 %v1692
    %v2411 = vunpack.c.h.b16 %v1692
    %v2412 = vunpack.c.l.b16 %v1693
    %v2413 = vunpack.c.h.b16 %v1693
    %v2414 = vunpack.c.l.b16 %v1694
    %v2415 = vunpack.c.h.b16 %v1694
    %v2416 = vunpack.c.l.b16 %v1695
    %v2417 = vunpack.c.h.b16 %v1695
    %v2418 = vunpack.c.l.b16 %v1696
    %v2419 = vunpack.c.h.b16 %v1696
    %v2420 = vunpack.c.l.b16 %v1697
    %v2421 = vunpack.c.h.b16 %v1697
    %v2422 = vunpack.c.l.b16 %v1698
    %v2423 = vunpack.c.h.b16 %v1698
    %v2424 = vunpack.c.l.b16 %v1699
    %v2425 = vunpack.c.h.b16 %v1699
    %v2426 = vunpack.c.l.b16 %v1700
    %v2427 = vunpack.c.h.b16 %v1700
    %v2428 = vunpack.c.l.b16 %v1701
    %v2429 = vunpack.c.h.b16 %v1701
    %v2430 = vunpack.c.l.b16 %v1702
    %v2431 = vunpack.c.h.b16 %v1702
    %v2432 = vunpack.c.l.b16 %v1703
    %v2433 = vunpack.c.h.b16 %v1703
    %v2434 = vunpack.c.l.b16 %v1704
    %v2435 = vunpack.c.h.b16 %v1704
    %v2436 = vunpack.c.l.b16 %v1705
    %v2437 = vunpack.c.h.b16 %v1705
    %v2438 = vunpack.c.l.b16 %v1706
    %v2439 = vunpack.c.h.b16 %v1706
    %v2440 = vunpack.c.l.b16 %v1707
    %v2441 = vunpack.c.h.b16 %v1707
    %v2442 = vunpack.c.l.b16 %v1708
    %v2443 = vunpack.c.h.b16 %v1708
    %v2444 = vunpack.c.l.b16 %v1709
    %v2445 = vunpack.c.h.b16 %v1709
    %v2446 = vunpack.c.l.b16 %v1710
    %v2447 = vunpack.c.h.b16 %v1710
    %v2448 = vunpack.c.l.b16 %v1711
    %v2449 = vunpack.c.h.b16 %v1711
    %v2450 = vunpack.c.l.b16 %v1712
    %v2451 = vunpack.c.h.b16 %v1712
    %v2452 = vunpack.c.l.b16 %v1713
    %v2453 = vunpack.c.h.b16 %v1713
    %v2454 = vunpack.c.l.b16 %v1714
    %v2455 = vunpack.c.h.b16 %v1714
    %v2456 = vunpack.c.l.b16 %v1715
    %v2457 = vunpack.c.h.b16 %v1715
    %v2458 = vunpack.c.l.b16 %v1716
    %v2459 = vunpack.c.h.b16 %v1716
    %v2460 = vunpack.c.l.b16 %v1717
    %v2461 = vunpack.c.h.b16 %v1717
    %v2462 = vunpack.c.l.b16 %v1718
    %v2463 = vunpack.c.h.b16 %v1718
    %v2464 = vunpack.c.l.b16 %v1719
    %v2465 = vunpack.c.h.b16 %v1719
    %v2466 = vunpack.c.l.b16 %v1720
    %v2467 = vunpack.c.h.b16 %v1720
    %v2468 = vunpack.c.l.b16 %v1721
    %v2469 = vunpack.c.h.b16 %v1721
    %v2470 = vunpack.c.l.b16 %v1722
    %v2471 = vunpack.c.h.b16 %v1722
    %v2472 = vunpack.c.l.b16 %v1723
    %v2473 = vunpack.c.h.b16 %v1723
    %v2474 = vunpack.c.l.b16 %v1724
    %v2475 = vunpack.c.h.b16 %v1724
    %v2476 = vunpack.c.l.b16 %v1725
    %v2477 = vunpack.c.h.b16 %v1725
    %v2478 = vunpack.c.l.b16 %v1726
    %v2479 = vunpack.c.h.b16 %v1726
    %v2480 = vunpack.c.l.b16 %v1727
    %v2481 = vunpack.c.h.b16 %v1727
    %v2482 = vunpack.c.l.b16 %v1728
    %v2483 = vunpack.c.h.b16 %v1728
    %v2484 = vunpack.c.l.b16 %v1729
    %v2485 = vunpack.c.h.b16 %v1729
    %v2486 = vunpack.c.l.b16 %v1730
    %v2487 = vunpack.c.h.b16 %v1730
    %v2488 = vunpack.c.l.b16 %v1731
    %v2489 = vunpack.c.h.b16 %v1731
    %v2490 = vunpack.c.l.b16 %v1732
    %v2491 = vunpack.c.h.b16 %v1732
    %v2492 = vunpack.c.l.b16 %v1733
    %v2493 = vunpack.c.h.b16 %v1733
    %v2494 = vunpack.c.l.b16 %v1734
    %v2495 = vunpack.c.h.b16 %v1734
    %v2496 = vunpack.c.l.b16 %v1735
    %v2497 = vunpack.c.h.b16 %v1735
    %v2498 = vunpack.c.l.b16 %v1736
    %v2499 = vunpack.c.h.b16 %v1736
    %v2500 = vunpack.c.l.b16 %v1737
    %v2501 = vunpack.c.h.b16 %v1737
    %v2502 = vunpack.c.l.b16 %v1738
    %v2503 = vunpack.c.h.b16 %v1738
    %v2504 = vunpack.c.l.b16 %v1739
    %v2505 = vunpack.c.h.b16 %v1739
    %v2506 = vunpack.c.l.b16 %v1740
    %v2507 = vunpack.c.h.b16 %v1740
    %v2508 = vunpack.c.l.b16 %v1741
    %v2509 = vunpack.c.h.b16 %v1741
    %v2510 = vunpack.c.l.b16 %v1742
    %v2511 = vunpack.c.h.b16 %v1742
    %v2512 = vunpack.c.l.b16 %v1743
    %v2513 = vunpack.c.h.b16 %v1743
    %v2514 = vunpack.c.l.b16 %v1744
    %v2515 = vunpack.c.h.b16 %v1744
    %v2516 = vunpack.c.l.b16 %v1745
    %v2517 = vunpack.c.h.b16 %v1745
    %v2518 = vunpack.c.l.b16 %v1746
    %v2519 = vunpack.c.h.b16 %v1746
    %v2520 = vunpack.c.l.b16 %v1747
    %v2521 = vunpack.c.h.b16 %v1747
    %v2522 = vunpack.c.l.b16 %v1748
    %v2523 = vunpack.c.h.b16 %v1748
    %v2524 = vunpack.c.l.b16 %v1749
    %v2525 = vunpack.c.h.b16 %v1749
    %v2526 = vunpack.c.l.b16 %v1750
    %v2527 = vunpack.c.h.b16 %v1750
    %v2528 = vunpack.c.l.b16 %v1751
    %v2529 = vunpack.c.h.b16 %v1751
    %v2530 = vunpack.c.l.b16 %v1752
    %v2531 = vunpack.c.h.b16 %v1752
    %v2532 = vunpack.c.l.b16 %v1753
    %v2533 = vunpack.c.h.b16 %v1753
    %v2534 = vunpack.c.l.b16 %v1754
    %v2535 = vunpack.c.h.b16 %v1754
    %v2536 = vunpack.c.l.b16 %v1755
    %v2537 = vunpack.c.h.b16 %v1755
    %v2538 = vunpack.c.l.b16 %v1756
    %v2539 = vunpack.c.h.b16 %v1756
    %v2540 = vunpack.c.l.b16 %v1757
    %v2541 = vunpack.c.h.b16 %v1757
    %v2542 = vunpack.c.l.b16 %v1758
    %v2543 = vunpack.c.h.b16 %v1758
    %v2544 = vunpack.c.l.b16 %v1759
    %v2545 = vunpack.c.h.b16 %v1759
    %v2546 = vunpack.c.l.b16 %v1760
    %v2547 = vunpack.c.h.b16 %v1760
    %v2548 = vunpack.c.l.b16 %v1761
    %v2549 = vunpack.c.h.b16 %v1761
    %v2550 = vunpack.c.l.b16 %v1762
    %v2551 = vunpack.c.h.b16 %v1762
    %v2552 = vunpack.c.l.b16 %v1763
    %v2553 = vunpack.c.h.b16 %v1763
    %v2554 = vunpack.c.l.b16 %v1764
    %v2555 = vunpack.c.h.b16 %v1764
    %v2556 = vunpack.c.l.b16 %v1765
    %v2557 = vunpack.c.h.b16 %v1765
    %v2558 = vunpack.c.l.b16 %v1766
    %v2559 = vunpack.c.h.b16 %v1766
    %v2560 = vunpack.c.l.b16 %v1767
    %v2561 = vunpack.c.h.b16 %v1767
    %v2562 = vunpack.c.l.b16 %v1768
    %v2563 = vunpack.c.h.b16 %v1768
    %v2564 = vunpack.c.l.b16 %v1769
    %v2565 = vunpack.c.h.b16 %v1769
    %v2566 = vunpack.c.l.b16 %v1770
    %v2567 = vunpack.c.h.b16 %v1770
    %v2568 = vunpack.c.l.b16 %v1771
    %v2569 = vunpack.c.h.b16 %v1771
    %v2570 = vunpack.c.l.b16 %v1772
    %v2571 = vunpack.c.h.b16 %v1772
    %v2572 = vunpack.c.l.b16 %v1773
    %v2573 = vunpack.c.h.b16 %v1773
    %v2574 = vunpack.c.l.b16 %v1774
    %v2575 = vunpack.c.h.b16 %v1774
    %v2576 = vunpack.c.l.b16 %v1775
    %v2577 = vunpack.c.h.b16 %v1775
    %v2578 = vunpack.c.l.b16 %v1776
    %v2579 = vunpack.c.h.b16 %v1776
    %v2580 = vunpack.c.l.b16 %v1777
    %v2581 = vunpack.c.h.b16 %v1777
    %v2582 = vunpack.c.l.b16 %v1778
    %v2583 = vunpack.c.h.b16 %v1778
    %v2584 = vunpack.c.l.b16 %v1779
    %v2585 = vunpack.c.h.b16 %v1779
    %v2586 = vunpack.c.l.b16 %v1780
    %v2587 = vunpack.c.h.b16 %v1780
    %v2588 = vunpack.c.l.b16 %v1781
    %v2589 = vunpack.c.h.b16 %v1781
    %v2590 = vunpack.c.l.b16 %v1782
    %v2591 = vunpack.c.h.b16 %v1782
    %v2592 = vunpack.c.l.b16 %v1783
    %v2593 = vunpack.c.h.b16 %v1783
    %v2594 = vpack.c.b16 %v2090, %v2082
    %v2595 = vpack.c.b16 %v2091, %v2083
    %v2596 = vpack.c.b16 %v2092, %v2084
    %v2597 = vpack.c.b16 %v2093, %v2085
    %v2598 = vpack.c.b16 %v2094, %v2086
    %v2599 = vpack.c.b16 %v2095, %v2087
    %v2600 = vpack.c.b16 %v2096, %v2088
    %v2601 = vpack.c.b16 %v2097, %v2089
    %v2602 = vpack.c.b16 %v2106, %v2098
    %v2603 = vpack.c.b16 %v2107, %v2099
    %v2604 = vpack.c.b16 %v2108, %v2100
    %v2605 = vpack.c.b16 %v2109, %v2101
    %v2606 = vpack.c.b16 %v2110, %v2102
    %v2607 = vpack.c.b16 %v2111, %v2103
    %v2608 = vpack.c.b16 %v2112, %v2104
    %v2609 = vpack.c.b16 %v2113, %v2105
    %v2610 = vpack.c.b16 %v2122, %v2114
    %v2611 = vpack.c.b16 %v2123, %v2115
    %v2612 = vpack.c.b16 %v2124, %v2116
    %v2613 = vpack.c.b16 %v2125, %v2117
    %v2614 = vpack.c.b16 %v2126, %v2118
    %v2615 = vpack.c.b16 %v2127, %v2119
    %v2616 = vpack.c.b16 %v2128, %v2120
    %v2617 = vpack.c.b16 %v2129, %v2121
    %v2618 = vpack.c.b16 %v2138, %v2130
    %v2619 = vpack.c.b16 %v2139, %v2131
    %v2620 = vpack.c.b16 %v2140, %v2132
    %v2621 = vpack.c.b16 %v2141, %v2133
    %v2622 = vpack.c.b16 %v2142, %v2134
    %v2623 = vpack.c.b16 %v2143, %v2135
    %v2624 = vpack.c.b16 %v2144, %v2136
    %v2625 = vpack.c.b16 %v2145, %v2137
    %v2626 = vpack.c.b16 %v2154, %v2146
    %v2627 = vpack.c.b16 %v2155, %v2147
    %v2628 = vpack.c.b16 %v2156, %v2148
    %v2629 = vpack.c.b16 %v2157, %v2149
    %v2630 = vpack.c.b16 %v2158, %v2150
    %v2631 = vpack.c.b16 %v2159, %v2151
    %v2632 = vpack.c.b16 %v2160, %v2152
    %v2633 = vpack.c.b16 %v2161, %v2153
    %v2634 = vpack.c.b16 %v2170, %v2162
    %v2635 = vpack.c.b16 %v2171, %v2163
    %v2636 = vpack.c.b16 %v2172, %v2164
    %v2637 = vpack.c.b16 %v2173, %v2165
    %v2638 = vpack.c.b16 %v2174, %v2166
    %v2639 = vpack.c.b16 %v2175, %v2167
    %v2640 = vpack.c.b16 %v2176, %v2168
    %v2641 = vpack.c.b16 %v2177, %v2169
    %v2642 = vpack.c.b16 %v2186, %v2178
    %v2643 = vpack.c.b16 %v2187, %v2179
    %v2644 = vpack.c.b16 %v2188, %v2180
    %v2645 = vpack.c.b16 %v2189, %v2181
    %v2646 = vpack.c.b16 %v2190, %v2182
    %v2647 = vpack.c.b16 %v2191, %v2183
    %v2648 = vpack.c.b16 %v2192, %v2184
    %v2649 = vpack.c.b16 %v2193, %v2185
    %v2650 = vpack.c.b16 %v2202, %v2194
    %v2651 = vpack.c.b16 %v2203, %v2195
    %v2652 = vpack.c.b16 %v2204, %v2196
    %v2653 = vpack.c.b16 %v2205, %v2197
    %v2654 = vpack.c.b16 %v2206, %v2198
    %v2655 = vpack.c.b16 %v2207, %v2199
    %v2656 = vpack.c.b16 %v2208, %v2200
    %v2657 = vpack.c.b16 %v2209, %v2201
    %v2658 = vpack.c.b16 %v2218, %v2210
    %v2659 = vpack.c.b16 %v2219, %v2211
    %v2660 = vpack.c.b16 %v2220, %v2212
    %v2661 = vpack.c.b16 %v2221, %v2213
    %v2662 = vpack.c.b16 %v2222, %v2214
    %v2663 = vpack.c.b16 %v2223, %v2215
    %v2664 = vpack.c.b16 %v2224, %v2216
    %v2665 = vpack.c.b16 %v2225, %v2217
    %v2666 = vpack.c.b16 %v2234, %v2226
    %v2667 = vpack.c.b16 %v2235, %v2227
    %v2668 = vpack.c.b16 %v2236, %v2228
    %v2669 = vpack.c.b16 %v2237, %v2229
    %v2670 = vpack.c.b16 %v2238, %v2230
    %v2671 = vpack.c.b16 %v2239, %v2231
    %v2672 = vpack.c.b16 %v2240, %v2232
    %v2673 = vpack.c.b16 %v2241, %v2233
    %v2674 = vpack.c.b16 %v2250, %v2242
    %v2675 = vpack.c.b16 %v2251, %v2243
    %v2676 = vpack.c.b16 %v2252, %v2244
    %v2677 = vpack.c.b16 %v2253, %v2245
    %v2678 = vpack.c.b16 %v2254, %v2246
    %v2679 = vpack.c.b16 %v2255, %v2247
    %v2680 = vpack.c.b16 %v2256, %v2248
    %v2681 = vpack.c.b16 %v2257, %v2249
    %v2682 = vpack.c.b16 %v2266, %v2258
    %v2683 = vpack.c.b16 %v2267, %v2259
    %v2684 = vpack.c.b16 %v2268, %v2260
    %v2685 = vpack.c.b16 %v2269, %v2261
    %v2686 = vpack.c.b16 %v2270, %v2262
    %v2687 = vpack.c.b16 %v2271, %v2263
    %v2688 = vpack.c.b16 %v2272, %v2264
    %v2689 = vpack.c.b16 %v2273, %v2265
    %v2690 = vpack.c.b16 %v2282, %v2274
    %v2691 = vpack.c.b16 %v2283, %v2275
    %v2692 = vpack.c.b16 %v2284, %v2276
    %v2693 = vpack.c.b16 %v2285, %v2277
    %v2694 = vpack.c.b16 %v2286, %v2278
    %v2695 = vpack.c.b16 %v2287, %v2279
    %v2696 = vpack.c.b16 %v2288, %v2280
    %v2697 = vpack.c.b16 %v2289, %v2281
    %v2698 = vpack.c.b16 %v2298, %v2290
    %v2699 = vpack.c.b16 %v2299, %v2291
    %v2700 = vpack.c.b16 %v2300, %v2292
    %v2701 = vpack.c.b16 %v2301, %v2293
    %v2702 = vpack.c.b16 %v2302, %v2294
    %v2703 = vpack.c.b16 %v2303, %v2295
    %v2704 = vpack.c.b16 %v2304, %v2296
    %v2705 = vpack.c.b16 %v2305, %v2297
    %v2706 = vpack.c.b16 %v2314, %v2306
    %v2707 = vpack.c.b16 %v2315, %v2307
    %v2708 = vpack.c.b16 %v2316, %v2308
    %v2709 = vpack.c.b16 %v2317, %v2309
    %v2710 = vpack.c.b16 %v2318, %v2310
    %v2711 = vpack.c.b16 %v2319, %v2311
    %v2712 = vpack.c.b16 %v2320, %v2312
    %v2713 = vpack.c.b16 %v2321, %v2313
    %v2714 = vpack.c.b16 %v2330, %v2322
    %v2715 = vpack.c.b16 %v2331, %v2323
    %v2716 = vpack.c.b16 %v2332, %v2324
    %v2717 = vpack.c.b16 %v2333, %v2325
    %v2718 = vpack.c.b16 %v2334, %v2326
    %v2719 = vpack.c.b16 %v2335, %v2327
    %v2720 = vpack.c.b16 %v2336, %v2328
    %v2721 = vpack.c.b16 %v2337, %v2329
    %v2722 = vpack.c.b16 %v2346, %v2338
    %v2723 = vpack.c.b16 %v2347, %v2339
    %v2724 = vpack.c.b16 %v2348, %v2340
    %v2725 = vpack.c.b16 %v2349, %v2341
    %v2726 = vpack.c.b16 %v2350, %v2342
    %v2727 = vpack.c.b16 %v2351, %v2343
    %v2728 = vpack.c.b16 %v2352, %v2344
    %v2729 = vpack.c.b16 %v2353, %v2345
    %v2730 = vpack.c.b16 %v2362, %v2354
    %v2731 = vpack.c.b16 %v2363, %v2355
    %v2732 = vpack.c.b16 %v2364, %v2356
    %v2733 = vpack.c.b16 %v2365, %v2357
    %v2734 = vpack.c.b16 %v2366, %v2358
    %v2735 = vpack.c.b16 %v2367, %v2359
    %v2736 = vpack.c.b16 %v2368, %v2360
    %v2737 = vpack.c.b16 %v2369, %v2361
    %v2738 = vpack.c.b16 %v2378, %v2370
    %v2739 = vpack.c.b16 %v2379, %v2371
    %v2740 = vpack.c.b16 %v2380, %v2372
    %v2741 = vpack.c.b16 %v2381, %v2373
    %v2742 = vpack.c.b16 %v2382, %v2374
    %v2743 = vpack.c.b16 %v2383, %v2375
    %v2744 = vpack.c.b16 %v2384, %v2376
    %v2745 = vpack.c.b16 %v2385, %v2377
    %v2746 = vpack.c.b16 %v2394, %v2386
    %v2747 = vpack.c.b16 %v2395, %v2387
    %v2748 = vpack.c.b16 %v2396, %v2388
    %v2749 = vpack.c.b16 %v2397, %v2389
    %v2750 = vpack.c.b16 %v2398, %v2390
    %v2751 = vpack.c.b16 %v2399, %v2391
    %v2752 = vpack.c.b16 %v2400, %v2392
    %v2753 = vpack.c.b16 %v2401, %v2393
    %v2754 = vpack.c.b16 %v2410, %v2402
    %v2755 = vpack.c.b16 %v2411, %v2403
    %v2756 = vpack.c.b16 %v2412, %v2404
    %v2757 = vpack.c.b16 %v2413, %v2405
    %v2758 = vpack.c.b16 %v2414, %v2406
    %v2759 = vpack.c.b16 %v2415, %v2407
    %v2760 = vpack.c.b16 %v2416, %v2408
    %v2761 = vpack.c.b16 %v2417, %v2409
    %v2762 = vpack.c.b16 %v2426, %v2418
    %v2763 = vpack.c.b16 %v2427, %v2419
    %v2764 = vpack.c.b16 %v2428, %v2420
    %v2765 = vpack.c.b16 %v2429, %v2421
    %v2766 = vpack.c.b16 %v2430, %v2422
    %v2767 = vpack.c.b16 %v2431, %v2423
    %v2768 = vpack.c.b16 %v2432, %v2424
    %v2769 = vpack.c.b16 %v2433, %v2425
    %v2770 = vpack.c.b16 %v2442, %v2434
    %v2771 = vpack.c.b16 %v2443, %v2435
    %v2772 = vpack.c.b16 %v2444, %v2436
    %v2773 = vpack.c.b16 %v2445, %v2437
    %v2774 = vpack.c.b16 %v2446, %v2438
    %v2775 = vpack.c.b16 %v2447, %v2439
    %v2776 = vpack.c.b16 %v2448, %v2440
    %v2777 = vpack.c.b16 %v2449, %v2441
    %v2778 = vpack.c.b16 %v2458, %v2450
    %v2779 = vpack.c.b16 %v2459, %v2451
    %v2780 = vpack.c.b16 %v2460, %v2452
    %v2781 = vpack.c.b16 %v2461, %v2453
    %v2782 = vpack.c.b16 %v2462, %v2454
    %v2783 = vpack.c.b16 %v2463, %v2455
    %v2784 = vpack.c.b16 %v2464, %v2456
    %v2785 = vpack.c.b16 %v2465, %v2457
    %v2786 = vpack.c.b16 %v2474, %v2466
    %v2787 = vpack.c.b16 %v2475, %v2467
    %v2788 = vpack.c.b16 %v2476, %v2468
    %v2789 = vpack.c.b16 %v2477, %v2469
    %v2790 = vpack.c.b16 %v2478, %v2470
    %v2791 = vpack.c.b16 %v2479, %v2471
    %v2792 = vpack.c.b16 %v2480, %v2472
    %v2793 = vpack.c.b16 %v2481, %v2473
    %v2794 = vpack.c.b16 %v2490, %v2482
    %v2795 = vpack.c.b16 %v2491, %v2483
    %v2796 = vpack.c.b16 %v2492, %v2484
    %v2797 = vpack.c.b16 %v2493, %v2485
    %v2798 = vpack.c.b16 %v2494, %v2486
    %v2799 = vpack.c.b16 %v2495, %v2487
    %v2800 = vpack.c.b16 %v2496, %v2488
    %v2801 = vpack.c.b16 %v2497, %v2489
    %v2802 = vpack.c.b16 %v2506, %v2498
    %v2803 = vpack.c.b16 %v2507, %v2499
    %v2804 = vpack.c.b16 %v2508, %v2500
    %v2805 = vpack.c.b16 %v2509, %v2501
    %v2806 = vpack.c.b16 %v2510, %v2502
    %v2807 = vpack.c.b16 %v2511, %v2503
    %v2808 = vpack.c.b16 %v2512, %v2504
    %v2809 = vpack.c.b16 %v2513, %v2505
    %v2810 = vpack.c.b16 %v2522, %v2514
    %v2811 = vpack.c.b16 %v2523, %v2515
    %v2812 = vpack.c.b16 %v2524, %v2516
    %v2813 = vpack.c.b16 %v2525, %v2517
    %v2814 = vpack.c.b16 %v2526, %v2518
    %v2815 = vpack.c.b16 %v2527, %v2519
    %v2816 = vpack.c.b16 %v2528, %v2520
    %v2817 = vpack.c.b16 %v2529, %v2521
    %v2818 = vpack.c.b16 %v2538, %v2530
    %v2819 = vpack.c.b16 %v2539, %v2531
    %v2820 = vpack.c.b16 %v2540, %v2532
    %v2821 = vpack.c.b16 %v2541, %v2533
    %v2822 = vpack.c.b16 %v2542, %v2534
    %v2823 = vpack.c.b16 %v2543, %v2535
    %v2824 = vpack.c.b16 %v2544, %v2536
    %v2825 = vpack.c.b16 %v2545, %v2537
    %v2826 = vpack.c.b16 %v2554, %v2546
    %v2827 = vpack.c.b16 %v2555, %v2547
    %v2828 = vpack.c.b16 %v2556, %v2548
    %v2829 = vpack.c.b16 %v2557, %v2549
    %v2830 = vpack.c.b16 %v2558, %v2550
    %v2831 = vpack.c.b16 %v2559, %v2551
    %v2832 = vpack.c.b16 %v2560, %v2552
    %v2833 = vpack.c.b16 %v2561, %v2553
    %v2834 = vpack.c.b16 %v2570, %v2562
    %v2835 = vpack.c.b16 %v2571, %v2563
    %v2836 = vpack.c.b16 %v2572, %v2564
    %v2837 = vpack.c.b16 %v2573, %v2565
    %v2838 = vpack.c.b16 %v2574, %v2566
    %v2839 = vpack.c.b16 %v2575, %v2567
    %v2840 = vpack.c.b16 %v2576, %v2568
    %v2841 = vpack.c.b16 %v2577, %v2569
    %v2842 = vpack.c.b16 %v2586, %v2578
    %v2843 = vpack.c.b16 %v2587, %v2579
    %v2844 = vpack.c.b16 %v2588, %v2580
    %v2845 = vpack.c.b16 %v2589, %v2581
    %v2846 = vpack.c.b16 %v2590, %v2582
    %v2847 = vpack.c.b16 %v2591, %v2583
    %v2848 = vpack.c.b16 %v2592, %v2584
    %v2849 = vpack.c.b16 %v2593, %v2585
    %3106 = vmatprep.subr.bf16.mxu0 %v2595
    %3107 = vmatpush1.bf16.msra.mxu0 %v2594
    %3108 = vmatprep.subr.bf16.mxu0 %v2603
    %3109 = vmatpush1.bf16.msra.mxu0 %v2602
    %3110 = vmatprep.subr.bf16.mxu0 %v2611
    %3111 = vmatpush1.bf16.msra.mxu0 %v2610
    %3112 = vmatprep.subr.bf16.mxu0 %v2619
    %3113 = vmatpush1.bf16.msra.mxu0 %v2618
    %3114 = vmatprep.subr.bf16.mxu0 %v2627
    %3115 = vmatpush1.bf16.msra.mxu0 %v2626
    %3116 = vmatprep.subr.bf16.mxu0 %v2635
    %3117 = vmatpush1.bf16.msra.mxu0 %v2634
    %3118 = vmatprep.subr.bf16.mxu0 %v2643
    %3119 = vmatpush1.bf16.msra.mxu0 %v2642
    %3120 = vmatprep.subr.bf16.mxu0 %v2651
    %3121 = vmatpush1.bf16.msra.mxu0 %v2650
    %3122 = vmatprep.subr.bf16.mxu0 %v2659
    %3123 = vmatpush1.bf16.msra.mxu0 %v2658
    %3124 = vmatprep.subr.bf16.mxu0 %v2667
    %3125 = vmatpush1.bf16.msra.mxu0 %v2666
    %3126 = vmatprep.subr.bf16.mxu0 %v2675
    %3127 = vmatpush1.bf16.msra.mxu0 %v2674
    %3128 = vmatprep.subr.bf16.mxu0 %v2683
    %3129 = vmatpush1.bf16.msra.mxu0 %v2682
    %3130 = vmatprep.subr.bf16.mxu0 %v2691
    %3131 = vmatpush1.bf16.msra.mxu0 %v2690
    %3132 = vmatprep.subr.bf16.mxu0 %v2699
    %3133 = vmatpush1.bf16.msra.mxu0 %v2698
    %3134 = vmatprep.subr.bf16.mxu0 %v2707
    %3135 = vmatpush1.bf16.msra.mxu0 %v2706
    %3136 = vmatprep.subr.bf16.mxu0 %v2715
    %3137 = vmatpush1.bf16.msra.mxu0 %v2714
    %3138 = vmatprep.mubr.bf16.mxu0 %v1465
    %3139 = vmatmul.mubr.bf16.gmra.mrb[0].mxu0 %v1464
    %v3140 = vpop.f32.mrb[0].mxu0
    %v3141 = vadd.f32 %v1789, %v3140
    %v3142 = vpop.f32.mrb[0].mxu0
    %v3143 = vadd.f32 %v1793, %v3142
    %v3144 = vpop.f32.mrb[0].mxu0
    %v3145 = vadd.f32 %v1789, %v3144
    %v3146 = vpop.f32.mrb[0].mxu0
    %v3147 = vadd.f32 %v1793, %v3146
    %3148 = vmatprep.mubr.bf16.mxu0 %v1469
    %3149 = vmatmul.mubr.bf16.gmra.mrb[0].mxu0 %v1468
    %v3150 = vpop.f32.mrb[0].mxu0
    %v3151 = vadd.f32 %v1789, %v3150
    %v3152 = vpop.f32.mrb[0].mxu0
    %v3153 = vadd.f32 %v1793, %v3152
    %v3154 = vpop.f32.mrb[0].mxu0
    %v3155 = vadd.f32 %v1789, %v3154
    %v3156 = vpop.f32.mrb[0].mxu0
    %v3157 = vadd.f32 %v1793, %v3156
    %3158 = vmatprep.mubr.bf16.mxu0 %v1473
    %3159 = vmatmul.mubr.bf16.gmra.mrb[0].mxu0 %v1472
    %v3160 = vpop.f32.mrb[0].mxu0
    %v3161 = vadd.f32 %v1789, %v3160
    %v3162 = vpop.f32.mrb[0].mxu0
    %v3163 = vadd.f32 %v1793, %v3162
    %v3164 = vpop.f32.mrb[0].mxu0
    %v3165 = vadd.f32 %v1789, %v3164
    %v3166 = vpop.f32.mrb[0].mxu0
    %v3167 = vadd.f32 %v1793, %v3166
    %3168 = vmatprep.mubr.bf16.mxu0 %v1477
    %3169 = vmatmul.mubr.bf16.gmra.mrb[0].mxu0 %v1476
    %v3170 = vpop.f32.mrb[0].mxu0
    %v3171 = vadd.f32 %v1789, %v3170
    %v3172 = vpop.f32.mrb[0].mxu0
    %v3173 = vadd.f32 %v1793, %v3172
    %v3174 = vpop.f32.mrb[0].mxu0
    %v3175 = vadd.f32 %v1789, %v3174
    %v3176 = vpop.f32.mrb[0].mxu0
    %v3177 = vadd.f32 %v1793, %v3176
    %3178 = vmatprep.mubr.bf16.mxu0 %v1481
    %3179 = vmatmul.mubr.bf16.gmra.mrb[0].mxu0 %v1480
    %v3180 = vpop.f32.mrb[0].mxu0
    %v3181 = vadd.f32 %v1789, %v3180
    %v3182 = vpop.f32.mrb[0].mxu0
    %v3183 = vadd.f32 %v1793, %v3182
    %v3184 = vpop.f32.mrb[0].mxu0
    %v3185 = vadd.f32 %v1789, %v3184
    %v3186 = vpop.f32.mrb[0].mxu0
    %v3187 = vadd.f32 %v1793, %v3186
    %3188 = vmatprep.mubr.bf16.mxu0 %v1485
    %3189 = vmatmul.mubr.bf16.gmra.mrb[0].mxu0 %v1484
    %v3190 = vpop.f32.mrb[0].mxu0
    %v3191 = vadd.f32 %v1789, %v3190
    %v3192 = vpop.f32.mrb[0].mxu0
    %v3193 = vadd.f32 %v1793, %v3192
    %v3194 = vpop.f32.mrb[0].mxu0
    %v3195 = vadd.f32 %v1789, %v3194
    %v3196 = vpop.f32.mrb[0].mxu0
    %v3197 = vadd.f32 %v1793, %v3196
    %3198 = vmatprep.mubr.bf16.mxu0 %v1489
    %3199 = vmatmul.mubr.bf16.gmra.mrb[0].mxu0 %v1488
    %v3200 = vpop.f32.mrb[0].mxu0
    %v3201 = vadd.f32 %v1789, %v3200
    %v3202 = vpop.f32.mrb[0].mxu0
    %v3203 = vadd.f32 %v1793, %v3202
    %v3204 = vpop.f32.mrb[0].mxu0
    %v3205 = vadd.f32 %v1789, %v3204
    %v3206 = vpop.f32.mrb[0].mxu0
    %v3207 = vadd.f32 %v1793, %v3206
    %3208 = vmatprep.mubr.bf16.mxu0 %v1493
    %3209 = vmatmul.mubr.bf16.gmra.mrb[0].mxu0 %v1492
    %v3210 = vpop.f32.mrb[0].mxu0
    %v3211 = vadd.f32 %v1789, %v3210
    %v3212 = vpop.f32.mrb[0].mxu0
    %v3213 = vadd.f32 %v1793, %v3212
    %v3214 = vpop.f32.mrb[0].mxu0
    %v3215 = vadd.f32 %v1789, %v3214
    %v3216 = vpop.f32.mrb[0].mxu0
    %v3217 = vadd.f32 %v1793, %v3216
    %3218 = vmatprep.mubr.bf16.mxu0 %v1497
    %3219 = vmatmul.mubr.bf16.gmra.mrb[0].mxu0 %v1496
    %v3220 = vpop.f32.mrb[0].mxu0
    %v3221 = vadd.f32 %v1789, %v3220
    %v3222 = vpop.f32.mrb[0].mxu0
    %v3223 = vadd.f32 %v1793, %v3222
    %v3224 = vpop.f32.mrb[0].mxu0
    %v3225 = vadd.f32 %v1789, %v3224
    %v3226 = vpop.f32.mrb[0].mxu0
    %v3227 = vadd.f32 %v1793, %v3226
    %3228 = vmatprep.mubr.bf16.mxu0 %v1501
    %3229 = vmatmul.mubr.bf16.gmra.mrb[0].mxu0 %v1500
    %v3230 = vpop.f32.mrb[0].mxu0
    %v3231 = vadd.f32 %v1789, %v3230
    %v3232 = vpop.f32.mrb[0].mxu0
    %v3233 = vadd.f32 %v1793, %v3232
    %v3234 = vpop.f32.mrb[0].mxu0
    %v3235 = vadd.f32 %v1789, %v3234
    %v3236 = vpop.f32.mrb[0].mxu0
    %v3237 = vadd.f32 %v1793, %v3236
    %3238 = vmatprep.mubr.bf16.mxu0 %v1505
    %3239 = vmatmul.mubr.bf16.gmra.mrb[0].mxu0 %v1504
    %v3240 = vpop.f32.mrb[0].mxu0
    %v3241 = vadd.f32 %v1789, %v3240
    %v3242 = vpop.f32.mrb[0].mxu0
    %v3243 = vadd.f32 %v1793, %v3242
    %v3244 = vpop.f32.mrb[0].mxu0
    %v3245 = vadd.f32 %v1789, %v3244
    %v3246 = vpop.f32.mrb[0].mxu0
    %v3247 = vadd.f32 %v1793, %v3246
    %3248 = vmatprep.mubr.bf16.mxu0 %v1509
    %3249 = vmatmul.mubr.bf16.gmra.mrb[0].mxu0 %v1508
    %v3250 = vpop.f32.mrb[0].mxu0
    %v3251 = vadd.f32 %v1789, %v3250
    %v3252 = vpop.f32.mrb[0].mxu0
    %v3253 = vadd.f32 %v1793, %v3252
    %v3254 = vpop.f32.mrb[0].mxu0
    %v3255 = vadd.f32 %v1789, %v3254
    %v3256 = vpop.f32.mrb[0].mxu0
    %v3257 = vadd.f32 %v1793, %v3256
    %3258 = vmatprep.mubr.bf16.mxu0 %v1513
    %3259 = vmatmul.mubr.bf16.gmra.mrb[0].mxu0 %v1512
    %v3260 = vpop.f32.mrb[0].mxu0
    %v3261 = vadd.f32 %v1789, %v3260
    %v3262 = vpop.f32.mrb[0].mxu0
    %v3263 = vadd.f32 %v1793, %v3262
    %v3264 = vpop.f32.mrb[0].mxu0
    %v3265 = vadd.f32 %v1789, %v3264
    %v3266 = vpop.f32.mrb[0].mxu0
    %v3267 = vadd.f32 %v1793, %v3266
    %3268 = vmatprep.mubr.bf16.mxu0 %v1517
    %3269 = vmatmul.mubr.bf16.gmra.mrb[0].mxu0 %v1516
    %v3270 = vpop.f32.mrb[0].mxu0
    %v3271 = vadd.f32 %v1789, %v3270
    %v3272 = vpop.f32.mrb[0].mxu0
    %v3273 = vadd.f32 %v1793, %v3272
    %v3274 = vpop.f32.mrb[0].mxu0
    %v3275 = vadd.f32 %v1789, %v3274
    %v3276 = vpop.f32.mrb[0].mxu0
    %v3277 = vadd.f32 %v1793, %v3276
    %3278 = vmatprep.mubr.bf16.mxu0 %v1521
    %3279 = vmatmul.mubr.bf16.gmra.mrb[0].mxu0 %v1520
    %v3280 = vpop.f32.mrb[0].mxu0
    %v3281 = vadd.f32 %v1789, %v3280
    %v3282 = vpop.f32.mrb[0].mxu0
    %v3283 = vadd.f32 %v1793, %v3282
    %v3284 = vpop.f32.mrb[0].mxu0
    %v3285 = vadd.f32 %v1789, %v3284
    %v3286 = vpop.f32.mrb[0].mxu0
    %v3287 = vadd.f32 %v1793, %v3286
    %3288 = vmatprep.mubr.bf16.mxu0 %v1525
    %3289 = vmatmul.mubr.bf16.gmra.mrb[0].mxu0 %v1524
    %v3290 = vpop.f32.mrb[0].mxu0
    %v3291 = vadd.f32 %v1789, %v3290
    %v3292 = vpop.f32.mrb[0].mxu0
    %v3293 = vadd.f32 %v1793, %v3292
    %v3294 = vpop.f32.mrb[0].mxu0
    %v3295 = vadd.f32 %v1789, %v3294
    %v3296 = vpop.f32.mrb[0].mxu0
    %v3297 = vadd.f32 %v1793, %v3296
    %3298 = vdwg.mxu0
    %3299 = vmatprep.subr.bf16.mxu0 %v2723
    %3300 = vmatpush1.bf16.msra.mxu0 %v2722
    %3301 = vmatprep.subr.bf16.mxu0 %v2731
    %3302 = vmatpush1.bf16.msra.mxu0 %v2730
    %3303 = vmatprep.subr.bf16.mxu0 %v2739
    %3304 = vmatpush1.bf16.msra.mxu0 %v2738
    %3305 = vmatprep.subr.bf16.mxu0 %v2747
    %3306 = vmatpush1.bf16.msra.mxu0 %v2746
    %3307 = vmatprep.subr.bf16.mxu0 %v2755
    %3308 = vmatpush1.bf16.msra.mxu0 %v2754
    %3309 = vmatprep.subr.bf16.mxu0 %v2763
    %3310 = vmatpush1.bf16.msra.mxu0 %v2762
    %3311 = vmatprep.subr.bf16.mxu0 %v2771
    %3312 = vmatpush1.bf16.msra.mxu0 %v2770
    %3313 = vmatprep.subr.bf16.mxu0 %v2779
    %3314 = vmatpush1.bf16.msra.mxu0 %v2778
    %3315 = vmatprep.subr.bf16.mxu0 %v2787
    %3316 = vmatpush1.bf16.msra.mxu0 %v2786
    %3317 = vmatprep.subr.bf16.mxu0 %v2795
    %3318 = vmatpush1.bf16.msra.mxu0 %v2794
    %3319 = vmatprep.subr.bf16.mxu0 %v2803
    %3320 = vmatpush1.bf16.msra.mxu0 %v2802
    %3321 = vmatprep.subr.bf16.mxu0 %v2811
    %3322 = vmatpush1.bf16.msra.mxu0 %v2810
    %3323 = vmatprep.subr.bf16.mxu0 %v2819
    %3324 = vmatpush1.bf16.msra.mxu0 %v2818
    %3325 = vmatprep.subr.bf16.mxu0 %v2827
    %3326 = vmatpush1.bf16.msra.mxu0 %v2826
    %3327 = vmatprep.subr.bf16.mxu0 %v2835
    %3328 = vmatpush1.bf16.msra.mxu0 %v2834
    %3329 = vmatprep.subr.bf16.mxu0 %v2843
    %3330 = vmatpush1.bf16.msra.mxu0 %v2842
    %3331 = vmatprep.mubr.bf16.mxu0 %v1467
    %3332 = vmatmul.mubr.bf16.gmra.mrb[0].mxu0 %v1466
    %v3333 = vpop.f32.mrb[0].mxu0
    %v3334 = vadd.f32 %v3141, %v3333
    %v3335 = vpop.f32.mrb[0].mxu0
    %v3336 = vadd.f32 %v3143, %v3335
    %v3337 = vpop.f32.mrb[0].mxu0
    %v3338 = vadd.f32 %v3145, %v3337
    %v3339 = vpop.f32.mrb[0].mxu0
    %v3340 = vadd.f32 %v3147, %v3339
    %3341 = vmatprep.mubr.bf16.mxu0 %v1471
    %3342 = vmatmul.mubr.bf16.gmra.mrb[0].mxu0 %v1470
    %v3343 = vpop.f32.mrb[0].mxu0
    %v3344 = vadd.f32 %v3151, %v3343
    %v3345 = vpop.f32.mrb[0].mxu0
    %v3346 = vadd.f32 %v3153, %v3345
    %v3347 = vpop.f32.mrb[0].mxu0
    %v3348 = vadd.f32 %v3155, %v3347
    %v3349 = vpop.f32.mrb[0].mxu0
    %v3350 = vadd.f32 %v3157, %v3349
    %3351 = vmatprep.mubr.bf16.mxu0 %v1475
    %3352 = vmatmul.mubr.bf16.gmra.mrb[0].mxu0 %v1474
    %v3353 = vpop.f32.mrb[0].mxu0
    %v3354 = vadd.f32 %v3161, %v3353
    %v3355 = vpop.f32.mrb[0].mxu0
    %v3356 = vadd.f32 %v3163, %v3355
    %v3357 = vpop.f32.mrb[0].mxu0
    %v3358 = vadd.f32 %v3165, %v3357
    %v3359 = vpop.f32.mrb[0].mxu0
    %v3360 = vadd.f32 %v3167, %v3359
    %3361 = vmatprep.mubr.bf16.mxu0 %v1479
    %3362 = vmatmul.mubr.bf16.gmra.mrb[0].mxu0 %v1478
    %v3363 = vpop.f32.mrb[0].mxu0
    %v3364 = vadd.f32 %v3171, %v3363
    %v3365 = vpop.f32.mrb[0].mxu0
    %v3366 = vadd.f32 %v3173, %v3365
    %v3367 = vpop.f32.mrb[0].mxu0
    %v3368 = vadd.f32 %v3175, %v3367
    %v3369 = vpop.f32.mrb[0].mxu0
    %v3370 = vadd.f32 %v3177, %v3369
    %3371 = vmatprep.mubr.bf16.mxu0 %v1483
    %3372 = vmatmul.mubr.bf16.gmra.mrb[0].mxu0 %v1482
    %v3373 = vpop.f32.mrb[0].mxu0
    %v3374 = vadd.f32 %v3181, %v3373
    %v3375 = vpop.f32.mrb[0].mxu0
    %v3376 = vadd.f32 %v3183, %v3375
    %v3377 = vpop.f32.mrb[0].mxu0
    %v3378 = vadd.f32 %v3185, %v3377
    %v3379 = vpop.f32.mrb[0].mxu0
    %v3380 = vadd.f32 %v3187, %v3379
    %3381 = vmatprep.mubr.bf16.mxu0 %v1487
    %3382 = vmatmul.mubr.bf16.gmra.mrb[0].mxu0 %v1486
    %v3383 = vpop.f32.mrb[0].mxu0
    %v3384 = vadd.f32 %v3191, %v3383
    %v3385 = vpop.f32.mrb[0].mxu0
    %v3386 = vadd.f32 %v3193, %v3385
    %v3387 = vpop.f32.mrb[0].mxu0
    %v3388 = vadd.f32 %v3195, %v3387
    %v3389 = vpop.f32.mrb[0].mxu0
    %v3390 = vadd.f32 %v3197, %v3389
    %3391 = vmatprep.mubr.bf16.mxu0 %v1491
    %3392 = vmatmul.mubr.bf16.gmra.mrb[0].mxu0 %v1490
    %v3393 = vpop.f32.mrb[0].mxu0
    %v3394 = vadd.f32 %v3201, %v3393
    %v3395 = vpop.f32.mrb[0].mxu0
    %v3396 = vadd.f32 %v3203, %v3395
    %v3397 = vpop.f32.mrb[0].mxu0
    %v3398 = vadd.f32 %v3205, %v3397
    %v3399 = vpop.f32.mrb[0].mxu0
    %v3400 = vadd.f32 %v3207, %v3399
    %3401 = vmatprep.mubr.bf16.mxu0 %v1495
    %3402 = vmatmul.mubr.bf16.gmra.mrb[0].mxu0 %v1494
    %v3403 = vpop.f32.mrb[0].mxu0
    %v3404 = vadd.f32 %v3211, %v3403
    %v3405 = vpop.f32.mrb[0].mxu0
    %v3406 = vadd.f32 %v3213, %v3405
    %v3407 = vpop.f32.mrb[0].mxu0
    %v3408 = vadd.f32 %v3215, %v3407
    %v3409 = vpop.f32.mrb[0].mxu0
    %v3410 = vadd.f32 %v3217, %v3409
    %3411 = vmatprep.mubr.bf16.mxu0 %v1499
    %3412 = vmatmul.mubr.bf16.gmra.mrb[0].mxu0 %v1498
    %v3413 = vpop.f32.mrb[0].mxu0
    %v3414 = vadd.f32 %v3221, %v3413
    %v3415 = vpop.f32.mrb[0].mxu0
    %v3416 = vadd.f32 %v3223, %v3415
    %v3417 = vpop.f32.mrb[0].mxu0
    %v3418 = vadd.f32 %v3225, %v3417
    %v3419 = vpop.f32.mrb[0].mxu0
    %v3420 = vadd.f32 %v3227, %v3419
    %3421 = vmatprep.mubr.bf16.mxu0 %v1503
    %3422 = vmatmul.mubr.bf16.gmra.mrb[0].mxu0 %v1502
    %v3423 = vpop.f32.mrb[0].mxu0
    %v3424 = vadd.f32 %v3231, %v3423
    %v3425 = vpop.f32.mrb[0].mxu0
    %v3426 = vadd.f32 %v3233, %v3425
    %v3427 = vpop.f32.mrb[0].mxu0
    %v3428 = vadd.f32 %v3235, %v3427
    %v3429 = vpop.f32.mrb[0].mxu0
    %v3430 = vadd.f32 %v3237, %v3429
    %3431 = vmatprep.mubr.bf16.mxu0 %v1507
    %3432 = vmatmul.mubr.bf16.gmra.mrb[0].mxu0 %v1506
    %v3433 = vpop.f32.mrb[0].mxu0
    %v3434 = vadd.f32 %v3241, %v3433
    %v3435 = vpop.f32.mrb[0].mxu0
    %v3436 = vadd.f32 %v3243, %v3435
    %v3437 = vpop.f32.mrb[0].mxu0
    %v3438 = vadd.f32 %v3245, %v3437
    %v3439 = vpop.f32.mrb[0].mxu0
    %v3440 = vadd.f32 %v3247, %v3439
    %3441 = vmatprep.mubr.bf16.mxu0 %v1511
    %3442 = vmatmul.mubr.bf16.gmra.mrb[0].mxu0 %v1510
    %v3443 = vpop.f32.mrb[0].mxu0
    %v3444 = vadd.f32 %v3251, %v3443
    %v3445 = vpop.f32.mrb[0].mxu0
    %v3446 = vadd.f32 %v3253, %v3445
    %v3447 = vpop.f32.mrb[0].mxu0
    %v3448 = vadd.f32 %v3255, %v3447
    %v3449 = vpop.f32.mrb[0].mxu0
    %v3450 = vadd.f32 %v3257, %v3449
    %3451 = vmatprep.mubr.bf16.mxu0 %v1515
    %3452 = vmatmul.mubr.bf16.gmra.mrb[0].mxu0 %v1514
    %v3453 = vpop.f32.mrb[0].mxu0
    %v3454 = vadd.f32 %v3261, %v3453
    %v3455 = vpop.f32.mrb[0].mxu0
    %v3456 = vadd.f32 %v3263, %v3455
    %v3457 = vpop.f32.mrb[0].mxu0
    %v3458 = vadd.f32 %v3265, %v3457
    %v3459 = vpop.f32.mrb[0].mxu0
    %v3460 = vadd.f32 %v3267, %v3459
    %3461 = vmatprep.mubr.bf16.mxu0 %v1519
    %3462 = vmatmul.mubr.bf16.gmra.mrb[0].mxu0 %v1518
    %v3463 = vpop.f32.mrb[0].mxu0
    %v3464 = vadd.f32 %v3271, %v3463
    %v3465 = vpop.f32.mrb[0].mxu0
    %v3466 = vadd.f32 %v3273, %v3465
    %v3467 = vpop.f32.mrb[0].mxu0
    %v3468 = vadd.f32 %v3275, %v3467
    %v3469 = vpop.f32.mrb[0].mxu0
    %v3470 = vadd.f32 %v3277, %v3469
    %3471 = vmatprep.mubr.bf16.mxu0 %v1523
    %3472 = vmatmul.mubr.bf16.gmra.mrb[0].mxu0 %v1522
    %v3473 = vpop.f32.mrb[0].mxu0
    %v3474 = vadd.f32 %v3281, %v3473
    %v3475 = vpop.f32.mrb[0].mxu0
    %v3476 = vadd.f32 %v3283, %v3475
    %v3477 = vpop.f32.mrb[0].mxu0
    %v3478 = vadd.f32 %v3285, %v3477
    %v3479 = vpop.f32.mrb[0].mxu0
    %v3480 = vadd.f32 %v3287, %v3479
    %3481 = vmatprep.mubr.bf16.mxu0 %v1527
    %3482 = vmatmul.mubr.bf16.gmra.mrb[0].mxu0 %v1526
    %v3483 = vpop.f32.mrb[0].mxu0
    %v3484 = vadd.f32 %v3291, %v3483
    %v3485 = vpop.f32.mrb[0].mxu0
    %v3486 = vadd.f32 %v3293, %v3485
    %v3487 = vpop.f32.mrb[0].mxu0
    %v3488 = vadd.f32 %v3295, %v3487
    %v3489 = vpop.f32.mrb[0].mxu0
    %v3490 = vadd.f32 %v3297, %v3489
    %3491 = vdwg.mxu0
    %3492 = vmatprep.subr.bf16.mxu0 %v2597
    %3493 = vmatpush1.bf16.msra.mxu0 %v2596
    %3494 = vmatprep.subr.bf16.mxu0 %v2605
    %3495 = vmatpush1.bf16.msra.mxu0 %v2604
    %3496 = vmatprep.subr.bf16.mxu0 %v2613
    %3497 = vmatpush1.bf16.msra.mxu0 %v2612
    %3498 = vmatprep.subr.bf16.mxu0 %v2621
    %3499 = vmatpush1.bf16.msra.mxu0 %v2620
    %3500 = vmatprep.subr.bf16.mxu0 %v2629
    %3501 = vmatpush1.bf16.msra.mxu0 %v2628
    %3502 = vmatprep.subr.bf16.mxu0 %v2637
    %3503 = vmatpush1.bf16.msra.mxu0 %v2636
    %3504 = vmatprep.subr.bf16.mxu0 %v2645
    %3505 = vmatpush1.bf16.msra.mxu0 %v2644
    %3506 = vmatprep.subr.bf16.mxu0 %v2653
    %3507 = vmatpush1.bf16.msra.mxu0 %v2652
    %3508 = vmatprep.subr.bf16.mxu0 %v2661
    %3509 = vmatpush1.bf16.msra.mxu0 %v2660
    %3510 = vmatprep.subr.bf16.mxu0 %v2669
    %3511 = vmatpush1.bf16.msra.mxu0 %v2668
    %3512 = vmatprep.subr.bf16.mxu0 %v2677
    %3513 = vmatpush1.bf16.msra.mxu0 %v2676
    %3514 = vmatprep.subr.bf16.mxu0 %v2685
    %3515 = vmatpush1.bf16.msra.mxu0 %v2684
    %3516 = vmatprep.subr.bf16.mxu0 %v2693
    %3517 = vmatpush1.bf16.msra.mxu0 %v2692
    %3518 = vmatprep.subr.bf16.mxu0 %v2701
    %3519 = vmatpush1.bf16.msra.mxu0 %v2700
    %3520 = vmatprep.subr.bf16.mxu0 %v2709
    %3521 = vmatpush1.bf16.msra.mxu0 %v2708
    %3522 = vmatprep.subr.bf16.mxu0 %v2717
    %3523 = vmatpush1.bf16.msra.mxu0 %v2716
    %3524 = vmatprep.mubr.bf16.mxu0 %v1465
    %3525 = vmatmul.mubr.bf16.gmra.mrb[0].mxu0 %v1464
    %v3526 = vpop.f32.mrb[0].mxu0
    %v3527 = vadd.f32 %v1797, %v3526
    %v3528 = vpop.f32.mrb[0].mxu0
    %v3529 = vadd.f32 %v1801, %v3528
    %v3530 = vpop.f32.mrb[0].mxu0
    %v3531 = vadd.f32 %v1797, %v3530
    %v3532 = vpop.f32.mrb[0].mxu0
    %v3533 = vadd.f32 %v1801, %v3532
    %3534 = vmatprep.mubr.bf16.mxu0 %v1469
    %3535 = vmatmul.mubr.bf16.gmra.mrb[0].mxu0 %v1468
    %v3536 = vpop.f32.mrb[0].mxu0
    %v3537 = vadd.f32 %v1797, %v3536
    %v3538 = vpop.f32.mrb[0].mxu0
    %v3539 = vadd.f32 %v1801, %v3538
    %v3540 = vpop.f32.mrb[0].mxu0
    %v3541 = vadd.f32 %v1797, %v3540
    %v3542 = vpop.f32.mrb[0].mxu0
    %v3543 = vadd.f32 %v1801, %v3542
    %3544 = vmatprep.mubr.bf16.mxu0 %v1473
    %3545 = vmatmul.mubr.bf16.gmra.mrb[0].mxu0 %v1472
    %v3546 = vpop.f32.mrb[0].mxu0
    %v3547 = vadd.f32 %v1797, %v3546
    %v3548 = vpop.f32.mrb[0].mxu0
    %v3549 = vadd.f32 %v1801, %v3548
    %v3550 = vpop.f32.mrb[0].mxu0
    %v3551 = vadd.f32 %v1797, %v3550
    %v3552 = vpop.f32.mrb[0].mxu0
    %v3553 = vadd.f32 %v1801, %v3552
    %3554 = vmatprep.mubr.bf16.mxu0 %v1477
    %3555 = vmatmul.mubr.bf16.gmra.mrb[0].mxu0 %v1476
    %v3556 = vpop.f32.mrb[0].mxu0
    %v3557 = vadd.f32 %v1797, %v3556
    %v3558 = vpop.f32.mrb[0].mxu0
    %v3559 = vadd.f32 %v1801, %v3558
    %v3560 = vpop.f32.mrb[0].mxu0
    %v3561 = vadd.f32 %v1797, %v3560
    %v3562 = vpop.f32.mrb[0].mxu0
    %v3563 = vadd.f32 %v1801, %v3562
    %3564 = vmatprep.mubr.bf16.mxu0 %v1481
    %3565 = vmatmul.mubr.bf16.gmra.mrb[0].mxu0 %v1480
    %v3566 = vpop.f32.mrb[0].mxu0
    %v3567 = vadd.f32 %v1797, %v3566
    %v3568 = vpop.f32.mrb[0].mxu0
    %v3569 = vadd.f32 %v1801, %v3568
    %v3570 = vpop.f32.mrb[0].mxu0
    %v3571 = vadd.f32 %v1797, %v3570
    %v3572 = vpop.f32.mrb[0].mxu0
    %v3573 = vadd.f32 %v1801, %v3572
    %3574 = vmatprep.mubr.bf16.mxu0 %v1485
    %3575 = vmatmul.mubr.bf16.gmra.mrb[0].mxu0 %v1484
    %v3576 = vpop.f32.mrb[0].mxu0
    %v3577 = vadd.f32 %v1797, %v3576
    %v3578 = vpop.f32.mrb[0].mxu0
    %v3579 = vadd.f32 %v1801, %v3578
    %v3580 = vpop.f32.mrb[0].mxu0
    %v3581 = vadd.f32 %v1797, %v3580
    %v3582 = vpop.f32.mrb[0].mxu0
    %v3583 = vadd.f32 %v1801, %v3582
    %3584 = vmatprep.mubr.bf16.mxu0 %v1489
    %3585 = vmatmul.mubr.bf16.gmra.mrb[0].mxu0 %v1488
    %v3586 = vpop.f32.mrb[0].mxu0
    %v3587 = vadd.f32 %v1797, %v3586
    %v3588 = vpop.f32.mrb[0].mxu0
    %v3589 = vadd.f32 %v1801, %v3588
    %v3590 = vpop.f32.mrb[0].mxu0
    %v3591 = vadd.f32 %v1797, %v3590
    %v3592 = vpop.f32.mrb[0].mxu0
    %v3593 = vadd.f32 %v1801, %v3592
    %3594 = vmatprep.mubr.bf16.mxu0 %v1493
    %3595 = vmatmul.mubr.bf16.gmra.mrb[0].mxu0 %v1492
    %v3596 = vpop.f32.mrb[0].mxu0
    %v3597 = vadd.f32 %v1797, %v3596
    %v3598 = vpop.f32.mrb[0].mxu0
    %v3599 = vadd.f32 %v1801, %v3598
    %v3600 = vpop.f32.mrb[0].mxu0
    %v3601 = vadd.f32 %v1797, %v3600
    %v3602 = vpop.f32.mrb[0].mxu0
    %v3603 = vadd.f32 %v1801, %v3602
    %3604 = vmatprep.mubr.bf16.mxu0 %v1497
    %3605 = vmatmul.mubr.bf16.gmra.mrb[0].mxu0 %v1496
    %v3606 = vpop.f32.mrb[0].mxu0
    %v3607 = vadd.f32 %v1797, %v3606
    %v3608 = vpop.f32.mrb[0].mxu0
    %v3609 = vadd.f32 %v1801, %v3608
    %v3610 = vpop.f32.mrb[0].mxu0
    %v3611 = vadd.f32 %v1797, %v3610
    %v3612 = vpop.f32.mrb[0].mxu0
    %v3613 = vadd.f32 %v1801, %v3612
    %3614 = vmatprep.mubr.bf16.mxu0 %v1501
    %3615 = vmatmul.mubr.bf16.gmra.mrb[0].mxu0 %v1500
    %v3616 = vpop.f32.mrb[0].mxu0
    %v3617 = vadd.f32 %v1797, %v3616
    %v3618 = vpop.f32.mrb[0].mxu0
    %v3619 = vadd.f32 %v1801, %v3618
    %v3620 = vpop.f32.mrb[0].mxu0
    %v3621 = vadd.f32 %v1797, %v3620
    %v3622 = vpop.f32.mrb[0].mxu0
    %v3623 = vadd.f32 %v1801, %v3622
    %3624 = vmatprep.mubr.bf16.mxu0 %v1505
    %3625 = vmatmul.mubr.bf16.gmra.mrb[0].mxu0 %v1504
    %v3626 = vpop.f32.mrb[0].mxu0
    %v3627 = vadd.f32 %v1797, %v3626
    %v3628 = vpop.f32.mrb[0].mxu0
    %v3629 = vadd.f32 %v1801, %v3628
    %v3630 = vpop.f32.mrb[0].mxu0
    %v3631 = vadd.f32 %v1797, %v3630
    %v3632 = vpop.f32.mrb[0].mxu0
    %v3633 = vadd.f32 %v1801, %v3632
    %3634 = vmatprep.mubr.bf16.mxu0 %v1509
    %3635 = vmatmul.mubr.bf16.gmra.mrb[0].mxu0 %v1508
    %v3636 = vpop.f32.mrb[0].mxu0
    %v3637 = vadd.f32 %v1797, %v3636
    %v3638 = vpop.f32.mrb[0].mxu0
    %v3639 = vadd.f32 %v1801, %v3638
    %v3640 = vpop.f32.mrb[0].mxu0
    %v3641 = vadd.f32 %v1797, %v3640
    %v3642 = vpop.f32.mrb[0].mxu0
    %v3643 = vadd.f32 %v1801, %v3642
    %3644 = vmatprep.mubr.bf16.mxu0 %v1513
    %3645 = vmatmul.mubr.bf16.gmra.mrb[0].mxu0 %v1512
    %v3646 = vpop.f32.mrb[0].mxu0
    %v3647 = vadd.f32 %v1797, %v3646
    %v3648 = vpop.f32.mrb[0].mxu0
    %v3649 = vadd.f32 %v1801, %v3648
    %v3650 = vpop.f32.mrb[0].mxu0
    %v3651 = vadd.f32 %v1797, %v3650
    %v3652 = vpop.f32.mrb[0].mxu0
    %v3653 = vadd.f32 %v1801, %v3652
    %3654 = vmatprep.mubr.bf16.mxu0 %v1517
    %3655 = vmatmul.mubr.bf16.gmra.mrb[0].mxu0 %v1516
    %v3656 = vpop.f32.mrb[0].mxu0
    %v3657 = vadd.f32 %v1797, %v3656
    %v3658 = vpop.f32.mrb[0].mxu0
    %v3659 = vadd.f32 %v1801, %v3658
    %v3660 = vpop.f32.mrb[0].mxu0
    %v3661 = vadd.f32 %v1797, %v3660
    %v3662 = vpop.f32.mrb[0].mxu0
    %v3663 = vadd.f32 %v1801, %v3662
    %3664 = vmatprep.mubr.bf16.mxu0 %v1521
    %3665 = vmatmul.mubr.bf16.gmra.mrb[0].mxu0 %v1520
    %v3666 = vpop.f32.mrb[0].mxu0
    %v3667 = vadd.f32 %v1797, %v3666
    %v3668 = vpop.f32.mrb[0].mxu0
    %v3669 = vadd.f32 %v1801, %v3668
    %v3670 = vpop.f32.mrb[0].mxu0
    %v3671 = vadd.f32 %v1797, %v3670
    %v3672 = vpop.f32.mrb[0].mxu0
    %v3673 = vadd.f32 %v1801, %v3672
    %3674 = vmatprep.mubr.bf16.mxu0 %v1525
    %3675 = vmatmul.mubr.bf16.gmra.mrb[0].mxu0 %v1524
    %v3676 = vpop.f32.mrb[0].mxu0
    %v3677 = vadd.f32 %v1797, %v3676
    %v3678 = vpop.f32.mrb[0].mxu0
    %v3679 = vadd.f32 %v1801, %v3678
    %v3680 = vpop.f32.mrb[0].mxu0
    %v3681 = vadd.f32 %v1797, %v3680
    %v3682 = vpop.f32.mrb[0].mxu0
    %v3683 = vadd.f32 %v1801, %v3682
    %3684 = vdwg.mxu0
    %3685 = vmatprep.subr.bf16.mxu0 %v2725
    %3686 = vmatpush1.bf16.msra.mxu0 %v2724
    %3687 = vmatprep.subr.bf16.mxu0 %v2733
    %3688 = vmatpush1.bf16.msra.mxu0 %v2732
    %3689 = vmatprep.subr.bf16.mxu0 %v2741
    %3690 = vmatpush1.bf16.msra.mxu0 %v2740
    %3691 = vmatprep.subr.bf16.mxu0 %v2749
    %3692 = vmatpush1.bf16.msra.mxu0 %v2748
    %3693 = vmatprep.subr.bf16.mxu0 %v2757
    %3694 = vmatpush1.bf16.msra.mxu0 %v2756
    %3695 = vmatprep.subr.bf16.mxu0 %v2765
    %3696 = vmatpush1.bf16.msra.mxu0 %v2764
    %3697 = vmatprep.subr.bf16.mxu0 %v2773
    %3698 = vmatpush1.bf16.msra.mxu0 %v2772
    %3699 = vmatprep.subr.bf16.mxu0 %v2781
    %3700 = vmatpush1.bf16.msra.mxu0 %v2780
    %3701 = vmatprep.subr.bf16.mxu0 %v2789
    %3702 = vmatpush1.bf16.msra.mxu0 %v2788
    %3703 = vmatprep.subr.bf16.mxu0 %v2797
    %3704 = vmatpush1.bf16.msra.mxu0 %v2796
    %3705 = vmatprep.subr.bf16.mxu0 %v2805
    %3706 = vmatpush1.bf16.msra.mxu0 %v2804
    %3707 = vmatprep.subr.bf16.mxu0 %v2813
    %3708 = vmatpush1.bf16.msra.mxu0 %v2812
    %3709 = vmatprep.subr.bf16.mxu0 %v2821
    %3710 = vmatpush1.bf16.msra.mxu0 %v2820
    %3711 = vmatprep.subr.bf16.mxu0 %v2829
    %3712 = vmatpush1.bf16.msra.mxu0 %v2828
    %3713 = vmatprep.subr.bf16.mxu0 %v2837
    %3714 = vmatpush1.bf16.msra.mxu0 %v2836
    %3715 = vmatprep.subr.bf16.mxu0 %v2845
    %3716 = vmatpush1.bf16.msra.mxu0 %v2844
    %3717 = vmatprep.mubr.bf16.mxu0 %v1467
    %3718 = vmatmul.mubr.bf16.gmra.mrb[0].mxu0 %v1466
    %v3719 = vpop.f32.mrb[0].mxu0
    %v3720 = vadd.f32 %v3527, %v3719
    %v3721 = vpop.f32.mrb[0].mxu0
    %v3722 = vadd.f32 %v3529, %v3721
    %v3723 = vpop.f32.mrb[0].mxu0
    %v3724 = vadd.f32 %v3531, %v3723
    %v3725 = vpop.f32.mrb[0].mxu0
    %v3726 = vadd.f32 %v3533, %v3725
    %3727 = vmatprep.mubr.bf16.mxu0 %v1471
    %3728 = vmatmul.mubr.bf16.gmra.mrb[0].mxu0 %v1470
    %v3729 = vpop.f32.mrb[0].mxu0
    %v3730 = vadd.f32 %v3537, %v3729
    %v3731 = vpop.f32.mrb[0].mxu0
    %v3732 = vadd.f32 %v3539, %v3731
    %v3733 = vpop.f32.mrb[0].mxu0
    %v3734 = vadd.f32 %v3541, %v3733
    %v3735 = vpop.f32.mrb[0].mxu0
    %v3736 = vadd.f32 %v3543, %v3735
    %3737 = vmatprep.mubr.bf16.mxu0 %v1475
    %3738 = vmatmul.mubr.bf16.gmra.mrb[0].mxu0 %v1474
    %v3739 = vpop.f32.mrb[0].mxu0
    %v3740 = vadd.f32 %v3547, %v3739
    %v3741 = vpop.f32.mrb[0].mxu0
    %v3742 = vadd.f32 %v3549, %v3741
    %v3743 = vpop.f32.mrb[0].mxu0
    %v3744 = vadd.f32 %v3551, %v3743
    %v3745 = vpop.f32.mrb[0].mxu0
    %v3746 = vadd.f32 %v3553, %v3745
    %3747 = vmatprep.mubr.bf16.mxu0 %v1479
    %3748 = vmatmul.mubr.bf16.gmra.mrb[0].mxu0 %v1478
    %v3749 = vpop.f32.mrb[0].mxu0
    %v3750 = vadd.f32 %v3557, %v3749
    %v3751 = vpop.f32.mrb[0].mxu0
    %v3752 = vadd.f32 %v3559, %v3751
    %v3753 = vpop.f32.mrb[0].mxu0
    %v3754 = vadd.f32 %v3561, %v3753
    %v3755 = vpop.f32.mrb[0].mxu0
    %v3756 = vadd.f32 %v3563, %v3755
    %3757 = vmatprep.mubr.bf16.mxu0 %v1483
    %3758 = vmatmul.mubr.bf16.gmra.mrb[0].mxu0 %v1482
    %v3759 = vpop.f32.mrb[0].mxu0
    %v3760 = vadd.f32 %v3567, %v3759
    %v3761 = vpop.f32.mrb[0].mxu0
    %v3762 = vadd.f32 %v3569, %v3761
    %v3763 = vpop.f32.mrb[0].mxu0
    %v3764 = vadd.f32 %v3571, %v3763
    %v3765 = vpop.f32.mrb[0].mxu0
    %v3766 = vadd.f32 %v3573, %v3765
    %3767 = vmatprep.mubr.bf16.mxu0 %v1487
    %3768 = vmatmul.mubr.bf16.gmra.mrb[0].mxu0 %v1486
    %v3769 = vpop.f32.mrb[0].mxu0
    %v3770 = vadd.f32 %v3577, %v3769
    %v3771 = vpop.f32.mrb[0].mxu0
    %v3772 = vadd.f32 %v3579, %v3771
    %v3773 = vpop.f32.mrb[0].mxu0
    %v3774 = vadd.f32 %v3581, %v3773
    %v3775 = vpop.f32.mrb[0].mxu0
    %v3776 = vadd.f32 %v3583, %v3775
    %3777 = vmatprep.mubr.bf16.mxu0 %v1491
    %3778 = vmatmul.mubr.bf16.gmra.mrb[0].mxu0 %v1490
    %v3779 = vpop.f32.mrb[0].mxu0
    %v3780 = vadd.f32 %v3587, %v3779
    %v3781 = vpop.f32.mrb[0].mxu0
    %v3782 = vadd.f32 %v3589, %v3781
    %v3783 = vpop.f32.mrb[0].mxu0
    %v3784 = vadd.f32 %v3591, %v3783
    %v3785 = vpop.f32.mrb[0].mxu0
    %v3786 = vadd.f32 %v3593, %v3785
    %3787 = vmatprep.mubr.bf16.mxu0 %v1495
    %3788 = vmatmul.mubr.bf16.gmra.mrb[0].mxu0 %v1494
    %v3789 = vpop.f32.mrb[0].mxu0
    %v3790 = vadd.f32 %v3597, %v3789
    %v3791 = vpop.f32.mrb[0].mxu0
    %v3792 = vadd.f32 %v3599, %v3791
    %v3793 = vpop.f32.mrb[0].mxu0
    %v3794 = vadd.f32 %v3601, %v3793
    %v3795 = vpop.f32.mrb[0].mxu0
    %v3796 = vadd.f32 %v3603, %v3795
    %3797 = vmatprep.mubr.bf16.mxu0 %v1499
    %3798 = vmatmul.mubr.bf16.gmra.mrb[0].mxu0 %v1498
    %v3799 = vpop.f32.mrb[0].mxu0
    %v3800 = vadd.f32 %v3607, %v3799
    %v3801 = vpop.f32.mrb[0].mxu0
    %v3802 = vadd.f32 %v3609, %v3801
    %v3803 = vpop.f32.mrb[0].mxu0
    %v3804 = vadd.f32 %v3611, %v3803
    %v3805 = vpop.f32.mrb[0].mxu0
    %v3806 = vadd.f32 %v3613, %v3805
    %3807 = vmatprep.mubr.bf16.mxu0 %v1503
    %3808 = vmatmul.mubr.bf16.gmra.mrb[0].mxu0 %v1502
    %v3809 = vpop.f32.mrb[0].mxu0
    %v3810 = vadd.f32 %v3617, %v3809
    %v3811 = vpop.f32.mrb[0].mxu0
    %v3812 = vadd.f32 %v3619, %v3811
    %v3813 = vpop.f32.mrb[0].mxu0
    %v3814 = vadd.f32 %v3621, %v3813
    %v3815 = vpop.f32.mrb[0].mxu0
    %v3816 = vadd.f32 %v3623, %v3815
    %3817 = vmatprep.mubr.bf16.mxu0 %v1507
    %3818 = vmatmul.mubr.bf16.gmra.mrb[0].mxu0 %v1506
    %v3819 = vpop.f32.mrb[0].mxu0
    %v3820 = vadd.f32 %v3627, %v3819
    %v3821 = vpop.f32.mrb[0].mxu0
    %v3822 = vadd.f32 %v3629, %v3821
    %v3823 = vpop.f32.mrb[0].mxu0
    %v3824 = vadd.f32 %v3631, %v3823
    %v3825 = vpop.f32.mrb[0].mxu0
    %v3826 = vadd.f32 %v3633, %v3825
    %3827 = vmatprep.mubr.bf16.mxu0 %v1511
    %3828 = vmatmul.mubr.bf16.gmra.mrb[0].mxu0 %v1510
    %v3829 = vpop.f32.mrb[0].mxu0
    %v3830 = vadd.f32 %v3637, %v3829
    %v3831 = vpop.f32.mrb[0].mxu0
    %v3832 = vadd.f32 %v3639, %v3831
    %v3833 = vpop.f32.mrb[0].mxu0
    %v3834 = vadd.f32 %v3641, %v3833
    %v3835 = vpop.f32.mrb[0].mxu0
    %v3836 = vadd.f32 %v3643, %v3835
    %3837 = vmatprep.mubr.bf16.mxu0 %v1515
    %3838 = vmatmul.mubr.bf16.gmra.mrb[0].mxu0 %v1514
    %v3839 = vpop.f32.mrb[0].mxu0
    %v3840 = vadd.f32 %v3647, %v3839
    %v3841 = vpop.f32.mrb[0].mxu0
    %v3842 = vadd.f32 %v3649, %v3841
    %v3843 = vpop.f32.mrb[0].mxu0
    %v3844 = vadd.f32 %v3651, %v3843
    %v3845 = vpop.f32.mrb[0].mxu0
    %v3846 = vadd.f32 %v3653, %v3845
    %3847 = vmatprep.mubr.bf16.mxu0 %v1519
    %3848 = vmatmul.mubr.bf16.gmra.mrb[0].mxu0 %v1518
    %v3849 = vpop.f32.mrb[0].mxu0
    %v3850 = vadd.f32 %v3657, %v3849
    %v3851 = vpop.f32.mrb[0].mxu0
    %v3852 = vadd.f32 %v3659, %v3851
    %v3853 = vpop.f32.mrb[0].mxu0
    %v3854 = vadd.f32 %v3661, %v3853
    %v3855 = vpop.f32.mrb[0].mxu0
    %v3856 = vadd.f32 %v3663, %v3855
    %3857 = vmatprep.mubr.bf16.mxu0 %v1523
    %3858 = vmatmul.mubr.bf16.gmra.mrb[0].mxu0 %v1522
    %v3859 = vpop.f32.mrb[0].mxu0
    %v3860 = vadd.f32 %v3667, %v3859
    %v3861 = vpop.f32.mrb[0].mxu0
    %v3862 = vadd.f32 %v3669, %v3861
    %v3863 = vpop.f32.mrb[0].mxu0
    %v3864 = vadd.f32 %v3671, %v3863
    %v3865 = vpop.f32.mrb[0].mxu0
    %v3866 = vadd.f32 %v3673, %v3865
    %3867 = vmatprep.mubr.bf16.mxu0 %v1527
    %3868 = vmatmul.mubr.bf16.gmra.mrb[0].mxu0 %v1526
    %v3869 = vpop.f32.mrb[0].mxu0
    %v3870 = vadd.f32 %v3677, %v3869
    %v3871 = vpop.f32.mrb[0].mxu0
    %v3872 = vadd.f32 %v3679, %v3871
    %v3873 = vpop.f32.mrb[0].mxu0
    %v3874 = vadd.f32 %v3681, %v3873
    %v3875 = vpop.f32.mrb[0].mxu0
    %v3876 = vadd.f32 %v3683, %v3875
    %3877 = vdwg.mxu0
    %3878 = vmatprep.subr.bf16.mxu0 %v2599
    %3879 = vmatpush1.bf16.msra.mxu0 %v2598
    %3880 = vmatprep.subr.bf16.mxu0 %v2607
    %3881 = vmatpush1.bf16.msra.mxu0 %v2606
    %3882 = vmatprep.subr.bf16.mxu0 %v2615
    %3883 = vmatpush1.bf16.msra.mxu0 %v2614
    %3884 = vmatprep.subr.bf16.mxu0 %v2623
    %3885 = vmatpush1.bf16.msra.mxu0 %v2622
    %3886 = vmatprep.subr.bf16.mxu0 %v2631
    %3887 = vmatpush1.bf16.msra.mxu0 %v2630
    %3888 = vmatprep.subr.bf16.mxu0 %v2639
    %3889 = vmatpush1.bf16.msra.mxu0 %v2638
    %3890 = vmatprep.subr.bf16.mxu0 %v2647
    %3891 = vmatpush1.bf16.msra.mxu0 %v2646
    %3892 = vmatprep.subr.bf16.mxu0 %v2655
    %3893 = vmatpush1.bf16.msra.mxu0 %v2654
    %3894 = vmatprep.subr.bf16.mxu0 %v2663
    %3895 = vmatpush1.bf16.msra.mxu0 %v2662
    %3896 = vmatprep.subr.bf16.mxu0 %v2671
    %3897 = vmatpush1.bf16.msra.mxu0 %v2670
    %3898 = vmatprep.subr.bf16.mxu0 %v2679
    %3899 = vmatpush1.bf16.msra.mxu0 %v2678
    %3900 = vmatprep.subr.bf16.mxu0 %v2687
    %3901 = vmatpush1.bf16.msra.mxu0 %v2686
    %3902 = vmatprep.subr.bf16.mxu0 %v2695
    %3903 = vmatpush1.bf16.msra.mxu0 %v2694
    %3904 = vmatprep.subr.bf16.mxu0 %v2703
    %3905 = vmatpush1.bf16.msra.mxu0 %v2702
    %3906 = vmatprep.subr.bf16.mxu0 %v2711
    %3907 = vmatpush1.bf16.msra.mxu0 %v2710
    %3908 = vmatprep.subr.bf16.mxu0 %v2719
    %3909 = vmatpush1.bf16.msra.mxu0 %v2718
    %3910 = vmatprep.mubr.bf16.mxu0 %v1465
    %3911 = vmatmul.mubr.bf16.gmra.mrb[0].mxu0 %v1464
    %v3912 = vpop.f32.mrb[0].mxu0
    %v3913 = vadd.f32 %v1805, %v3912
    %v3914 = vpop.f32.mrb[0].mxu0
    %v3915 = vadd.f32 %v1809, %v3914
    %v3916 = vpop.f32.mrb[0].mxu0
    %v3917 = vadd.f32 %v1805, %v3916
    %v3918 = vpop.f32.mrb[0].mxu0
    %v3919 = vadd.f32 %v1809, %v3918
    %3920 = vmatprep.mubr.bf16.mxu0 %v1469
    %3921 = vmatmul.mubr.bf16.gmra.mrb[0].mxu0 %v1468
    %v3922 = vpop.f32.mrb[0].mxu0
    %v3923 = vadd.f32 %v1805, %v3922
    %v3924 = vpop.f32.mrb[0].mxu0
    %v3925 = vadd.f32 %v1809, %v3924
    %v3926 = vpop.f32.mrb[0].mxu0
    %v3927 = vadd.f32 %v1805, %v3926
    %v3928 = vpop.f32.mrb[0].mxu0
    %v3929 = vadd.f32 %v1809, %v3928
    %3930 = vmatprep.mubr.bf16.mxu0 %v1473
    %3931 = vmatmul.mubr.bf16.gmra.mrb[0].mxu0 %v1472
    %v3932 = vpop.f32.mrb[0].mxu0
    %v3933 = vadd.f32 %v1805, %v3932
    %v3934 = vpop.f32.mrb[0].mxu0
    %v3935 = vadd.f32 %v1809, %v3934
    %v3936 = vpop.f32.mrb[0].mxu0
    %v3937 = vadd.f32 %v1805, %v3936
    %v3938 = vpop.f32.mrb[0].mxu0
    %v3939 = vadd.f32 %v1809, %v3938
    %3940 = vmatprep.mubr.bf16.mxu0 %v1477
    %3941 = vmatmul.mubr.bf16.gmra.mrb[0].mxu0 %v1476
    %v3942 = vpop.f32.mrb[0].mxu0
    %v3943 = vadd.f32 %v1805, %v3942
    %v3944 = vpop.f32.mrb[0].mxu0
    %v3945 = vadd.f32 %v1809, %v3944
    %v3946 = vpop.f32.mrb[0].mxu0
    %v3947 = vadd.f32 %v1805, %v3946
    %v3948 = vpop.f32.mrb[0].mxu0
    %v3949 = vadd.f32 %v1809, %v3948
    %3950 = vmatprep.mubr.bf16.mxu0 %v1481
    %3951 = vmatmul.mubr.bf16.gmra.mrb[0].mxu0 %v1480
    %v3952 = vpop.f32.mrb[0].mxu0
    %v3953 = vadd.f32 %v1805, %v3952
    %v3954 = vpop.f32.mrb[0].mxu0
    %v3955 = vadd.f32 %v1809, %v3954
    %v3956 = vpop.f32.mrb[0].mxu0
    %v3957 = vadd.f32 %v1805, %v3956
    %v3958 = vpop.f32.mrb[0].mxu0
    %v3959 = vadd.f32 %v1809, %v3958
    %3960 = vmatprep.mubr.bf16.mxu0 %v1485
    %3961 = vmatmul.mubr.bf16.gmra.mrb[0].mxu0 %v1484
    %v3962 = vpop.f32.mrb[0].mxu0
    %v3963 = vadd.f32 %v1805, %v3962
    %v3964 = vpop.f32.mrb[0].mxu0
    %v3965 = vadd.f32 %v1809, %v3964
    %v3966 = vpop.f32.mrb[0].mxu0
    %v3967 = vadd.f32 %v1805, %v3966
    %v3968 = vpop.f32.mrb[0].mxu0
    %v3969 = vadd.f32 %v1809, %v3968
    %3970 = vmatprep.mubr.bf16.mxu0 %v1489
    %3971 = vmatmul.mubr.bf16.gmra.mrb[0].mxu0 %v1488
    %v3972 = vpop.f32.mrb[0].mxu0
    %v3973 = vadd.f32 %v1805, %v3972
    %v3974 = vpop.f32.mrb[0].mxu0
    %v3975 = vadd.f32 %v1809, %v3974
    %v3976 = vpop.f32.mrb[0].mxu0
    %v3977 = vadd.f32 %v1805, %v3976
    %v3978 = vpop.f32.mrb[0].mxu0
    %v3979 = vadd.f32 %v1809, %v3978
    %3980 = vmatprep.mubr.bf16.mxu0 %v1493
    %3981 = vmatmul.mubr.bf16.gmra.mrb[0].mxu0 %v1492
    %v3982 = vpop.f32.mrb[0].mxu0
    %v3983 = vadd.f32 %v1805, %v3982
    %v3984 = vpop.f32.mrb[0].mxu0
    %v3985 = vadd.f32 %v1809, %v3984
    %v3986 = vpop.f32.mrb[0].mxu0
    %v3987 = vadd.f32 %v1805, %v3986
    %v3988 = vpop.f32.mrb[0].mxu0
    %v3989 = vadd.f32 %v1809, %v3988
    %3990 = vmatprep.mubr.bf16.mxu0 %v1497
    %3991 = vmatmul.mubr.bf16.gmra.mrb[0].mxu0 %v1496
    %v3992 = vpop.f32.mrb[0].mxu0
    %v3993 = vadd.f32 %v1805, %v3992
    %v3994 = vpop.f32.mrb[0].mxu0
    %v3995 = vadd.f32 %v1809, %v3994
    %v3996 = vpop.f32.mrb[0].mxu0
    %v3997 = vadd.f32 %v1805, %v3996
    %v3998 = vpop.f32.mrb[0].mxu0
    %v3999 = vadd.f32 %v1809, %v3998
    %4000 = vmatprep.mubr.bf16.mxu0 %v1501
    %4001 = vmatmul.mubr.bf16.gmra.mrb[0].mxu0 %v1500
    %v4002 = vpop.f32.mrb[0].mxu0
    %v4003 = vadd.f32 %v1805, %v4002
    %v4004 = vpop.f32.mrb[0].mxu0
    %v4005 = vadd.f32 %v1809, %v4004
    %v4006 = vpop.f32.mrb[0].mxu0
    %v4007 = vadd.f32 %v1805, %v4006
    %v4008 = vpop.f32.mrb[0].mxu0
    %v4009 = vadd.f32 %v1809, %v4008
    %4010 = vmatprep.mubr.bf16.mxu0 %v1505
    %4011 = vmatmul.mubr.bf16.gmra.mrb[0].mxu0 %v1504
    %v4012 = vpop.f32.mrb[0].mxu0
    %v4013 = vadd.f32 %v1805, %v4012
    %v4014 = vpop.f32.mrb[0].mxu0
    %v4015 = vadd.f32 %v1809, %v4014
    %v4016 = vpop.f32.mrb[0].mxu0
    %v4017 = vadd.f32 %v1805, %v4016
    %v4018 = vpop.f32.mrb[0].mxu0
    %v4019 = vadd.f32 %v1809, %v4018
    %4020 = vmatprep.mubr.bf16.mxu0 %v1509
    %4021 = vmatmul.mubr.bf16.gmra.mrb[0].mxu0 %v1508
    %v4022 = vpop.f32.mrb[0].mxu0
    %v4023 = vadd.f32 %v1805, %v4022
    %v4024 = vpop.f32.mrb[0].mxu0
    %v4025 = vadd.f32 %v1809, %v4024
    %v4026 = vpop.f32.mrb[0].mxu0
    %v4027 = vadd.f32 %v1805, %v4026
    %v4028 = vpop.f32.mrb[0].mxu0
    %v4029 = vadd.f32 %v1809, %v4028
    %4030 = vmatprep.mubr.bf16.mxu0 %v1513
    %4031 = vmatmul.mubr.bf16.gmra.mrb[0].mxu0 %v1512
    %v4032 = vpop.f32.mrb[0].mxu0
    %v4033 = vadd.f32 %v1805, %v4032
    %v4034 = vpop.f32.mrb[0].mxu0
    %v4035 = vadd.f32 %v1809, %v4034
    %v4036 = vpop.f32.mrb[0].mxu0
    %v4037 = vadd.f32 %v1805, %v4036
    %v4038 = vpop.f32.mrb[0].mxu0
    %v4039 = vadd.f32 %v1809, %v4038
    %4040 = vmatprep.mubr.bf16.mxu0 %v1517
    %4041 = vmatmul.mubr.bf16.gmra.mrb[0].mxu0 %v1516
    %v4042 = vpop.f32.mrb[0].mxu0
    %v4043 = vadd.f32 %v1805, %v4042
    %v4044 = vpop.f32.mrb[0].mxu0
    %v4045 = vadd.f32 %v1809, %v4044
    %v4046 = vpop.f32.mrb[0].mxu0
    %v4047 = vadd.f32 %v1805, %v4046
    %v4048 = vpop.f32.mrb[0].mxu0
    %v4049 = vadd.f32 %v1809, %v4048
    %4050 = vmatprep.mubr.bf16.mxu0 %v1521
    %4051 = vmatmul.mubr.bf16.gmra.mrb[0].mxu0 %v1520
    %v4052 = vpop.f32.mrb[0].mxu0
    %v4053 = vadd.f32 %v1805, %v4052
    %v4054 = vpop.f32.mrb[0].mxu0
    %v4055 = vadd.f32 %v1809, %v4054
    %v4056 = vpop.f32.mrb[0].mxu0
    %v4057 = vadd.f32 %v1805, %v4056
    %v4058 = vpop.f32.mrb[0].mxu0
    %v4059 = vadd.f32 %v1809, %v4058
    %4060 = vmatprep.mubr.bf16.mxu0 %v1525
    %4061 = vmatmul.mubr.bf16.gmra.mrb[0].mxu0 %v1524
    %v4062 = vpop.f32.mrb[0].mxu0
    %v4063 = vadd.f32 %v1805, %v4062
    %v4064 = vpop.f32.mrb[0].mxu0
    %v4065 = vadd.f32 %v1809, %v4064
    %v4066 = vpop.f32.mrb[0].mxu0
    %v4067 = vadd.f32 %v1805, %v4066
    %v4068 = vpop.f32.mrb[0].mxu0
    %v4069 = vadd.f32 %v1809, %v4068
    %4070 = vdwg.mxu0
    %4071 = vmatprep.subr.bf16.mxu0 %v2727
    %4072 = vmatpush1.bf16.msra.mxu0 %v2726
    %4073 = vmatprep.subr.bf16.mxu0 %v2735
    %4074 = vmatpush1.bf16.msra.mxu0 %v2734
    %4075 = vmatprep.subr.bf16.mxu0 %v2743
    %4076 = vmatpush1.bf16.msra.mxu0 %v2742
    %4077 = vmatprep.subr.bf16.mxu0 %v2751
    %4078 = vmatpush1.bf16.msra.mxu0 %v2750
    %4079 = vmatprep.subr.bf16.mxu0 %v2759
    %4080 = vmatpush1.bf16.msra.mxu0 %v2758
    %4081 = vmatprep.subr.bf16.mxu0 %v2767
    %4082 = vmatpush1.bf16.msra.mxu0 %v2766
    %4083 = vmatprep.subr.bf16.mxu0 %v2775
    %4084 = vmatpush1.bf16.msra.mxu0 %v2774
    %4085 = vmatprep.subr.bf16.mxu0 %v2783
    %4086 = vmatpush1.bf16.msra.mxu0 %v2782
    %4087 = vmatprep.subr.bf16.mxu0 %v2791
    %4088 = vmatpush1.bf16.msra.mxu0 %v2790
    %4089 = vmatprep.subr.bf16.mxu0 %v2799
    %4090 = vmatpush1.bf16.msra.mxu0 %v2798
    %4091 = vmatprep.subr.bf16.mxu0 %v2807
    %4092 = vmatpush1.bf16.msra.mxu0 %v2806
    %4093 = vmatprep.subr.bf16.mxu0 %v2815
    %4094 = vmatpush1.bf16.msra.mxu0 %v2814
    %4095 = vmatprep.subr.bf16.mxu0 %v2823
    %4096 = vmatpush1.bf16.msra.mxu0 %v2822
    %4097 = vmatprep.subr.bf16.mxu0 %v2831
    %4098 = vmatpush1.bf16.msra.mxu0 %v2830
    %4099 = vmatprep.subr.bf16.mxu0 %v2839
    %4100 = vmatpush1.bf16.msra.mxu0 %v2838
    %4101 = vmatprep.subr.bf16.mxu0 %v2847
    %4102 = vmatpush1.bf16.msra.mxu0 %v2846
    %4103 = vmatprep.mubr.bf16.mxu0 %v1467
    %4104 = vmatmul.mubr.bf16.gmra.mrb[0].mxu0 %v1466
    %v4105 = vpop.f32.mrb[0].mxu0
    %v4106 = vadd.f32 %v3913, %v4105
    %v4107 = vpop.f32.mrb[0].mxu0
    %v4108 = vadd.f32 %v3915, %v4107
    %v4109 = vpop.f32.mrb[0].mxu0
    %v4110 = vadd.f32 %v3917, %v4109
    %v4111 = vpop.f32.mrb[0].mxu0
    %v4112 = vadd.f32 %v3919, %v4111
    %4113 = vmatprep.mubr.bf16.mxu0 %v1471
    %4114 = vmatmul.mubr.bf16.gmra.mrb[0].mxu0 %v1470
    %v4115 = vpop.f32.mrb[0].mxu0
    %v4116 = vadd.f32 %v3923, %v4115
    %v4117 = vpop.f32.mrb[0].mxu0
    %v4118 = vadd.f32 %v3925, %v4117
    %v4119 = vpop.f32.mrb[0].mxu0
    %v4120 = vadd.f32 %v3927, %v4119
    %v4121 = vpop.f32.mrb[0].mxu0
    %v4122 = vadd.f32 %v3929, %v4121
    %4123 = vmatprep.mubr.bf16.mxu0 %v1475
    %4124 = vmatmul.mubr.bf16.gmra.mrb[0].mxu0 %v1474
    %v4125 = vpop.f32.mrb[0].mxu0
    %v4126 = vadd.f32 %v3933, %v4125
    %v4127 = vpop.f32.mrb[0].mxu0
    %v4128 = vadd.f32 %v3935, %v4127
    %v4129 = vpop.f32.mrb[0].mxu0
    %v4130 = vadd.f32 %v3937, %v4129
    %v4131 = vpop.f32.mrb[0].mxu0
    %v4132 = vadd.f32 %v3939, %v4131
    %4133 = vmatprep.mubr.bf16.mxu0 %v1479
    %4134 = vmatmul.mubr.bf16.gmra.mrb[0].mxu0 %v1478
    %v4135 = vpop.f32.mrb[0].mxu0
    %v4136 = vadd.f32 %v3943, %v4135
    %v4137 = vpop.f32.mrb[0].mxu0
    %v4138 = vadd.f32 %v3945, %v4137
    %v4139 = vpop.f32.mrb[0].mxu0
    %v4140 = vadd.f32 %v3947, %v4139
    %v4141 = vpop.f32.mrb[0].mxu0
    %v4142 = vadd.f32 %v3949, %v4141
    %4143 = vmatprep.mubr.bf16.mxu0 %v1483
    %4144 = vmatmul.mubr.bf16.gmra.mrb[0].mxu0 %v1482
    %v4145 = vpop.f32.mrb[0].mxu0
    %v4146 = vadd.f32 %v3953, %v4145
    %v4147 = vpop.f32.mrb[0].mxu0
    %v4148 = vadd.f32 %v3955, %v4147
    %v4149 = vpop.f32.mrb[0].mxu0
    %v4150 = vadd.f32 %v3957, %v4149
    %v4151 = vpop.f32.mrb[0].mxu0
    %v4152 = vadd.f32 %v3959, %v4151
    %4153 = vmatprep.mubr.bf16.mxu0 %v1487
    %4154 = vmatmul.mubr.bf16.gmra.mrb[0].mxu0 %v1486
    %v4155 = vpop.f32.mrb[0].mxu0
    %v4156 = vadd.f32 %v3963, %v4155
    %v4157 = vpop.f32.mrb[0].mxu0
    %v4158 = vadd.f32 %v3965, %v4157
    %v4159 = vpop.f32.mrb[0].mxu0
    %v4160 = vadd.f32 %v3967, %v4159
    %v4161 = vpop.f32.mrb[0].mxu0
    %v4162 = vadd.f32 %v3969, %v4161
    %4163 = vmatprep.mubr.bf16.mxu0 %v1491
    %4164 = vmatmul.mubr.bf16.gmra.mrb[0].mxu0 %v1490
    %v4165 = vpop.f32.mrb[0].mxu0
    %v4166 = vadd.f32 %v3973, %v4165
    %v4167 = vpop.f32.mrb[0].mxu0
    %v4168 = vadd.f32 %v3975, %v4167
    %v4169 = vpop.f32.mrb[0].mxu0
    %v4170 = vadd.f32 %v3977, %v4169
    %v4171 = vpop.f32.mrb[0].mxu0
    %v4172 = vadd.f32 %v3979, %v4171
    %4173 = vmatprep.mubr.bf16.mxu0 %v1495
    %4174 = vmatmul.mubr.bf16.gmra.mrb[0].mxu0 %v1494
    %v4175 = vpop.f32.mrb[0].mxu0
    %v4176 = vadd.f32 %v3983, %v4175
    %v4177 = vpop.f32.mrb[0].mxu0
    %v4178 = vadd.f32 %v3985, %v4177
    %v4179 = vpop.f32.mrb[0].mxu0
    %v4180 = vadd.f32 %v3987, %v4179
    %v4181 = vpop.f32.mrb[0].mxu0
    %v4182 = vadd.f32 %v3989, %v4181
    %4183 = vmatprep.mubr.bf16.mxu0 %v1499
    %4184 = vmatmul.mubr.bf16.gmra.mrb[0].mxu0 %v1498
    %v4185 = vpop.f32.mrb[0].mxu0
    %v4186 = vadd.f32 %v3993, %v4185
    %v4187 = vpop.f32.mrb[0].mxu0
    %v4188 = vadd.f32 %v3995, %v4187
    %v4189 = vpop.f32.mrb[0].mxu0
    %v4190 = vadd.f32 %v3997, %v4189
    %v4191 = vpop.f32.mrb[0].mxu0
    %v4192 = vadd.f32 %v3999, %v4191
    %4193 = vmatprep.mubr.bf16.mxu0 %v1503
    %4194 = vmatmul.mubr.bf16.gmra.mrb[0].mxu0 %v1502
    %v4195 = vpop.f32.mrb[0].mxu0
    %v4196 = vadd.f32 %v4003, %v4195
    %v4197 = vpop.f32.mrb[0].mxu0
    %v4198 = vadd.f32 %v4005, %v4197
    %v4199 = vpop.f32.mrb[0].mxu0
    %v4200 = vadd.f32 %v4007, %v4199
    %v4201 = vpop.f32.mrb[0].mxu0
    %v4202 = vadd.f32 %v4009, %v4201
    %4203 = vmatprep.mubr.bf16.mxu0 %v1507
    %4204 = vmatmul.mubr.bf16.gmra.mrb[0].mxu0 %v1506
    %v4205 = vpop.f32.mrb[0].mxu0
    %v4206 = vadd.f32 %v4013, %v4205
    %v4207 = vpop.f32.mrb[0].mxu0
    %v4208 = vadd.f32 %v4015, %v4207
    %v4209 = vpop.f32.mrb[0].mxu0
    %v4210 = vadd.f32 %v4017, %v4209
    %v4211 = vpop.f32.mrb[0].mxu0
    %v4212 = vadd.f32 %v4019, %v4211
    %4213 = vmatprep.mubr.bf16.mxu0 %v1511
    %4214 = vmatmul.mubr.bf16.gmra.mrb[0].mxu0 %v1510
    %v4215 = vpop.f32.mrb[0].mxu0
    %v4216 = vadd.f32 %v4023, %v4215
    %v4217 = vpop.f32.mrb[0].mxu0
    %v4218 = vadd.f32 %v4025, %v4217
    %v4219 = vpop.f32.mrb[0].mxu0
    %v4220 = vadd.f32 %v4027, %v4219
    %v4221 = vpop.f32.mrb[0].mxu0
    %v4222 = vadd.f32 %v4029, %v4221
    %4223 = vmatprep.mubr.bf16.mxu0 %v1515
    %4224 = vmatmul.mubr.bf16.gmra.mrb[0].mxu0 %v1514
    %v4225 = vpop.f32.mrb[0].mxu0
    %v4226 = vadd.f32 %v4033, %v4225
    %v4227 = vpop.f32.mrb[0].mxu0
    %v4228 = vadd.f32 %v4035, %v4227
    %v4229 = vpop.f32.mrb[0].mxu0
    %v4230 = vadd.f32 %v4037, %v4229
    %v4231 = vpop.f32.mrb[0].mxu0
    %v4232 = vadd.f32 %v4039, %v4231
    %4233 = vmatprep.mubr.bf16.mxu0 %v1519
    %4234 = vmatmul.mubr.bf16.gmra.mrb[0].mxu0 %v1518
    %v4235 = vpop.f32.mrb[0].mxu0
    %v4236 = vadd.f32 %v4043, %v4235
    %v4237 = vpop.f32.mrb[0].mxu0
    %v4238 = vadd.f32 %v4045, %v4237
    %v4239 = vpop.f32.mrb[0].mxu0
    %v4240 = vadd.f32 %v4047, %v4239
    %v4241 = vpop.f32.mrb[0].mxu0
    %v4242 = vadd.f32 %v4049, %v4241
    %4243 = vmatprep.mubr.bf16.mxu0 %v1523
    %4244 = vmatmul.mubr.bf16.gmra.mrb[0].mxu0 %v1522
    %v4245 = vpop.f32.mrb[0].mxu0
    %v4246 = vadd.f32 %v4053, %v4245
    %v4247 = vpop.f32.mrb[0].mxu0
    %v4248 = vadd.f32 %v4055, %v4247
    %v4249 = vpop.f32.mrb[0].mxu0
    %v4250 = vadd.f32 %v4057, %v4249
    %v4251 = vpop.f32.mrb[0].mxu0
    %v4252 = vadd.f32 %v4059, %v4251
    %4253 = vmatprep.mubr.bf16.mxu0 %v1527
    %4254 = vmatmul.mubr.bf16.gmra.mrb[0].mxu0 %v1526
    %v4255 = vpop.f32.mrb[0].mxu0
    %v4256 = vadd.f32 %v4063, %v4255
    %v4257 = vpop.f32.mrb[0].mxu0
    %v4258 = vadd.f32 %v4065, %v4257
    %v4259 = vpop.f32.mrb[0].mxu0
    %v4260 = vadd.f32 %v4067, %v4259
    %v4261 = vpop.f32.mrb[0].mxu0
    %v4262 = vadd.f32 %v4069, %v4261
    %4263 = vdwg.mxu0
    %4264 = vmatprep.subr.bf16.mxu0 %v2601
    %4265 = vmatpush1.bf16.msra.mxu0 %v2600
    %4266 = vmatprep.subr.bf16.mxu0 %v2609
    %4267 = vmatpush1.bf16.msra.mxu0 %v2608
    %4268 = vmatprep.subr.bf16.mxu0 %v2617
    %4269 = vmatpush1.bf16.msra.mxu0 %v2616
    %4270 = vmatprep.subr.bf16.mxu0 %v2625
    %4271 = vmatpush1.bf16.msra.mxu0 %v2624
    %4272 = vmatprep.subr.bf16.mxu0 %v2633
    %4273 = vmatpush1.bf16.msra.mxu0 %v2632
    %4274 = vmatprep.subr.bf16.mxu0 %v2641
    %4275 = vmatpush1.bf16.msra.mxu0 %v2640
    %4276 = vmatprep.subr.bf16.mxu0 %v2649
    %4277 = vmatpush1.bf16.msra.mxu0 %v2648
    %4278 = vmatprep.subr.bf16.mxu0 %v2657
    %4279 = vmatpush1.bf16.msra.mxu0 %v2656
    %4280 = vmatprep.subr.bf16.mxu0 %v2665
    %4281 = vmatpush1.bf16.msra.mxu0 %v2664
    %4282 = vmatprep.subr.bf16.mxu0 %v2673
    %4283 = vmatpush1.bf16.msra.mxu0 %v2672
    %4284 = vmatprep.subr.bf16.mxu0 %v2681
    %4285 = vmatpush1.bf16.msra.mxu0 %v2680
    %4286 = vmatprep.subr.bf16.mxu0 %v2689
    %4287 = vmatpush1.bf16.msra.mxu0 %v2688
    %4288 = vmatprep.subr.bf16.mxu0 %v2697
    %4289 = vmatpush1.bf16.msra.mxu0 %v2696
    %4290 = vmatprep.subr.bf16.mxu0 %v2705
    %4291 = vmatpush1.bf16.msra.mxu0 %v2704
    %4292 = vmatprep.subr.bf16.mxu0 %v2713
    %4293 = vmatpush1.bf16.msra.mxu0 %v2712
    %4294 = vmatprep.subr.bf16.mxu0 %v2721
    %4295 = vmatpush1.bf16.msra.mxu0 %v2720
    %4296 = vmatprep.mubr.bf16.mxu0 %v1465
    %4297 = vmatmul.mubr.bf16.gmra.mrb[0].mxu0 %v1464
    %v4298 = vpop.f32.mrb[0].mxu0
    %v4299 = vadd.f32 %v1813, %v4298
    %v4300 = vpop.f32.mrb[0].mxu0
    %v4301 = vadd.f32 %v1817, %v4300
    %v4302 = vpop.f32.mrb[0].mxu0
    %v4303 = vadd.f32 %v1813, %v4302
    %v4304 = vpop.f32.mrb[0].mxu0
    %v4305 = vadd.f32 %v1817, %v4304
    %4306 = vmatprep.mubr.bf16.mxu0 %v1469
    %4307 = vmatmul.mubr.bf16.gmra.mrb[0].mxu0 %v1468
    %v4308 = vpop.f32.mrb[0].mxu0
    %v4309 = vadd.f32 %v1813, %v4308
    %v4310 = vpop.f32.mrb[0].mxu0
    %v4311 = vadd.f32 %v1817, %v4310
    %v4312 = vpop.f32.mrb[0].mxu0
    %v4313 = vadd.f32 %v1813, %v4312
    %v4314 = vpop.f32.mrb[0].mxu0
    %v4315 = vadd.f32 %v1817, %v4314
    %4316 = vmatprep.mubr.bf16.mxu0 %v1473
    %4317 = vmatmul.mubr.bf16.gmra.mrb[0].mxu0 %v1472
    %v4318 = vpop.f32.mrb[0].mxu0
    %v4319 = vadd.f32 %v1813, %v4318
    %v4320 = vpop.f32.mrb[0].mxu0
    %v4321 = vadd.f32 %v1817, %v4320
    %v4322 = vpop.f32.mrb[0].mxu0
    %v4323 = vadd.f32 %v1813, %v4322
    %v4324 = vpop.f32.mrb[0].mxu0
    %v4325 = vadd.f32 %v1817, %v4324
    %4326 = vmatprep.mubr.bf16.mxu0 %v1477
    %4327 = vmatmul.mubr.bf16.gmra.mrb[0].mxu0 %v1476
    %v4328 = vpop.f32.mrb[0].mxu0
    %v4329 = vadd.f32 %v1813, %v4328
    %v4330 = vpop.f32.mrb[0].mxu0
    %v4331 = vadd.f32 %v1817, %v4330
    %v4332 = vpop.f32.mrb[0].mxu0
    %v4333 = vadd.f32 %v1813, %v4332
    %v4334 = vpop.f32.mrb[0].mxu0
    %v4335 = vadd.f32 %v1817, %v4334
    %4336 = vmatprep.mubr.bf16.mxu0 %v1481
    %4337 = vmatmul.mubr.bf16.gmra.mrb[0].mxu0 %v1480
    %v4338 = vpop.f32.mrb[0].mxu0
    %v4339 = vadd.f32 %v1813, %v4338
    %v4340 = vpop.f32.mrb[0].mxu0
    %v4341 = vadd.f32 %v1817, %v4340
    %v4342 = vpop.f32.mrb[0].mxu0
    %v4343 = vadd.f32 %v1813, %v4342
    %v4344 = vpop.f32.mrb[0].mxu0
    %v4345 = vadd.f32 %v1817, %v4344
    %4346 = vmatprep.mubr.bf16.mxu0 %v1485
    %4347 = vmatmul.mubr.bf16.gmra.mrb[0].mxu0 %v1484
    %v4348 = vpop.f32.mrb[0].mxu0
    %v4349 = vadd.f32 %v1813, %v4348
    %v4350 = vpop.f32.mrb[0].mxu0
    %v4351 = vadd.f32 %v1817, %v4350
    %v4352 = vpop.f32.mrb[0].mxu0
    %v4353 = vadd.f32 %v1813, %v4352
    %v4354 = vpop.f32.mrb[0].mxu0
    %v4355 = vadd.f32 %v1817, %v4354
    %4356 = vmatprep.mubr.bf16.mxu0 %v1489
    %4357 = vmatmul.mubr.bf16.gmra.mrb[0].mxu0 %v1488
    %v4358 = vpop.f32.mrb[0].mxu0
    %v4359 = vadd.f32 %v1813, %v4358
    %v4360 = vpop.f32.mrb[0].mxu0
    %v4361 = vadd.f32 %v1817, %v4360
    %v4362 = vpop.f32.mrb[0].mxu0
    %v4363 = vadd.f32 %v1813, %v4362
    %v4364 = vpop.f32.mrb[0].mxu0
    %v4365 = vadd.f32 %v1817, %v4364
    %4366 = vmatprep.mubr.bf16.mxu0 %v1493
    %4367 = vmatmul.mubr.bf16.gmra.mrb[0].mxu0 %v1492
    %v4368 = vpop.f32.mrb[0].mxu0
    %v4369 = vadd.f32 %v1813, %v4368
    %v4370 = vpop.f32.mrb[0].mxu0
    %v4371 = vadd.f32 %v1817, %v4370
    %v4372 = vpop.f32.mrb[0].mxu0
    %v4373 = vadd.f32 %v1813, %v4372
    %v4374 = vpop.f32.mrb[0].mxu0
    %v4375 = vadd.f32 %v1817, %v4374
    %4376 = vmatprep.mubr.bf16.mxu0 %v1497
    %4377 = vmatmul.mubr.bf16.gmra.mrb[0].mxu0 %v1496
    %v4378 = vpop.f32.mrb[0].mxu0
    %v4379 = vadd.f32 %v1813, %v4378
    %v4380 = vpop.f32.mrb[0].mxu0
    %v4381 = vadd.f32 %v1817, %v4380
    %v4382 = vpop.f32.mrb[0].mxu0
    %v4383 = vadd.f32 %v1813, %v4382
    %v4384 = vpop.f32.mrb[0].mxu0
    %v4385 = vadd.f32 %v1817, %v4384
    %4386 = vmatprep.mubr.bf16.mxu0 %v1501
    %4387 = vmatmul.mubr.bf16.gmra.mrb[0].mxu0 %v1500
    %v4388 = vpop.f32.mrb[0].mxu0
    %v4389 = vadd.f32 %v1813, %v4388
    %v4390 = vpop.f32.mrb[0].mxu0
    %v4391 = vadd.f32 %v1817, %v4390
    %v4392 = vpop.f32.mrb[0].mxu0
    %v4393 = vadd.f32 %v1813, %v4392
    %v4394 = vpop.f32.mrb[0].mxu0
    %v4395 = vadd.f32 %v1817, %v4394
    %4396 = vmatprep.mubr.bf16.mxu0 %v1505
    %4397 = vmatmul.mubr.bf16.gmra.mrb[0].mxu0 %v1504
    %v4398 = vpop.f32.mrb[0].mxu0
    %v4399 = vadd.f32 %v1813, %v4398
    %v4400 = vpop.f32.mrb[0].mxu0
    %v4401 = vadd.f32 %v1817, %v4400
    %v4402 = vpop.f32.mrb[0].mxu0
    %v4403 = vadd.f32 %v1813, %v4402
    %v4404 = vpop.f32.mrb[0].mxu0
    %v4405 = vadd.f32 %v1817, %v4404
    %4406 = vmatprep.mubr.bf16.mxu0 %v1509
    %4407 = vmatmul.mubr.bf16.gmra.mrb[0].mxu0 %v1508
    %v4408 = vpop.f32.mrb[0].mxu0
    %v4409 = vadd.f32 %v1813, %v4408
    %v4410 = vpop.f32.mrb[0].mxu0
    %v4411 = vadd.f32 %v1817, %v4410
    %v4412 = vpop.f32.mrb[0].mxu0
    %v4413 = vadd.f32 %v1813, %v4412
    %v4414 = vpop.f32.mrb[0].mxu0
    %v4415 = vadd.f32 %v1817, %v4414
    %4416 = vmatprep.mubr.bf16.mxu0 %v1513
    %4417 = vmatmul.mubr.bf16.gmra.mrb[0].mxu0 %v1512
    %v4418 = vpop.f32.mrb[0].mxu0
    %v4419 = vadd.f32 %v1813, %v4418
    %v4420 = vpop.f32.mrb[0].mxu0
    %v4421 = vadd.f32 %v1817, %v4420
    %v4422 = vpop.f32.mrb[0].mxu0
    %v4423 = vadd.f32 %v1813, %v4422
    %v4424 = vpop.f32.mrb[0].mxu0
    %v4425 = vadd.f32 %v1817, %v4424
    %4426 = vmatprep.mubr.bf16.mxu0 %v1517
    %4427 = vmatmul.mubr.bf16.gmra.mrb[0].mxu0 %v1516
    %v4428 = vpop.f32.mrb[0].mxu0
    %v4429 = vadd.f32 %v1813, %v4428
    %v4430 = vpop.f32.mrb[0].mxu0
    %v4431 = vadd.f32 %v1817, %v4430
    %v4432 = vpop.f32.mrb[0].mxu0
    %v4433 = vadd.f32 %v1813, %v4432
    %v4434 = vpop.f32.mrb[0].mxu0
    %v4435 = vadd.f32 %v1817, %v4434
    %4436 = vmatprep.mubr.bf16.mxu0 %v1521
    %4437 = vmatmul.mubr.bf16.gmra.mrb[0].mxu0 %v1520
    %v4438 = vpop.f32.mrb[0].mxu0
    %v4439 = vadd.f32 %v1813, %v4438
    %v4440 = vpop.f32.mrb[0].mxu0
    %v4441 = vadd.f32 %v1817, %v4440
    %v4442 = vpop.f32.mrb[0].mxu0
    %v4443 = vadd.f32 %v1813, %v4442
    %v4444 = vpop.f32.mrb[0].mxu0
    %v4445 = vadd.f32 %v1817, %v4444
    %4446 = vmatprep.mubr.bf16.mxu0 %v1525
    %4447 = vmatmul.mubr.bf16.gmra.mrb[0].mxu0 %v1524
    %v4448 = vpop.f32.mrb[0].mxu0
    %v4449 = vadd.f32 %v1813, %v4448
    %v4450 = vpop.f32.mrb[0].mxu0
    %v4451 = vadd.f32 %v1817, %v4450
    %v4452 = vpop.f32.mrb[0].mxu0
    %v4453 = vadd.f32 %v1813, %v4452
    %v4454 = vpop.f32.mrb[0].mxu0
    %v4455 = vadd.f32 %v1817, %v4454
    %4456 = vdwg.mxu0
    %4457 = vmatprep.subr.bf16.mxu0 %v2729
    %4458 = vmatpush1.bf16.msra.mxu0 %v2728
    %4459 = vmatprep.subr.bf16.mxu0 %v2737
    %4460 = vmatpush1.bf16.msra.mxu0 %v2736
    %4461 = vmatprep.subr.bf16.mxu0 %v2745
    %4462 = vmatpush1.bf16.msra.mxu0 %v2744
    %4463 = vmatprep.subr.bf16.mxu0 %v2753
    %4464 = vmatpush1.bf16.msra.mxu0 %v2752
    %4465 = vmatprep.subr.bf16.mxu0 %v2761
    %4466 = vmatpush1.bf16.msra.mxu0 %v2760
    %4467 = vmatprep.subr.bf16.mxu0 %v2769
    %4468 = vmatpush1.bf16.msra.mxu0 %v2768
    %4469 = vmatprep.subr.bf16.mxu0 %v2777
    %4470 = vmatpush1.bf16.msra.mxu0 %v2776
    %4471 = vmatprep.subr.bf16.mxu0 %v2785
    %4472 = vmatpush1.bf16.msra.mxu0 %v2784
    %4473 = vmatprep.subr.bf16.mxu0 %v2793
    %4474 = vmatpush1.bf16.msra.mxu0 %v2792
    %4475 = vmatprep.subr.bf16.mxu0 %v2801
    %4476 = vmatpush1.bf16.msra.mxu0 %v2800
    %4477 = vmatprep.subr.bf16.mxu0 %v2809
    %4478 = vmatpush1.bf16.msra.mxu0 %v2808
    %4479 = vmatprep.subr.bf16.mxu0 %v2817
    %4480 = vmatpush1.bf16.msra.mxu0 %v2816
    %4481 = vmatprep.subr.bf16.mxu0 %v2825
    %4482 = vmatpush1.bf16.msra.mxu0 %v2824
    %4483 = vmatprep.subr.bf16.mxu0 %v2833
    %4484 = vmatpush1.bf16.msra.mxu0 %v2832
    %4485 = vmatprep.subr.bf16.mxu0 %v2841
    %4486 = vmatpush1.bf16.msra.mxu0 %v2840
    %4487 = vmatprep.subr.bf16.mxu0 %v2849
    %4488 = vmatpush1.bf16.msra.mxu0 %v2848
    %4489 = vmatprep.mubr.bf16.mxu0 %v1467
    %4490 = vmatmul.mubr.bf16.gmra.mrb[0].mxu0 %v1466
    %v4491 = vpop.f32.mrb[0].mxu0
    %v4492 = vadd.f32 %v4299, %v4491
    %v4493 = vpop.f32.mrb[0].mxu0
    %v4494 = vadd.f32 %v4301, %v4493
    %v4495 = vpop.f32.mrb[0].mxu0
    %v4496 = vadd.f32 %v4303, %v4495
    %v4497 = vpop.f32.mrb[0].mxu0
    %v4498 = vadd.f32 %v4305, %v4497
    %4499 = vmatprep.mubr.bf16.mxu0 %v1471
    %4500 = vmatmul.mubr.bf16.gmra.mrb[0].mxu0 %v1470
    %v4501 = vpop.f32.mrb[0].mxu0
    %v4502 = vadd.f32 %v4309, %v4501
    %v4503 = vpop.f32.mrb[0].mxu0
    %v4504 = vadd.f32 %v4311, %v4503
    %v4505 = vpop.f32.mrb[0].mxu0
    %v4506 = vadd.f32 %v4313, %v4505
    %v4507 = vpop.f32.mrb[0].mxu0
    %v4508 = vadd.f32 %v4315, %v4507
    %4509 = vmatprep.mubr.bf16.mxu0 %v1475
    %4510 = vmatmul.mubr.bf16.gmra.mrb[0].mxu0 %v1474
    %v4511 = vpop.f32.mrb[0].mxu0
    %v4512 = vadd.f32 %v4319, %v4511
    %v4513 = vpop.f32.mrb[0].mxu0
    %v4514 = vadd.f32 %v4321, %v4513
    %v4515 = vpop.f32.mrb[0].mxu0
    %v4516 = vadd.f32 %v4323, %v4515
    %v4517 = vpop.f32.mrb[0].mxu0
    %v4518 = vadd.f32 %v4325, %v4517
    %4519 = vmatprep.mubr.bf16.mxu0 %v1479
    %4520 = vmatmul.mubr.bf16.gmra.mrb[0].mxu0 %v1478
    %v4521 = vpop.f32.mrb[0].mxu0
    %v4522 = vadd.f32 %v4329, %v4521
    %v4523 = vpop.f32.mrb[0].mxu0
    %v4524 = vadd.f32 %v4331, %v4523
    %v4525 = vpop.f32.mrb[0].mxu0
    %v4526 = vadd.f32 %v4333, %v4525
    %v4527 = vpop.f32.mrb[0].mxu0
    %v4528 = vadd.f32 %v4335, %v4527
    %4529 = vmatprep.mubr.bf16.mxu0 %v1483
    %4530 = vmatmul.mubr.bf16.gmra.mrb[0].mxu0 %v1482
    %v4531 = vpop.f32.mrb[0].mxu0
    %v4532 = vadd.f32 %v4339, %v4531
    %v4533 = vpop.f32.mrb[0].mxu0
    %v4534 = vadd.f32 %v4341, %v4533
    %v4535 = vpop.f32.mrb[0].mxu0
    %v4536 = vadd.f32 %v4343, %v4535
    %v4537 = vpop.f32.mrb[0].mxu0
    %v4538 = vadd.f32 %v4345, %v4537
    %4539 = vmatprep.mubr.bf16.mxu0 %v1487
    %4540 = vmatmul.mubr.bf16.gmra.mrb[0].mxu0 %v1486
    %v4541 = vpop.f32.mrb[0].mxu0
    %v4542 = vadd.f32 %v4349, %v4541
    %v4543 = vpop.f32.mrb[0].mxu0
    %v4544 = vadd.f32 %v4351, %v4543
    %v4545 = vpop.f32.mrb[0].mxu0
    %v4546 = vadd.f32 %v4353, %v4545
    %v4547 = vpop.f32.mrb[0].mxu0
    %v4548 = vadd.f32 %v4355, %v4547
    %4549 = vmatprep.mubr.bf16.mxu0 %v1491
    %4550 = vmatmul.mubr.bf16.gmra.mrb[0].mxu0 %v1490
    %v4551 = vpop.f32.mrb[0].mxu0
    %v4552 = vadd.f32 %v4359, %v4551
    %v4553 = vpop.f32.mrb[0].mxu0
    %v4554 = vadd.f32 %v4361, %v4553
    %v4555 = vpop.f32.mrb[0].mxu0
    %v4556 = vadd.f32 %v4363, %v4555
    %v4557 = vpop.f32.mrb[0].mxu0
    %v4558 = vadd.f32 %v4365, %v4557
    %4559 = vmatprep.mubr.bf16.mxu0 %v1495
    %4560 = vmatmul.mubr.bf16.gmra.mrb[0].mxu0 %v1494
    %v4561 = vpop.f32.mrb[0].mxu0
    %v4562 = vadd.f32 %v4369, %v4561
    %v4563 = vpop.f32.mrb[0].mxu0
    %v4564 = vadd.f32 %v4371, %v4563
    %v4565 = vpop.f32.mrb[0].mxu0
    %v4566 = vadd.f32 %v4373, %v4565
    %v4567 = vpop.f32.mrb[0].mxu0
    %v4568 = vadd.f32 %v4375, %v4567
    %4569 = vmatprep.mubr.bf16.mxu0 %v1499
    %4570 = vmatmul.mubr.bf16.gmra.mrb[0].mxu0 %v1498
    %v4571 = vpop.f32.mrb[0].mxu0
    %v4572 = vadd.f32 %v4379, %v4571
    %v4573 = vpop.f32.mrb[0].mxu0
    %v4574 = vadd.f32 %v4381, %v4573
    %v4575 = vpop.f32.mrb[0].mxu0
    %v4576 = vadd.f32 %v4383, %v4575
    %v4577 = vpop.f32.mrb[0].mxu0
    %v4578 = vadd.f32 %v4385, %v4577
    %4579 = vmatprep.mubr.bf16.mxu0 %v1503
    %4580 = vmatmul.mubr.bf16.gmra.mrb[0].mxu0 %v1502
    %v4581 = vpop.f32.mrb[0].mxu0
    %v4582 = vadd.f32 %v4389, %v4581
    %v4583 = vpop.f32.mrb[0].mxu0
    %v4584 = vadd.f32 %v4391, %v4583
    %v4585 = vpop.f32.mrb[0].mxu0
    %v4586 = vadd.f32 %v4393, %v4585
    %v4587 = vpop.f32.mrb[0].mxu0
    %v4588 = vadd.f32 %v4395, %v4587
    %4589 = vmatprep.mubr.bf16.mxu0 %v1507
    %4590 = vmatmul.mubr.bf16.gmra.mrb[0].mxu0 %v1506
    %v4591 = vpop.f32.mrb[0].mxu0
    %v4592 = vadd.f32 %v4399, %v4591
    %v4593 = vpop.f32.mrb[0].mxu0
    %v4594 = vadd.f32 %v4401, %v4593
    %v4595 = vpop.f32.mrb[0].mxu0
    %v4596 = vadd.f32 %v4403, %v4595
    %v4597 = vpop.f32.mrb[0].mxu0
    %v4598 = vadd.f32 %v4405, %v4597
    %4599 = vmatprep.mubr.bf16.mxu0 %v1511
    %4600 = vmatmul.mubr.bf16.gmra.mrb[0].mxu0 %v1510
    %v4601 = vpop.f32.mrb[0].mxu0
    %v4602 = vadd.f32 %v4409, %v4601
    %v4603 = vpop.f32.mrb[0].mxu0
    %v4604 = vadd.f32 %v4411, %v4603
    %v4605 = vpop.f32.mrb[0].mxu0
    %v4606 = vadd.f32 %v4413, %v4605
    %v4607 = vpop.f32.mrb[0].mxu0
    %v4608 = vadd.f32 %v4415, %v4607
    %4609 = vmatprep.mubr.bf16.mxu0 %v1515
    %4610 = vmatmul.mubr.bf16.gmra.mrb[0].mxu0 %v1514
    %v4611 = vpop.f32.mrb[0].mxu0
    %v4612 = vadd.f32 %v4419, %v4611
    %v4613 = vpop.f32.mrb[0].mxu0
    %v4614 = vadd.f32 %v4421, %v4613
    %v4615 = vpop.f32.mrb[0].mxu0
    %v4616 = vadd.f32 %v4423, %v4615
    %v4617 = vpop.f32.mrb[0].mxu0
    %v4618 = vadd.f32 %v4425, %v4617
    %4619 = vmatprep.mubr.bf16.mxu0 %v1519
    %4620 = vmatmul.mubr.bf16.gmra.mrb[0].mxu0 %v1518
    %v4621 = vpop.f32.mrb[0].mxu0
    %v4622 = vadd.f32 %v4429, %v4621
    %v4623 = vpop.f32.mrb[0].mxu0
    %v4624 = vadd.f32 %v4431, %v4623
    %v4625 = vpop.f32.mrb[0].mxu0
    %v4626 = vadd.f32 %v4433, %v4625
    %v4627 = vpop.f32.mrb[0].mxu0
    %v4628 = vadd.f32 %v4435, %v4627
    %4629 = vmatprep.mubr.bf16.mxu0 %v1523
    %4630 = vmatmul.mubr.bf16.gmra.mrb[0].mxu0 %v1522
    %v4631 = vpop.f32.mrb[0].mxu0
    %v4632 = vadd.f32 %v4439, %v4631
    %v4633 = vpop.f32.mrb[0].mxu0
    %v4634 = vadd.f32 %v4441, %v4633
    %v4635 = vpop.f32.mrb[0].mxu0
    %v4636 = vadd.f32 %v4443, %v4635
    %v4637 = vpop.f32.mrb[0].mxu0
    %v4638 = vadd.f32 %v4445, %v4637
    %4639 = vmatprep.mubr.bf16.mxu0 %v1527
    %4640 = vmatmul.mubr.bf16.gmra.mrb[0].mxu0 %v1526
    %v4641 = vpop.f32.mrb[0].mxu0
    %v4642 = vadd.f32 %v4449, %v4641
    %v4643 = vpop.f32.mrb[0].mxu0
    %v4644 = vadd.f32 %v4451, %v4643
    %v4645 = vpop.f32.mrb[0].mxu0
    %v4646 = vadd.f32 %v4453, %v4645
    %v4647 = vpop.f32.mrb[0].mxu0
    %v4648 = vadd.f32 %v4455, %v4647
    %4649 = vdwg.mxu0
    %v4650 = vmax.f32 %v3334, 0.0
    %v4651 = vmax.f32 %v3336, 0.0
    %v4652 = vmax.f32 %v3720, 0.0
    %v4653 = vmax.f32 %v3722, 0.0
    %v4654 = vmax.f32 %v4106, 0.0
    %v4655 = vmax.f32 %v4108, 0.0
    %v4656 = vmax.f32 %v4492, 0.0
    %v4657 = vmax.f32 %v4494, 0.0
    %v4658 = vmax.f32 %v3338, 0.0
    %v4659 = vmax.f32 %v3340, 0.0
    %v4660 = vmax.f32 %v3724, 0.0
    %v4661 = vmax.f32 %v3726, 0.0
    %v4662 = vmax.f32 %v4110, 0.0
    %v4663 = vmax.f32 %v4112, 0.0
    %v4664 = vmax.f32 %v4496, 0.0
    %v4665 = vmax.f32 %v4498, 0.0
    %v4666 = vmax.f32 %v3344, 0.0
    %v4667 = vmax.f32 %v3346, 0.0
    %v4668 = vmax.f32 %v3730, 0.0
    %v4669 = vmax.f32 %v3732, 0.0
    %v4670 = vmax.f32 %v4116, 0.0
    %v4671 = vmax.f32 %v4118, 0.0
    %v4672 = vmax.f32 %v4502, 0.0
    %v4673 = vmax.f32 %v4504, 0.0
    %v4674 = vmax.f32 %v3348, 0.0
    %v4675 = vmax.f32 %v3350, 0.0
    %v4676 = vmax.f32 %v3734, 0.0
    %v4677 = vmax.f32 %v3736, 0.0
    %v4678 = vmax.f32 %v4120, 0.0
    %v4679 = vmax.f32 %v4122, 0.0
    %v4680 = vmax.f32 %v4506, 0.0
    %v4681 = vmax.f32 %v4508, 0.0
    %v4682 = vmax.f32 %v3354, 0.0
    %v4683 = vmax.f32 %v3356, 0.0
    %v4684 = vmax.f32 %v3740, 0.0
    %v4685 = vmax.f32 %v3742, 0.0
    %v4686 = vmax.f32 %v4126, 0.0
    %v4687 = vmax.f32 %v4128, 0.0
    %v4688 = vmax.f32 %v4512, 0.0
    %v4689 = vmax.f32 %v4514, 0.0
    %v4690 = vmax.f32 %v3358, 0.0
    %v4691 = vmax.f32 %v3360, 0.0
    %v4692 = vmax.f32 %v3744, 0.0
    %v4693 = vmax.f32 %v3746, 0.0
    %v4694 = vmax.f32 %v4130, 0.0
    %v4695 = vmax.f32 %v4132, 0.0
    %v4696 = vmax.f32 %v4516, 0.0
    %v4697 = vmax.f32 %v4518, 0.0
    %v4698 = vmax.f32 %v3364, 0.0
    %v4699 = vmax.f32 %v3366, 0.0
    %v4700 = vmax.f32 %v3750, 0.0
    %v4701 = vmax.f32 %v3752, 0.0
    %v4702 = vmax.f32 %v4136, 0.0
    %v4703 = vmax.f32 %v4138, 0.0
    %v4704 = vmax.f32 %v4522, 0.0
    %v4705 = vmax.f32 %v4524, 0.0
    %v4706 = vmax.f32 %v3368, 0.0
    %v4707 = vmax.f32 %v3370, 0.0
    %v4708 = vmax.f32 %v3754, 0.0
    %v4709 = vmax.f32 %v3756, 0.0
    %v4710 = vmax.f32 %v4140, 0.0
    %v4711 = vmax.f32 %v4142, 0.0
    %v4712 = vmax.f32 %v4526, 0.0
    %v4713 = vmax.f32 %v4528, 0.0
    %v4714 = vmax.f32 %v3374, 0.0
    %v4715 = vmax.f32 %v3376, 0.0
    %v4716 = vmax.f32 %v3760, 0.0
    %v4717 = vmax.f32 %v3762, 0.0
    %v4718 = vmax.f32 %v4146, 0.0
    %v4719 = vmax.f32 %v4148, 0.0
    %v4720 = vmax.f32 %v4532, 0.0
    %v4721 = vmax.f32 %v4534, 0.0
    %v4722 = vmax.f32 %v3378, 0.0
    %v4723 = vmax.f32 %v3380, 0.0
    %v4724 = vmax.f32 %v3764, 0.0
    %v4725 = vmax.f32 %v3766, 0.0
    %v4726 = vmax.f32 %v4150, 0.0
    %v4727 = vmax.f32 %v4152, 0.0
    %v4728 = vmax.f32 %v4536, 0.0
    %v4729 = vmax.f32 %v4538, 0.0
    %v4730 = vmax.f32 %v3384, 0.0
    %v4731 = vmax.f32 %v3386, 0.0
    %v4732 = vmax.f32 %v3770, 0.0
    %v4733 = vmax.f32 %v3772, 0.0
    %v4734 = vmax.f32 %v4156, 0.0
    %v4735 = vmax.f32 %v4158, 0.0
    %v4736 = vmax.f32 %v4542, 0.0
    %v4737 = vmax.f32 %v4544, 0.0
    %v4738 = vmax.f32 %v3388, 0.0
    %v4739 = vmax.f32 %v3390, 0.0
    %v4740 = vmax.f32 %v3774, 0.0
    %v4741 = vmax.f32 %v3776, 0.0
    %v4742 = vmax.f32 %v4160, 0.0
    %v4743 = vmax.f32 %v4162, 0.0
    %v4744 = vmax.f32 %v4546, 0.0
    %v4745 = vmax.f32 %v4548, 0.0
    %v4746 = vmax.f32 %v3394, 0.0
    %v4747 = vmax.f32 %v3396, 0.0
    %v4748 = vmax.f32 %v3780, 0.0
    %v4749 = vmax.f32 %v3782, 0.0
    %v4750 = vmax.f32 %v4166, 0.0
    %v4751 = vmax.f32 %v4168, 0.0
    %v4752 = vmax.f32 %v4552, 0.0
    %v4753 = vmax.f32 %v4554, 0.0
    %v4754 = vmax.f32 %v3398, 0.0
    %v4755 = vmax.f32 %v3400, 0.0
    %v4756 = vmax.f32 %v3784, 0.0
    %v4757 = vmax.f32 %v3786, 0.0
    %v4758 = vmax.f32 %v4170, 0.0
    %v4759 = vmax.f32 %v4172, 0.0
    %v4760 = vmax.f32 %v4556, 0.0
    %v4761 = vmax.f32 %v4558, 0.0
    %v4762 = vmax.f32 %v3404, 0.0
    %v4763 = vmax.f32 %v3406, 0.0
    %v4764 = vmax.f32 %v3790, 0.0
    %v4765 = vmax.f32 %v3792, 0.0
    %v4766 = vmax.f32 %v4176, 0.0
    %v4767 = vmax.f32 %v4178, 0.0
    %v4768 = vmax.f32 %v4562, 0.0
    %v4769 = vmax.f32 %v4564, 0.0
    %v4770 = vmax.f32 %v3408, 0.0
    %v4771 = vmax.f32 %v3410, 0.0
    %v4772 = vmax.f32 %v3794, 0.0
    %v4773 = vmax.f32 %v3796, 0.0
    %v4774 = vmax.f32 %v4180, 0.0
    %v4775 = vmax.f32 %v4182, 0.0
    %v4776 = vmax.f32 %v4566, 0.0
    %v4777 = vmax.f32 %v4568, 0.0
    %v4778 = vmax.f32 %v3414, 0.0
    %v4779 = vmax.f32 %v3416, 0.0
    %v4780 = vmax.f32 %v3800, 0.0
    %v4781 = vmax.f32 %v3802, 0.0
    %v4782 = vmax.f32 %v4186, 0.0
    %v4783 = vmax.f32 %v4188, 0.0
    %v4784 = vmax.f32 %v4572, 0.0
    %v4785 = vmax.f32 %v4574, 0.0
    %v4786 = vmax.f32 %v3418, 0.0
    %v4787 = vmax.f32 %v3420, 0.0
    %v4788 = vmax.f32 %v3804, 0.0
    %v4789 = vmax.f32 %v3806, 0.0
    %v4790 = vmax.f32 %v4190, 0.0
    %v4791 = vmax.f32 %v4192, 0.0
    %v4792 = vmax.f32 %v4576, 0.0
    %v4793 = vmax.f32 %v4578, 0.0
    %v4794 = vmax.f32 %v3424, 0.0
    %v4795 = vmax.f32 %v3426, 0.0
    %v4796 = vmax.f32 %v3810, 0.0
    %v4797 = vmax.f32 %v3812, 0.0
    %v4798 = vmax.f32 %v4196, 0.0
    %v4799 = vmax.f32 %v4198, 0.0
    %v4800 = vmax.f32 %v4582, 0.0
    %v4801 = vmax.f32 %v4584, 0.0
    %v4802 = vmax.f32 %v3428, 0.0
    %v4803 = vmax.f32 %v3430, 0.0
    %v4804 = vmax.f32 %v3814, 0.0
    %v4805 = vmax.f32 %v3816, 0.0
    %v4806 = vmax.f32 %v4200, 0.0
    %v4807 = vmax.f32 %v4202, 0.0
    %v4808 = vmax.f32 %v4586, 0.0
    %v4809 = vmax.f32 %v4588, 0.0
    %v4810 = vmax.f32 %v3434, 0.0
    %v4811 = vmax.f32 %v3436, 0.0
    %v4812 = vmax.f32 %v3820, 0.0
    %v4813 = vmax.f32 %v3822, 0.0
    %v4814 = vmax.f32 %v4206, 0.0
    %v4815 = vmax.f32 %v4208, 0.0
    %v4816 = vmax.f32 %v4592, 0.0
    %v4817 = vmax.f32 %v4594, 0.0
    %v4818 = vmax.f32 %v3438, 0.0
    %v4819 = vmax.f32 %v3440, 0.0
    %v4820 = vmax.f32 %v3824, 0.0
    %v4821 = vmax.f32 %v3826, 0.0
    %v4822 = vmax.f32 %v4210, 0.0
    %v4823 = vmax.f32 %v4212, 0.0
    %v4824 = vmax.f32 %v4596, 0.0
    %v4825 = vmax.f32 %v4598, 0.0
    %v4826 = vmax.f32 %v3444, 0.0
    %v4827 = vmax.f32 %v3446, 0.0
    %v4828 = vmax.f32 %v3830, 0.0
    %v4829 = vmax.f32 %v3832, 0.0
    %v4830 = vmax.f32 %v4216, 0.0
    %v4831 = vmax.f32 %v4218, 0.0
    %v4832 = vmax.f32 %v4602, 0.0
    %v4833 = vmax.f32 %v4604, 0.0
    %v4834 = vmax.f32 %v3448, 0.0
    %v4835 = vmax.f32 %v3450, 0.0
    %v4836 = vmax.f32 %v3834, 0.0
    %v4837 = vmax.f32 %v3836, 0.0
    %v4838 = vmax.f32 %v4220, 0.0
    %v4839 = vmax.f32 %v4222, 0.0
    %v4840 = vmax.f32 %v4606, 0.0
    %v4841 = vmax.f32 %v4608, 0.0
    %v4842 = vmax.f32 %v3454, 0.0
    %v4843 = vmax.f32 %v3456, 0.0
    %v4844 = vmax.f32 %v3840, 0.0
    %v4845 = vmax.f32 %v3842, 0.0
    %v4846 = vmax.f32 %v4226, 0.0
    %v4847 = vmax.f32 %v4228, 0.0
    %v4848 = vmax.f32 %v4612, 0.0
    %v4849 = vmax.f32 %v4614, 0.0
    %v4850 = vmax.f32 %v3458, 0.0
    %v4851 = vmax.f32 %v3460, 0.0
    %v4852 = vmax.f32 %v3844, 0.0
    %v4853 = vmax.f32 %v3846, 0.0
    %v4854 = vmax.f32 %v4230, 0.0
    %v4855 = vmax.f32 %v4232, 0.0
    %v4856 = vmax.f32 %v4616, 0.0
    %v4857 = vmax.f32 %v4618, 0.0
    %v4858 = vmax.f32 %v3464, 0.0
    %v4859 = vmax.f32 %v3466, 0.0
    %v4860 = vmax.f32 %v3850, 0.0
    %v4861 = vmax.f32 %v3852, 0.0
    %v4862 = vmax.f32 %v4236, 0.0
    %v4863 = vmax.f32 %v4238, 0.0
    %v4864 = vmax.f32 %v4622, 0.0
    %v4865 = vmax.f32 %v4624, 0.0
    %v4866 = vmax.f32 %v3468, 0.0
    %v4867 = vmax.f32 %v3470, 0.0
    %v4868 = vmax.f32 %v3854, 0.0
    %v4869 = vmax.f32 %v3856, 0.0
    %v4870 = vmax.f32 %v4240, 0.0
    %v4871 = vmax.f32 %v4242, 0.0
    %v4872 = vmax.f32 %v4626, 0.0
    %v4873 = vmax.f32 %v4628, 0.0
    %v4874 = vmax.f32 %v3474, 0.0
    %v4875 = vmax.f32 %v3476, 0.0
    %v4876 = vmax.f32 %v3860, 0.0
    %v4877 = vmax.f32 %v3862, 0.0
    %v4878 = vmax.f32 %v4246, 0.0
    %v4879 = vmax.f32 %v4248, 0.0
    %v4880 = vmax.f32 %v4632, 0.0
    %v4881 = vmax.f32 %v4634, 0.0
    %v4882 = vmax.f32 %v3478, 0.0
    %v4883 = vmax.f32 %v3480, 0.0
    %v4884 = vmax.f32 %v3864, 0.0
    %v4885 = vmax.f32 %v3866, 0.0
    %v4886 = vmax.f32 %v4250, 0.0
    %v4887 = vmax.f32 %v4252, 0.0
    %v4888 = vmax.f32 %v4636, 0.0
    %v4889 = vmax.f32 %v4638, 0.0
    %v4890 = vmax.f32 %v3484, 0.0
    %v4891 = vmax.f32 %v3486, 0.0
    %v4892 = vmax.f32 %v3870, 0.0
    %v4893 = vmax.f32 %v3872, 0.0
    %v4894 = vmax.f32 %v4256, 0.0
    %v4895 = vmax.f32 %v4258, 0.0
    %v4896 = vmax.f32 %v4642, 0.0
    %v4897 = vmax.f32 %v4644, 0.0
    %v4898 = vmax.f32 %v3488, 0.0
    %v4899 = vmax.f32 %v3490, 0.0
    %v4900 = vmax.f32 %v3874, 0.0
    %v4901 = vmax.f32 %v3876, 0.0
    %v4902 = vmax.f32 %v4260, 0.0
    %v4903 = vmax.f32 %v4262, 0.0
    %v4904 = vmax.f32 %v4646, 0.0
    %v4905 = vmax.f32 %v4648, 0.0
    %v4906 = vld [vmem:[%s6] sm:$0xff]
    %v4907 = vld [vmem:[%s6 + $0x8] sm:$0xff]
    %v4908 = vld [vmem:[%s6 + $0x10] sm:$0xff]
    %v4909 = vld [vmem:[%s6 + $0x18] sm:$0xff]
    %v4910 = vld [vmem:[%s6 + $0x20] sm:$0xff]
    %v4911 = vld [vmem:[%s6 + $0x28] sm:$0xff]
    %v4912 = vld [vmem:[%s6 + $0x30] sm:$0xff]
    %v4913 = vld [vmem:[%s6 + $0x38] sm:$0xff]
    %v4914 = vld [vmem:[%s6 + $0x40] sm:$0xff]
    %v4915 = vld [vmem:[%s6 + $0x48] sm:$0xff]
    %v4916 = vld [vmem:[%s6 + $0x50] sm:$0xff]
    %v4917 = vld [vmem:[%s6 + $0x58] sm:$0xff]
    %v4918 = vld [vmem:[%s6 + $0x60] sm:$0xff]
    %v4919 = vld [vmem:[%s6 + $0x68] sm:$0xff]
    %v4920 = vld [vmem:[%s6 + $0x70] sm:$0xff]
    %v4921 = vld [vmem:[%s6 + $0x78] sm:$0xff]
    %v4922 = vld [vmem:[%s6 + $0x80] sm:$0xff]
    %v4923 = vld [vmem:[%s6 + $0x88] sm:$0xff]
    %v4924 = vld [vmem:[%s6 + $0x90] sm:$0xff]
    %v4925 = vld [vmem:[%s6 + $0x98] sm:$0xff]
    %v4926 = vld [vmem:[%s6 + $0xa0] sm:$0xff]
    %v4927 = vld [vmem:[%s6 + $0xa8] sm:$0xff]
    %v4928 = vld [vmem:[%s6 + $0xb0] sm:$0xff]
    %v4929 = vld [vmem:[%s6 + $0xb8] sm:$0xff]
    %v4930 = vld [vmem:[%s6 + $0xc0] sm:$0xff]
    %v4931 = vld [vmem:[%s6 + $0xc8] sm:$0xff]
    %v4932 = vld [vmem:[%s6 + $0xd0] sm:$0xff]
    %v4933 = vld [vmem:[%s6 + $0xd8] sm:$0xff]
    %v4934 = vld [vmem:[%s6 + $0xe0] sm:$0xff]
    %v4935 = vld [vmem:[%s6 + $0xe8] sm:$0xff]
    %v4936 = vld [vmem:[%s6 + $0xf0] sm:$0xff]
    %v4937 = vld [vmem:[%s6 + $0xf8] sm:$0xff]
    %v4938 = vld [vmem:[%s6 + $0x100] sm:$0xff]
    %v4939 = vld [vmem:[%s6 + $0x108] sm:$0xff]
    %v4940 = vld [vmem:[%s6 + $0x110] sm:$0xff]
    %v4941 = vld [vmem:[%s6 + $0x118] sm:$0xff]
    %v4942 = vld [vmem:[%s6 + $0x120] sm:$0xff]
    %v4943 = vld [vmem:[%s6 + $0x128] sm:$0xff]
    %v4944 = vld [vmem:[%s6 + $0x130] sm:$0xff]
    %v4945 = vld [vmem:[%s6 + $0x138] sm:$0xff]
    %v4946 = vld [vmem:[%s6 + $0x140] sm:$0xff]
    %v4947 = vld [vmem:[%s6 + $0x148] sm:$0xff]
    %v4948 = vld [vmem:[%s6 + $0x150] sm:$0xff]
    %v4949 = vld [vmem:[%s6 + $0x158] sm:$0xff]
    %v4950 = vld [vmem:[%s6 + $0x160] sm:$0xff]
    %v4951 = vld [vmem:[%s6 + $0x168] sm:$0xff]
    %v4952 = vld [vmem:[%s6 + $0x170] sm:$0xff]
    %v4953 = vld [vmem:[%s6 + $0x178] sm:$0xff]
    %v4954 = vld [vmem:[%s6 + $0x180] sm:$0xff]
    %v4955 = vld [vmem:[%s6 + $0x188] sm:$0xff]
    %v4956 = vld [vmem:[%s6 + $0x190] sm:$0xff]
    %v4957 = vld [vmem:[%s6 + $0x198] sm:$0xff]
    %v4958 = vld [vmem:[%s6 + $0x1a0] sm:$0xff]
    %v4959 = vld [vmem:[%s6 + $0x1a8] sm:$0xff]
    %v4960 = vld [vmem:[%s6 + $0x1b0] sm:$0xff]
    %v4961 = vld [vmem:[%s6 + $0x1b8] sm:$0xff]
    %v4962 = vld [vmem:[%s6 + $0x1c0] sm:$0xff]
    %v4963 = vld [vmem:[%s6 + $0x1c8] sm:$0xff]
    %v4964 = vld [vmem:[%s6 + $0x1d0] sm:$0xff]
    %v4965 = vld [vmem:[%s6 + $0x1d8] sm:$0xff]
    %v4966 = vld [vmem:[%s6 + $0x1e0] sm:$0xff]
    %v4967 = vld [vmem:[%s6 + $0x1e8] sm:$0xff]
    %v4968 = vld [vmem:[%s6 + $0x1f0] sm:$0xff]
    %v4969 = vld [vmem:[%s6 + $0x1f8] sm:$0xff]
    %v4970 = vld [vmem:[%s6 + $0x200] sm:$0xff]
    %v4971 = vld [vmem:[%s6 + $0x208] sm:$0xff]
    %v4972 = vld [vmem:[%s6 + $0x210] sm:$0xff]
    %v4973 = vld [vmem:[%s6 + $0x218] sm:$0xff]
    %v4974 = vld [vmem:[%s6 + $0x220] sm:$0xff]
    %v4975 = vld [vmem:[%s6 + $0x228] sm:$0xff]
    %v4976 = vld [vmem:[%s6 + $0x230] sm:$0xff]
    %v4977 = vld [vmem:[%s6 + $0x238] sm:$0xff]
    %v4978 = vld [vmem:[%s6 + $0x240] sm:$0xff]
    %v4979 = vld [vmem:[%s6 + $0x248] sm:$0xff]
    %v4980 = vld [vmem:[%s6 + $0x250] sm:$0xff]
    %v4981 = vld [vmem:[%s6 + $0x258] sm:$0xff]
    %v4982 = vld [vmem:[%s6 + $0x260] sm:$0xff]
    %v4983 = vld [vmem:[%s6 + $0x268] sm:$0xff]
    %v4984 = vld [vmem:[%s6 + $0x270] sm:$0xff]
    %v4985 = vld [vmem:[%s6 + $0x278] sm:$0xff]
    %v4986 = vld [vmem:[%s6 + $0x280] sm:$0xff]
    %v4987 = vld [vmem:[%s6 + $0x288] sm:$0xff]
    %v4988 = vld [vmem:[%s6 + $0x290] sm:$0xff]
    %v4989 = vld [vmem:[%s6 + $0x298] sm:$0xff]
    %v4990 = vld [vmem:[%s6 + $0x2a0] sm:$0xff]
    %v4991 = vld [vmem:[%s6 + $0x2a8] sm:$0xff]
    %v4992 = vld [vmem:[%s6 + $0x2b0] sm:$0xff]
    %v4993 = vld [vmem:[%s6 + $0x2b8] sm:$0xff]
    %v4994 = vld [vmem:[%s6 + $0x2c0] sm:$0xff]
    %v4995 = vld [vmem:[%s6 + $0x2c8] sm:$0xff]
    %v4996 = vld [vmem:[%s6 + $0x2d0] sm:$0xff]
    %v4997 = vld [vmem:[%s6 + $0x2d8] sm:$0xff]
    %v4998 = vld [vmem:[%s6 + $0x2e0] sm:$0xff]
    %v4999 = vld [vmem:[%s6 + $0x2e8] sm:$0xff]
    %v5000 = vld [vmem:[%s6 + $0x2f0] sm:$0xff]
    %v5001 = vld [vmem:[%s6 + $0x2f8] sm:$0xff]
    %v5002 = vld [vmem:[%s6 + $0x300] sm:$0xff]
    %v5003 = vld [vmem:[%s6 + $0x308] sm:$0xff]
    %v5004 = vld [vmem:[%s6 + $0x310] sm:$0xff]
    %v5005 = vld [vmem:[%s6 + $0x318] sm:$0xff]
    %v5006 = vld [vmem:[%s6 + $0x320] sm:$0xff]
    %v5007 = vld [vmem:[%s6 + $0x328] sm:$0xff]
    %v5008 = vld [vmem:[%s6 + $0x330] sm:$0xff]
    %v5009 = vld [vmem:[%s6 + $0x338] sm:$0xff]
    %v5010 = vld [vmem:[%s6 + $0x340] sm:$0xff]
    %v5011 = vld [vmem:[%s6 + $0x348] sm:$0xff]
    %v5012 = vld [vmem:[%s6 + $0x350] sm:$0xff]
    %v5013 = vld [vmem:[%s6 + $0x358] sm:$0xff]
    %v5014 = vld [vmem:[%s6 + $0x360] sm:$0xff]
    %v5015 = vld [vmem:[%s6 + $0x368] sm:$0xff]
    %v5016 = vld [vmem:[%s6 + $0x370] sm:$0xff]
    %v5017 = vld [vmem:[%s6 + $0x378] sm:$0xff]
    %v5018 = vld [vmem:[%s6 + $0x380] sm:$0xff]
    %v5019 = vld [vmem:[%s6 + $0x388] sm:$0xff]
    %v5020 = vld [vmem:[%s6 + $0x390] sm:$0xff]
    %v5021 = vld [vmem:[%s6 + $0x398] sm:$0xff]
    %v5022 = vld [vmem:[%s6 + $0x3a0] sm:$0xff]
    %v5023 = vld [vmem:[%s6 + $0x3a8] sm:$0xff]
    %v5024 = vld [vmem:[%s6 + $0x3b0] sm:$0xff]
    %v5025 = vld [vmem:[%s6 + $0x3b8] sm:$0xff]
    %v5026 = vld [vmem:[%s6 + $0x3c0] sm:$0xff]
    %v5027 = vld [vmem:[%s6 + $0x3c8] sm:$0xff]
    %v5028 = vld [vmem:[%s6 + $0x3d0] sm:$0xff]
    %v5029 = vld [vmem:[%s6 + $0x3d8] sm:$0xff]
    %v5030 = vld [vmem:[%s6 + $0x3e0] sm:$0xff]
    %v5031 = vld [vmem:[%s6 + $0x3e8] sm:$0xff]
    %v5032 = vld [vmem:[%s6 + $0x3f0] sm:$0xff]
    %v5033 = vld [vmem:[%s6 + $0x3f8] sm:$0xff]
    %v5034 = vld [vmem:[%s7] sm:$0x1]
    %v5036 = vlaneseq
    %v5037 = vshrl.u32 %v5036, 7
    %v5038 = vsub.s32 0, %v5037
    %v5039 = vrot.slane %v5034, %v5038
    %5041 = vmatprep.subr.mxu0 0.0
    %5042 = vmatpush1.msra.mxu0 %v4906
    %5043 = vmatprep.subr.mxu0 0.0
    %5044 = vmatpush1.msra.mxu0 %v4907
    %5045 = vmatprep.subr.mxu0 0.0
    %5046 = vmatpush1.msra.mxu0 %v4908
    %5047 = vmatprep.subr.mxu0 0.0
    %5048 = vmatpush1.msra.mxu0 %v4909
    %5049 = vmatprep.subr.mxu0 0.0
    %5050 = vmatpush1.msra.mxu0 %v4910
    %5051 = vmatprep.subr.mxu0 0.0
    %5052 = vmatpush1.msra.mxu0 %v4911
    %5053 = vmatprep.subr.mxu0 0.0
    %5054 = vmatpush1.msra.mxu0 %v4912
    %5055 = vmatprep.subr.mxu0 0.0
    %5056 = vmatpush1.msra.mxu0 %v4913
    %5057 = vmatprep.subr.mxu0 0.0
    %5058 = vmatpush1.msra.mxu0 %v4914
    %5059 = vmatprep.subr.mxu0 0.0
    %5060 = vmatpush1.msra.mxu0 %v4915
    %5061 = vmatprep.subr.mxu0 0.0
    %5062 = vmatpush1.msra.mxu0 %v4916
    %5063 = vmatprep.subr.mxu0 0.0
    %5064 = vmatpush1.msra.mxu0 %v4917
    %5065 = vmatprep.subr.mxu0 0.0
    %5066 = vmatpush1.msra.mxu0 %v4918
    %5067 = vmatprep.subr.mxu0 0.0
    %5068 = vmatpush1.msra.mxu0 %v4919
    %5069 = vmatprep.subr.mxu0 0.0
    %5070 = vmatpush1.msra.mxu0 %v4920
    %5071 = vmatprep.subr.mxu0 0.0
    %5072 = vmatpush1.msra.mxu0 %v4921
    %5073 = vmatprep.subr.mxu0 0.0
    %5074 = vmatpush1.msra.mxu0 %v4922
    %5075 = vmatprep.subr.mxu0 0.0
    %5076 = vmatpush1.msra.mxu0 %v4923
    %5077 = vmatprep.subr.mxu0 0.0
    %5078 = vmatpush1.msra.mxu0 %v4924
    %5079 = vmatprep.subr.mxu0 0.0
    %5080 = vmatpush1.msra.mxu0 %v4925
    %5081 = vmatprep.subr.mxu0 0.0
    %5082 = vmatpush1.msra.mxu0 %v4926
    %5083 = vmatprep.subr.mxu0 0.0
    %5084 = vmatpush1.msra.mxu0 %v4927
    %5085 = vmatprep.subr.mxu0 0.0
    %5086 = vmatpush1.msra.mxu0 %v4928
    %5087 = vmatprep.subr.mxu0 0.0
    %5088 = vmatpush1.msra.mxu0 %v4929
    %5089 = vmatprep.subr.mxu0 0.0
    %5090 = vmatpush1.msra.mxu0 %v4930
    %5091 = vmatprep.subr.mxu0 0.0
    %5092 = vmatpush1.msra.mxu0 %v4931
    %5093 = vmatprep.subr.mxu0 0.0
    %5094 = vmatpush1.msra.mxu0 %v4932
    %5095 = vmatprep.subr.mxu0 0.0
    %5096 = vmatpush1.msra.mxu0 %v4933
    %5097 = vmatprep.subr.mxu0 0.0
    %5098 = vmatpush1.msra.mxu0 %v4934
    %5099 = vmatprep.subr.mxu0 0.0
    %5100 = vmatpush1.msra.mxu0 %v4935
    %5101 = vmatprep.subr.mxu0 0.0
    %5102 = vmatpush1.msra.mxu0 %v4936
    %5103 = vmatprep.subr.mxu0 0.0
    %5104 = vmatpush1.msra.mxu0 %v4937
    %5105 = vmatprep.mubr.f32.mxu0 %v4651
    %5106 = vmatmul.mubr.f32.gmra.mrb[0].mxu0 %v4650
    %v5107 = vpop.f32.mrb[0].mxu0
    %v5108 = vadd.f32 %v5039, %v5107
    %v5109 = vpop.f32.mrb[0].mxu0
    %5110 = vmatprep.mubr.f32.mxu0 %v4659
    %5111 = vmatmul.mubr.f32.gmra.mrb[0].mxu0 %v4658
    %v5112 = vpop.f32.mrb[0].mxu0
    %v5113 = vadd.f32 %v5039, %v5112
    %v5114 = vpop.f32.mrb[0].mxu0
    %5115 = vmatprep.mubr.f32.mxu0 %v4667
    %5116 = vmatmul.mubr.f32.gmra.mrb[0].mxu0 %v4666
    %v5117 = vpop.f32.mrb[0].mxu0
    %v5118 = vadd.f32 %v5039, %v5117
    %v5119 = vpop.f32.mrb[0].mxu0
    %5120 = vmatprep.mubr.f32.mxu0 %v4675
    %5121 = vmatmul.mubr.f32.gmra.mrb[0].mxu0 %v4674
    %v5122 = vpop.f32.mrb[0].mxu0
    %v5123 = vadd.f32 %v5039, %v5122
    %v5124 = vpop.f32.mrb[0].mxu0
    %5125 = vmatprep.mubr.f32.mxu0 %v4683
    %5126 = vmatmul.mubr.f32.gmra.mrb[0].mxu0 %v4682
    %v5127 = vpop.f32.mrb[0].mxu0
    %v5128 = vadd.f32 %v5039, %v5127
    %v5129 = vpop.f32.mrb[0].mxu0
    %5130 = vmatprep.mubr.f32.mxu0 %v4691
    %5131 = vmatmul.mubr.f32.gmra.mrb[0].mxu0 %v4690
    %v5132 = vpop.f32.mrb[0].mxu0
    %v5133 = vadd.f32 %v5039, %v5132
    %v5134 = vpop.f32.mrb[0].mxu0
    %5135 = vmatprep.mubr.f32.mxu0 %v4699
    %5136 = vmatmul.mubr.f32.gmra.mrb[0].mxu0 %v4698
    %v5137 = vpop.f32.mrb[0].mxu0
    %v5138 = vadd.f32 %v5039, %v5137
    %v5139 = vpop.f32.mrb[0].mxu0
    %5140 = vmatprep.mubr.f32.mxu0 %v4707
    %5141 = vmatmul.mubr.f32.gmra.mrb[0].mxu0 %v4706
    %v5142 = vpop.f32.mrb[0].mxu0
    %v5143 = vadd.f32 %v5039, %v5142
    %v5144 = vpop.f32.mrb[0].mxu0
    %5145 = vmatprep.mubr.f32.mxu0 %v4715
    %5146 = vmatmul.mubr.f32.gmra.mrb[0].mxu0 %v4714
    %v5147 = vpop.f32.mrb[0].mxu0
    %v5148 = vadd.f32 %v5039, %v5147
    %v5149 = vpop.f32.mrb[0].mxu0
    %5150 = vmatprep.mubr.f32.mxu0 %v4723
    %5151 = vmatmul.mubr.f32.gmra.mrb[0].mxu0 %v4722
    %v5152 = vpop.f32.mrb[0].mxu0
    %v5153 = vadd.f32 %v5039, %v5152
    %v5154 = vpop.f32.mrb[0].mxu0
    %5155 = vmatprep.mubr.f32.mxu0 %v4731
    %5156 = vmatmul.mubr.f32.gmra.mrb[0].mxu0 %v4730
    %v5157 = vpop.f32.mrb[0].mxu0
    %v5158 = vadd.f32 %v5039, %v5157
    %v5159 = vpop.f32.mrb[0].mxu0
    %5160 = vmatprep.mubr.f32.mxu0 %v4739
    %5161 = vmatmul.mubr.f32.gmra.mrb[0].mxu0 %v4738
    %v5162 = vpop.f32.mrb[0].mxu0
    %v5163 = vadd.f32 %v5039, %v5162
    %v5164 = vpop.f32.mrb[0].mxu0
    %5165 = vmatprep.mubr.f32.mxu0 %v4747
    %5166 = vmatmul.mubr.f32.gmra.mrb[0].mxu0 %v4746
    %v5167 = vpop.f32.mrb[0].mxu0
    %v5168 = vadd.f32 %v5039, %v5167
    %v5169 = vpop.f32.mrb[0].mxu0
    %5170 = vmatprep.mubr.f32.mxu0 %v4755
    %5171 = vmatmul.mubr.f32.gmra.mrb[0].mxu0 %v4754
    %v5172 = vpop.f32.mrb[0].mxu0
    %v5173 = vadd.f32 %v5039, %v5172
    %v5174 = vpop.f32.mrb[0].mxu0
    %5175 = vmatprep.mubr.f32.mxu0 %v4763
    %5176 = vmatmul.mubr.f32.gmra.mrb[0].mxu0 %v4762
    %v5177 = vpop.f32.mrb[0].mxu0
    %v5178 = vadd.f32 %v5039, %v5177
    %v5179 = vpop.f32.mrb[0].mxu0
    %5180 = vmatprep.mubr.f32.mxu0 %v4771
    %5181 = vmatmul.mubr.f32.gmra.mrb[0].mxu0 %v4770
    %v5182 = vpop.f32.mrb[0].mxu0
    %v5183 = vadd.f32 %v5039, %v5182
    %v5184 = vpop.f32.mrb[0].mxu0
    %5185 = vmatprep.mubr.f32.mxu0 %v4779
    %5186 = vmatmul.mubr.f32.gmra.mrb[0].mxu0 %v4778
    %v5187 = vpop.f32.mrb[0].mxu0
    %v5188 = vadd.f32 %v5039, %v5187
    %v5189 = vpop.f32.mrb[0].mxu0
    %5190 = vmatprep.mubr.f32.mxu0 %v4787
    %5191 = vmatmul.mubr.f32.gmra.mrb[0].mxu0 %v4786
    %v5192 = vpop.f32.mrb[0].mxu0
    %v5193 = vadd.f32 %v5039, %v5192
    %v5194 = vpop.f32.mrb[0].mxu0
    %5195 = vmatprep.mubr.f32.mxu0 %v4795
    %5196 = vmatmul.mubr.f32.gmra.mrb[0].mxu0 %v4794
    %v5197 = vpop.f32.mrb[0].mxu0
    %v5198 = vadd.f32 %v5039, %v5197
    %v5199 = vpop.f32.mrb[0].mxu0
    %5200 = vmatprep.mubr.f32.mxu0 %v4803
    %5201 = vmatmul.mubr.f32.gmra.mrb[0].mxu0 %v4802
    %v5202 = vpop.f32.mrb[0].mxu0
    %v5203 = vadd.f32 %v5039, %v5202
    %v5204 = vpop.f32.mrb[0].mxu0
    %5205 = vmatprep.mubr.f32.mxu0 %v4811
    %5206 = vmatmul.mubr.f32.gmra.mrb[0].mxu0 %v4810
    %v5207 = vpop.f32.mrb[0].mxu0
    %v5208 = vadd.f32 %v5039, %v5207
    %v5209 = vpop.f32.mrb[0].mxu0
    %5210 = vmatprep.mubr.f32.mxu0 %v4819
    %5211 = vmatmul.mubr.f32.gmra.mrb[0].mxu0 %v4818
    %v5212 = vpop.f32.mrb[0].mxu0
    %v5213 = vadd.f32 %v5039, %v5212
    %v5214 = vpop.f32.mrb[0].mxu0
    %5215 = vmatprep.mubr.f32.mxu0 %v4827
    %5216 = vmatmul.mubr.f32.gmra.mrb[0].mxu0 %v4826
    %v5217 = vpop.f32.mrb[0].mxu0
    %v5218 = vadd.f32 %v5039, %v5217
    %v5219 = vpop.f32.mrb[0].mxu0
    %5220 = vmatprep.mubr.f32.mxu0 %v4835
    %5221 = vmatmul.mubr.f32.gmra.mrb[0].mxu0 %v4834
    %v5222 = vpop.f32.mrb[0].mxu0
    %v5223 = vadd.f32 %v5039, %v5222
    %v5224 = vpop.f32.mrb[0].mxu0
    %5225 = vmatprep.mubr.f32.mxu0 %v4843
    %5226 = vmatmul.mubr.f32.gmra.mrb[0].mxu0 %v4842
    %v5227 = vpop.f32.mrb[0].mxu0
    %v5228 = vadd.f32 %v5039, %v5227
    %v5229 = vpop.f32.mrb[0].mxu0
    %5230 = vmatprep.mubr.f32.mxu0 %v4851
    %5231 = vmatmul.mubr.f32.gmra.mrb[0].mxu0 %v4850
    %v5232 = vpop.f32.mrb[0].mxu0
    %v5233 = vadd.f32 %v5039, %v5232
    %v5234 = vpop.f32.mrb[0].mxu0
    %5235 = vmatprep.mubr.f32.mxu0 %v4859
    %5236 = vmatmul.mubr.f32.gmra.mrb[0].mxu0 %v4858
    %v5237 = vpop.f32.mrb[0].mxu0
    %v5238 = vadd.f32 %v5039, %v5237
    %v5239 = vpop.f32.mrb[0].mxu0
    %5240 = vmatprep.mubr.f32.mxu0 %v4867
    %5241 = vmatmul.mubr.f32.gmra.mrb[0].mxu0 %v4866
    %v5242 = vpop.f32.mrb[0].mxu0
    %v5243 = vadd.f32 %v5039, %v5242
    %v5244 = vpop.f32.mrb[0].mxu0
    %5245 = vmatprep.mubr.f32.mxu0 %v4875
    %5246 = vmatmul.mubr.f32.gmra.mrb[0].mxu0 %v4874
    %v5247 = vpop.f32.mrb[0].mxu0
    %v5248 = vadd.f32 %v5039, %v5247
    %v5249 = vpop.f32.mrb[0].mxu0
    %5250 = vmatprep.mubr.f32.mxu0 %v4883
    %5251 = vmatmul.mubr.f32.gmra.mrb[0].mxu0 %v4882
    %v5252 = vpop.f32.mrb[0].mxu0
    %v5253 = vadd.f32 %v5039, %v5252
    %v5254 = vpop.f32.mrb[0].mxu0
    %5255 = vmatprep.mubr.f32.mxu0 %v4891
    %5256 = vmatmul.mubr.f32.gmra.mrb[0].mxu0 %v4890
    %v5257 = vpop.f32.mrb[0].mxu0
    %v5258 = vadd.f32 %v5039, %v5257
    %v5259 = vpop.f32.mrb[0].mxu0
    %5260 = vmatprep.mubr.f32.mxu0 %v4899
    %5261 = vmatmul.mubr.f32.gmra.mrb[0].mxu0 %v4898
    %v5262 = vpop.f32.mrb[0].mxu0
    %v5263 = vadd.f32 %v5039, %v5262
    %v5264 = vpop.f32.mrb[0].mxu0
    %5265 = vdwg.mxu0
    %5266 = vmatprep.subr.mxu0 0.0
    %5267 = vmatpush1.msra.mxu0 %v4938
    %5268 = vmatprep.subr.mxu0 0.0
    %5269 = vmatpush1.msra.mxu0 %v4939
    %5270 = vmatprep.subr.mxu0 0.0
    %5271 = vmatpush1.msra.mxu0 %v4940
    %5272 = vmatprep.subr.mxu0 0.0
    %5273 = vmatpush1.msra.mxu0 %v4941
    %5274 = vmatprep.subr.mxu0 0.0
    %5275 = vmatpush1.msra.mxu0 %v4942
    %5276 = vmatprep.subr.mxu0 0.0
    %5277 = vmatpush1.msra.mxu0 %v4943
    %5278 = vmatprep.subr.mxu0 0.0
    %5279 = vmatpush1.msra.mxu0 %v4944
    %5280 = vmatprep.subr.mxu0 0.0
    %5281 = vmatpush1.msra.mxu0 %v4945
    %5282 = vmatprep.subr.mxu0 0.0
    %5283 = vmatpush1.msra.mxu0 %v4946
    %5284 = vmatprep.subr.mxu0 0.0
    %5285 = vmatpush1.msra.mxu0 %v4947
    %5286 = vmatprep.subr.mxu0 0.0
    %5287 = vmatpush1.msra.mxu0 %v4948
    %5288 = vmatprep.subr.mxu0 0.0
    %5289 = vmatpush1.msra.mxu0 %v4949
    %5290 = vmatprep.subr.mxu0 0.0
    %5291 = vmatpush1.msra.mxu0 %v4950
    %5292 = vmatprep.subr.mxu0 0.0
    %5293 = vmatpush1.msra.mxu0 %v4951
    %5294 = vmatprep.subr.mxu0 0.0
    %5295 = vmatpush1.msra.mxu0 %v4952
    %5296 = vmatprep.subr.mxu0 0.0
    %5297 = vmatpush1.msra.mxu0 %v4953
    %5298 = vmatprep.subr.mxu0 0.0
    %5299 = vmatpush1.msra.mxu0 %v4954
    %5300 = vmatprep.subr.mxu0 0.0
    %5301 = vmatpush1.msra.mxu0 %v4955
    %5302 = vmatprep.subr.mxu0 0.0
    %5303 = vmatpush1.msra.mxu0 %v4956
    %5304 = vmatprep.subr.mxu0 0.0
    %5305 = vmatpush1.msra.mxu0 %v4957
    %5306 = vmatprep.subr.mxu0 0.0
    %5307 = vmatpush1.msra.mxu0 %v4958
    %5308 = vmatprep.subr.mxu0 0.0
    %5309 = vmatpush1.msra.mxu0 %v4959
    %5310 = vmatprep.subr.mxu0 0.0
    %5311 = vmatpush1.msra.mxu0 %v4960
    %5312 = vmatprep.subr.mxu0 0.0
    %5313 = vmatpush1.msra.mxu0 %v4961
    %5314 = vmatprep.subr.mxu0 0.0
    %5315 = vmatpush1.msra.mxu0 %v4962
    %5316 = vmatprep.subr.mxu0 0.0
    %5317 = vmatpush1.msra.mxu0 %v4963
    %5318 = vmatprep.subr.mxu0 0.0
    %5319 = vmatpush1.msra.mxu0 %v4964
    %5320 = vmatprep.subr.mxu0 0.0
    %5321 = vmatpush1.msra.mxu0 %v4965
    %5322 = vmatprep.subr.mxu0 0.0
    %5323 = vmatpush1.msra.mxu0 %v4966
    %5324 = vmatprep.subr.mxu0 0.0
    %5325 = vmatpush1.msra.mxu0 %v4967
    %5326 = vmatprep.subr.mxu0 0.0
    %5327 = vmatpush1.msra.mxu0 %v4968
    %5328 = vmatprep.subr.mxu0 0.0
    %5329 = vmatpush1.msra.mxu0 %v4969
    %5330 = vmatprep.mubr.f32.mxu0 %v4653
    %5331 = vmatmul.mubr.f32.gmra.mrb[0].mxu0 %v4652
    %v5332 = vpop.f32.mrb[0].mxu0
    %v5333 = vadd.f32 %v5108, %v5332
    %v5334 = vpop.f32.mrb[0].mxu0
    %5335 = vmatprep.mubr.f32.mxu0 %v4661
    %5336 = vmatmul.mubr.f32.gmra.mrb[0].mxu0 %v4660
    %v5337 = vpop.f32.mrb[0].mxu0
    %v5338 = vadd.f32 %v5113, %v5337
    %v5339 = vpop.f32.mrb[0].mxu0
    %5340 = vmatprep.mubr.f32.mxu0 %v4669
    %5341 = vmatmul.mubr.f32.gmra.mrb[0].mxu0 %v4668
    %v5342 = vpop.f32.mrb[0].mxu0
    %v5343 = vadd.f32 %v5118, %v5342
    %v5344 = vpop.f32.mrb[0].mxu0
    %5345 = vmatprep.mubr.f32.mxu0 %v4677
    %5346 = vmatmul.mubr.f32.gmra.mrb[0].mxu0 %v4676
    %v5347 = vpop.f32.mrb[0].mxu0
    %v5348 = vadd.f32 %v5123, %v5347
    %v5349 = vpop.f32.mrb[0].mxu0
    %5350 = vmatprep.mubr.f32.mxu0 %v4685
    %5351 = vmatmul.mubr.f32.gmra.mrb[0].mxu0 %v4684
    %v5352 = vpop.f32.mrb[0].mxu0
    %v5353 = vadd.f32 %v5128, %v5352
    %v5354 = vpop.f32.mrb[0].mxu0
    %5355 = vmatprep.mubr.f32.mxu0 %v4693
    %5356 = vmatmul.mubr.f32.gmra.mrb[0].mxu0 %v4692
    %v5357 = vpop.f32.mrb[0].mxu0
    %v5358 = vadd.f32 %v5133, %v5357
    %v5359 = vpop.f32.mrb[0].mxu0
    %5360 = vmatprep.mubr.f32.mxu0 %v4701
    %5361 = vmatmul.mubr.f32.gmra.mrb[0].mxu0 %v4700
    %v5362 = vpop.f32.mrb[0].mxu0
    %v5363 = vadd.f32 %v5138, %v5362
    %v5364 = vpop.f32.mrb[0].mxu0
    %5365 = vmatprep.mubr.f32.mxu0 %v4709
    %5366 = vmatmul.mubr.f32.gmra.mrb[0].mxu0 %v4708
    %v5367 = vpop.f32.mrb[0].mxu0
    %v5368 = vadd.f32 %v5143, %v5367
    %v5369 = vpop.f32.mrb[0].mxu0
    %5370 = vmatprep.mubr.f32.mxu0 %v4717
    %5371 = vmatmul.mubr.f32.gmra.mrb[0].mxu0 %v4716
    %v5372 = vpop.f32.mrb[0].mxu0
    %v5373 = vadd.f32 %v5148, %v5372
    %v5374 = vpop.f32.mrb[0].mxu0
    %5375 = vmatprep.mubr.f32.mxu0 %v4725
    %5376 = vmatmul.mubr.f32.gmra.mrb[0].mxu0 %v4724
    %v5377 = vpop.f32.mrb[0].mxu0
    %v5378 = vadd.f32 %v5153, %v5377
    %v5379 = vpop.f32.mrb[0].mxu0
    %5380 = vmatprep.mubr.f32.mxu0 %v4733
    %5381 = vmatmul.mubr.f32.gmra.mrb[0].mxu0 %v4732
    %v5382 = vpop.f32.mrb[0].mxu0
    %v5383 = vadd.f32 %v5158, %v5382
    %v5384 = vpop.f32.mrb[0].mxu0
    %5385 = vmatprep.mubr.f32.mxu0 %v4741
    %5386 = vmatmul.mubr.f32.gmra.mrb[0].mxu0 %v4740
    %v5387 = vpop.f32.mrb[0].mxu0
    %v5388 = vadd.f32 %v5163, %v5387
    %v5389 = vpop.f32.mrb[0].mxu0
    %5390 = vmatprep.mubr.f32.mxu0 %v4749
    %5391 = vmatmul.mubr.f32.gmra.mrb[0].mxu0 %v4748
    %v5392 = vpop.f32.mrb[0].mxu0
    %v5393 = vadd.f32 %v5168, %v5392
    %v5394 = vpop.f32.mrb[0].mxu0
    %5395 = vmatprep.mubr.f32.mxu0 %v4757
    %5396 = vmatmul.mubr.f32.gmra.mrb[0].mxu0 %v4756
    %v5397 = vpop.f32.mrb[0].mxu0
    %v5398 = vadd.f32 %v5173, %v5397
    %v5399 = vpop.f32.mrb[0].mxu0
    %5400 = vmatprep.mubr.f32.mxu0 %v4765
    %5401 = vmatmul.mubr.f32.gmra.mrb[0].mxu0 %v4764
    %v5402 = vpop.f32.mrb[0].mxu0
    %v5403 = vadd.f32 %v5178, %v5402
    %v5404 = vpop.f32.mrb[0].mxu0
    %5405 = vmatprep.mubr.f32.mxu0 %v4773
    %5406 = vmatmul.mubr.f32.gmra.mrb[0].mxu0 %v4772
    %v5407 = vpop.f32.mrb[0].mxu0
    %v5408 = vadd.f32 %v5183, %v5407
    %v5409 = vpop.f32.mrb[0].mxu0
    %5410 = vmatprep.mubr.f32.mxu0 %v4781
    %5411 = vmatmul.mubr.f32.gmra.mrb[0].mxu0 %v4780
    %v5412 = vpop.f32.mrb[0].mxu0
    %v5413 = vadd.f32 %v5188, %v5412
    %v5414 = vpop.f32.mrb[0].mxu0
    %5415 = vmatprep.mubr.f32.mxu0 %v4789
    %5416 = vmatmul.mubr.f32.gmra.mrb[0].mxu0 %v4788
    %v5417 = vpop.f32.mrb[0].mxu0
    %v5418 = vadd.f32 %v5193, %v5417
    %v5419 = vpop.f32.mrb[0].mxu0
    %5420 = vmatprep.mubr.f32.mxu0 %v4797
    %5421 = vmatmul.mubr.f32.gmra.mrb[0].mxu0 %v4796
    %v5422 = vpop.f32.mrb[0].mxu0
    %v5423 = vadd.f32 %v5198, %v5422
    %v5424 = vpop.f32.mrb[0].mxu0
    %5425 = vmatprep.mubr.f32.mxu0 %v4805
    %5426 = vmatmul.mubr.f32.gmra.mrb[0].mxu0 %v4804
    %v5427 = vpop.f32.mrb[0].mxu0
    %v5428 = vadd.f32 %v5203, %v5427
    %v5429 = vpop.f32.mrb[0].mxu0
    %5430 = vmatprep.mubr.f32.mxu0 %v4813
    %5431 = vmatmul.mubr.f32.gmra.mrb[0].mxu0 %v4812
    %v5432 = vpop.f32.mrb[0].mxu0
    %v5433 = vadd.f32 %v5208, %v5432
    %v5434 = vpop.f32.mrb[0].mxu0
    %5435 = vmatprep.mubr.f32.mxu0 %v4821
    %5436 = vmatmul.mubr.f32.gmra.mrb[0].mxu0 %v4820
    %v5437 = vpop.f32.mrb[0].mxu0
    %v5438 = vadd.f32 %v5213, %v5437
    %v5439 = vpop.f32.mrb[0].mxu0
    %5440 = vmatprep.mubr.f32.mxu0 %v4829
    %5441 = vmatmul.mubr.f32.gmra.mrb[0].mxu0 %v4828
    %v5442 = vpop.f32.mrb[0].mxu0
    %v5443 = vadd.f32 %v5218, %v5442
    %v5444 = vpop.f32.mrb[0].mxu0
    %5445 = vmatprep.mubr.f32.mxu0 %v4837
    %5446 = vmatmul.mubr.f32.gmra.mrb[0].mxu0 %v4836
    %v5447 = vpop.f32.mrb[0].mxu0
    %v5448 = vadd.f32 %v5223, %v5447
    %v5449 = vpop.f32.mrb[0].mxu0
    %5450 = vmatprep.mubr.f32.mxu0 %v4845
    %5451 = vmatmul.mubr.f32.gmra.mrb[0].mxu0 %v4844
    %v5452 = vpop.f32.mrb[0].mxu0
    %v5453 = vadd.f32 %v5228, %v5452
    %v5454 = vpop.f32.mrb[0].mxu0
    %5455 = vmatprep.mubr.f32.mxu0 %v4853
    %5456 = vmatmul.mubr.f32.gmra.mrb[0].mxu0 %v4852
    %v5457 = vpop.f32.mrb[0].mxu0
    %v5458 = vadd.f32 %v5233, %v5457
    %v5459 = vpop.f32.mrb[0].mxu0
    %5460 = vmatprep.mubr.f32.mxu0 %v4861
    %5461 = vmatmul.mubr.f32.gmra.mrb[0].mxu0 %v4860
    %v5462 = vpop.f32.mrb[0].mxu0
    %v5463 = vadd.f32 %v5238, %v5462
    %v5464 = vpop.f32.mrb[0].mxu0
    %5465 = vmatprep.mubr.f32.mxu0 %v4869
    %5466 = vmatmul.mubr.f32.gmra.mrb[0].mxu0 %v4868
    %v5467 = vpop.f32.mrb[0].mxu0
    %v5468 = vadd.f32 %v5243, %v5467
    %v5469 = vpop.f32.mrb[0].mxu0
    %5470 = vmatprep.mubr.f32.mxu0 %v4877
    %5471 = vmatmul.mubr.f32.gmra.mrb[0].mxu0 %v4876
    %v5472 = vpop.f32.mrb[0].mxu0
    %v5473 = vadd.f32 %v5248, %v5472
    %v5474 = vpop.f32.mrb[0].mxu0
    %5475 = vmatprep.mubr.f32.mxu0 %v4885
    %5476 = vmatmul.mubr.f32.gmra.mrb[0].mxu0 %v4884
    %v5477 = vpop.f32.mrb[0].mxu0
    %v5478 = vadd.f32 %v5253, %v5477
    %v5479 = vpop.f32.mrb[0].mxu0
    %5480 = vmatprep.mubr.f32.mxu0 %v4893
    %5481 = vmatmul.mubr.f32.gmra.mrb[0].mxu0 %v4892
    %v5482 = vpop.f32.mrb[0].mxu0
    %v5483 = vadd.f32 %v5258, %v5482
    %v5484 = vpop.f32.mrb[0].mxu0
    %5485 = vmatprep.mubr.f32.mxu0 %v4901
    %5486 = vmatmul.mubr.f32.gmra.mrb[0].mxu0 %v4900
    %v5487 = vpop.f32.mrb[0].mxu0
    %v5488 = vadd.f32 %v5263, %v5487
    %v5489 = vpop.f32.mrb[0].mxu0
    %5490 = vdwg.mxu0
    %5491 = vmatprep.subr.mxu0 0.0
    %5492 = vmatpush1.msra.mxu0 %v4970
    %5493 = vmatprep.subr.mxu0 0.0
    %5494 = vmatpush1.msra.mxu0 %v4971
    %5495 = vmatprep.subr.mxu0 0.0
    %5496 = vmatpush1.msra.mxu0 %v4972
    %5497 = vmatprep.subr.mxu0 0.0
    %5498 = vmatpush1.msra.mxu0 %v4973
    %5499 = vmatprep.subr.mxu0 0.0
    %5500 = vmatpush1.msra.mxu0 %v4974
    %5501 = vmatprep.subr.mxu0 0.0
    %5502 = vmatpush1.msra.mxu0 %v4975
    %5503 = vmatprep.subr.mxu0 0.0
    %5504 = vmatpush1.msra.mxu0 %v4976
    %5505 = vmatprep.subr.mxu0 0.0
    %5506 = vmatpush1.msra.mxu0 %v4977
    %5507 = vmatprep.subr.mxu0 0.0
    %5508 = vmatpush1.msra.mxu0 %v4978
    %5509 = vmatprep.subr.mxu0 0.0
    %5510 = vmatpush1.msra.mxu0 %v4979
    %5511 = vmatprep.subr.mxu0 0.0
    %5512 = vmatpush1.msra.mxu0 %v4980
    %5513 = vmatprep.subr.mxu0 0.0
    %5514 = vmatpush1.msra.mxu0 %v4981
    %5515 = vmatprep.subr.mxu0 0.0
    %5516 = vmatpush1.msra.mxu0 %v4982
    %5517 = vmatprep.subr.mxu0 0.0
    %5518 = vmatpush1.msra.mxu0 %v4983
    %5519 = vmatprep.subr.mxu0 0.0
    %5520 = vmatpush1.msra.mxu0 %v4984
    %5521 = vmatprep.subr.mxu0 0.0
    %5522 = vmatpush1.msra.mxu0 %v4985
    %5523 = vmatprep.subr.mxu0 0.0
    %5524 = vmatpush1.msra.mxu0 %v4986
    %5525 = vmatprep.subr.mxu0 0.0
    %5526 = vmatpush1.msra.mxu0 %v4987
    %5527 = vmatprep.subr.mxu0 0.0
    %5528 = vmatpush1.msra.mxu0 %v4988
    %5529 = vmatprep.subr.mxu0 0.0
    %5530 = vmatpush1.msra.mxu0 %v4989
    %5531 = vmatprep.subr.mxu0 0.0
    %5532 = vmatpush1.msra.mxu0 %v4990
    %5533 = vmatprep.subr.mxu0 0.0
    %5534 = vmatpush1.msra.mxu0 %v4991
    %5535 = vmatprep.subr.mxu0 0.0
    %5536 = vmatpush1.msra.mxu0 %v4992
    %5537 = vmatprep.subr.mxu0 0.0
    %5538 = vmatpush1.msra.mxu0 %v4993
    %5539 = vmatprep.subr.mxu0 0.0
    %5540 = vmatpush1.msra.mxu0 %v4994
    %5541 = vmatprep.subr.mxu0 0.0
    %5542 = vmatpush1.msra.mxu0 %v4995
    %5543 = vmatprep.subr.mxu0 0.0
    %5544 = vmatpush1.msra.mxu0 %v4996
    %5545 = vmatprep.subr.mxu0 0.0
    %5546 = vmatpush1.msra.mxu0 %v4997
    %5547 = vmatprep.subr.mxu0 0.0
    %5548 = vmatpush1.msra.mxu0 %v4998
    %5549 = vmatprep.subr.mxu0 0.0
    %5550 = vmatpush1.msra.mxu0 %v4999
    %5551 = vmatprep.subr.mxu0 0.0
    %5552 = vmatpush1.msra.mxu0 %v5000
    %5553 = vmatprep.subr.mxu0 0.0
    %5554 = vmatpush1.msra.mxu0 %v5001
    %5555 = vmatprep.mubr.f32.mxu0 %v4655
    %5556 = vmatmul.mubr.f32.gmra.mrb[0].mxu0 %v4654
    %v5557 = vpop.f32.mrb[0].mxu0
    %v5558 = vadd.f32 %v5333, %v5557
    %v5559 = vpop.f32.mrb[0].mxu0
    %5560 = vmatprep.mubr.f32.mxu0 %v4663
    %5561 = vmatmul.mubr.f32.gmra.mrb[0].mxu0 %v4662
    %v5562 = vpop.f32.mrb[0].mxu0
    %v5563 = vadd.f32 %v5338, %v5562
    %v5564 = vpop.f32.mrb[0].mxu0
    %5565 = vmatprep.mubr.f32.mxu0 %v4671
    %5566 = vmatmul.mubr.f32.gmra.mrb[0].mxu0 %v4670
    %v5567 = vpop.f32.mrb[0].mxu0
    %v5568 = vadd.f32 %v5343, %v5567
    %v5569 = vpop.f32.mrb[0].mxu0
    %5570 = vmatprep.mubr.f32.mxu0 %v4679
    %5571 = vmatmul.mubr.f32.gmra.mrb[0].mxu0 %v4678
    %v5572 = vpop.f32.mrb[0].mxu0
    %v5573 = vadd.f32 %v5348, %v5572
    %v5574 = vpop.f32.mrb[0].mxu0
    %5575 = vmatprep.mubr.f32.mxu0 %v4687
    %5576 = vmatmul.mubr.f32.gmra.mrb[0].mxu0 %v4686
    %v5577 = vpop.f32.mrb[0].mxu0
    %v5578 = vadd.f32 %v5353, %v5577
    %v5579 = vpop.f32.mrb[0].mxu0
    %5580 = vmatprep.mubr.f32.mxu0 %v4695
    %5581 = vmatmul.mubr.f32.gmra.mrb[0].mxu0 %v4694
    %v5582 = vpop.f32.mrb[0].mxu0
    %v5583 = vadd.f32 %v5358, %v5582
    %v5584 = vpop.f32.mrb[0].mxu0
    %5585 = vmatprep.mubr.f32.mxu0 %v4703
    %5586 = vmatmul.mubr.f32.gmra.mrb[0].mxu0 %v4702
    %v5587 = vpop.f32.mrb[0].mxu0
    %v5588 = vadd.f32 %v5363, %v5587
    %v5589 = vpop.f32.mrb[0].mxu0
    %5590 = vmatprep.mubr.f32.mxu0 %v4711
    %5591 = vmatmul.mubr.f32.gmra.mrb[0].mxu0 %v4710
    %v5592 = vpop.f32.mrb[0].mxu0
    %v5593 = vadd.f32 %v5368, %v5592
    %v5594 = vpop.f32.mrb[0].mxu0
    %5595 = vmatprep.mubr.f32.mxu0 %v4719
    %5596 = vmatmul.mubr.f32.gmra.mrb[0].mxu0 %v4718
    %v5597 = vpop.f32.mrb[0].mxu0
    %v5598 = vadd.f32 %v5373, %v5597
    %v5599 = vpop.f32.mrb[0].mxu0
    %5600 = vmatprep.mubr.f32.mxu0 %v4727
    %5601 = vmatmul.mubr.f32.gmra.mrb[0].mxu0 %v4726
    %v5602 = vpop.f32.mrb[0].mxu0
    %v5603 = vadd.f32 %v5378, %v5602
    %v5604 = vpop.f32.mrb[0].mxu0
    %5605 = vmatprep.mubr.f32.mxu0 %v4735
    %5606 = vmatmul.mubr.f32.gmra.mrb[0].mxu0 %v4734
    %v5607 = vpop.f32.mrb[0].mxu0
    %v5608 = vadd.f32 %v5383, %v5607
    %v5609 = vpop.f32.mrb[0].mxu0
    %5610 = vmatprep.mubr.f32.mxu0 %v4743
    %5611 = vmatmul.mubr.f32.gmra.mrb[0].mxu0 %v4742
    %v5612 = vpop.f32.mrb[0].mxu0
    %v5613 = vadd.f32 %v5388, %v5612
    %v5614 = vpop.f32.mrb[0].mxu0
    %5615 = vmatprep.mubr.f32.mxu0 %v4751
    %5616 = vmatmul.mubr.f32.gmra.mrb[0].mxu0 %v4750
    %v5617 = vpop.f32.mrb[0].mxu0
    %v5618 = vadd.f32 %v5393, %v5617
    %v5619 = vpop.f32.mrb[0].mxu0
    %5620 = vmatprep.mubr.f32.mxu0 %v4759
    %5621 = vmatmul.mubr.f32.gmra.mrb[0].mxu0 %v4758
    %v5622 = vpop.f32.mrb[0].mxu0
    %v5623 = vadd.f32 %v5398, %v5622
    %v5624 = vpop.f32.mrb[0].mxu0
    %5625 = vmatprep.mubr.f32.mxu0 %v4767
    %5626 = vmatmul.mubr.f32.gmra.mrb[0].mxu0 %v4766
    %v5627 = vpop.f32.mrb[0].mxu0
    %v5628 = vadd.f32 %v5403, %v5627
    %v5629 = vpop.f32.mrb[0].mxu0
    %5630 = vmatprep.mubr.f32.mxu0 %v4775
    %5631 = vmatmul.mubr.f32.gmra.mrb[0].mxu0 %v4774
    %v5632 = vpop.f32.mrb[0].mxu0
    %v5633 = vadd.f32 %v5408, %v5632
    %v5634 = vpop.f32.mrb[0].mxu0
    %5635 = vmatprep.mubr.f32.mxu0 %v4783
    %5636 = vmatmul.mubr.f32.gmra.mrb[0].mxu0 %v4782
    %v5637 = vpop.f32.mrb[0].mxu0
    %v5638 = vadd.f32 %v5413, %v5637
    %v5639 = vpop.f32.mrb[0].mxu0
    %5640 = vmatprep.mubr.f32.mxu0 %v4791
    %5641 = vmatmul.mubr.f32.gmra.mrb[0].mxu0 %v4790
    %v5642 = vpop.f32.mrb[0].mxu0
    %v5643 = vadd.f32 %v5418, %v5642
    %v5644 = vpop.f32.mrb[0].mxu0
    %5645 = vmatprep.mubr.f32.mxu0 %v4799
    %5646 = vmatmul.mubr.f32.gmra.mrb[0].mxu0 %v4798
    %v5647 = vpop.f32.mrb[0].mxu0
    %v5648 = vadd.f32 %v5423, %v5647
    %v5649 = vpop.f32.mrb[0].mxu0
    %5650 = vmatprep.mubr.f32.mxu0 %v4807
    %5651 = vmatmul.mubr.f32.gmra.mrb[0].mxu0 %v4806
    %v5652 = vpop.f32.mrb[0].mxu0
    %v5653 = vadd.f32 %v5428, %v5652
    %v5654 = vpop.f32.mrb[0].mxu0
    %5655 = vmatprep.mubr.f32.mxu0 %v4815
    %5656 = vmatmul.mubr.f32.gmra.mrb[0].mxu0 %v4814
    %v5657 = vpop.f32.mrb[0].mxu0
    %v5658 = vadd.f32 %v5433, %v5657
    %v5659 = vpop.f32.mrb[0].mxu0
    %5660 = vmatprep.mubr.f32.mxu0 %v4823
    %5661 = vmatmul.mubr.f32.gmra.mrb[0].mxu0 %v4822
    %v5662 = vpop.f32.mrb[0].mxu0
    %v5663 = vadd.f32 %v5438, %v5662
    %v5664 = vpop.f32.mrb[0].mxu0
    %5665 = vmatprep.mubr.f32.mxu0 %v4831
    %5666 = vmatmul.mubr.f32.gmra.mrb[0].mxu0 %v4830
    %v5667 = vpop.f32.mrb[0].mxu0
    %v5668 = vadd.f32 %v5443, %v5667
    %v5669 = vpop.f32.mrb[0].mxu0
    %5670 = vmatprep.mubr.f32.mxu0 %v4839
    %5671 = vmatmul.mubr.f32.gmra.mrb[0].mxu0 %v4838
    %v5672 = vpop.f32.mrb[0].mxu0
    %v5673 = vadd.f32 %v5448, %v5672
    %v5674 = vpop.f32.mrb[0].mxu0
    %5675 = vmatprep.mubr.f32.mxu0 %v4847
    %5676 = vmatmul.mubr.f32.gmra.mrb[0].mxu0 %v4846
    %v5677 = vpop.f32.mrb[0].mxu0
    %v5678 = vadd.f32 %v5453, %v5677
    %v5679 = vpop.f32.mrb[0].mxu0
    %5680 = vmatprep.mubr.f32.mxu0 %v4855
    %5681 = vmatmul.mubr.f32.gmra.mrb[0].mxu0 %v4854
    %v5682 = vpop.f32.mrb[0].mxu0
    %v5683 = vadd.f32 %v5458, %v5682
    %v5684 = vpop.f32.mrb[0].mxu0
    %5685 = vmatprep.mubr.f32.mxu0 %v4863
    %5686 = vmatmul.mubr.f32.gmra.mrb[0].mxu0 %v4862
    %v5687 = vpop.f32.mrb[0].mxu0
    %v5688 = vadd.f32 %v5463, %v5687
    %v5689 = vpop.f32.mrb[0].mxu0
    %5690 = vmatprep.mubr.f32.mxu0 %v4871
    %5691 = vmatmul.mubr.f32.gmra.mrb[0].mxu0 %v4870
    %v5692 = vpop.f32.mrb[0].mxu0
    %v5693 = vadd.f32 %v5468, %v5692
    %v5694 = vpop.f32.mrb[0].mxu0
    %5695 = vmatprep.mubr.f32.mxu0 %v4879
    %5696 = vmatmul.mubr.f32.gmra.mrb[0].mxu0 %v4878
    %v5697 = vpop.f32.mrb[0].mxu0
    %v5698 = vadd.f32 %v5473, %v5697
    %v5699 = vpop.f32.mrb[0].mxu0
    %5700 = vmatprep.mubr.f32.mxu0 %v4887
    %5701 = vmatmul.mubr.f32.gmra.mrb[0].mxu0 %v4886
    %v5702 = vpop.f32.mrb[0].mxu0
    %v5703 = vadd.f32 %v5478, %v5702
    %v5704 = vpop.f32.mrb[0].mxu0
    %5705 = vmatprep.mubr.f32.mxu0 %v4895
    %5706 = vmatmul.mubr.f32.gmra.mrb[0].mxu0 %v4894
    %v5707 = vpop.f32.mrb[0].mxu0
    %v5708 = vadd.f32 %v5483, %v5707
    %v5709 = vpop.f32.mrb[0].mxu0
    %5710 = vmatprep.mubr.f32.mxu0 %v4903
    %5711 = vmatmul.mubr.f32.gmra.mrb[0].mxu0 %v4902
    %v5712 = vpop.f32.mrb[0].mxu0
    %v5713 = vadd.f32 %v5488, %v5712
    %v5714 = vpop.f32.mrb[0].mxu0
    %5715 = vdwg.mxu0
    %5716 = vmatprep.subr.mxu0 0.0
    %5717 = vmatpush1.msra.mxu0 %v5002
    %5718 = vmatprep.subr.mxu0 0.0
    %5719 = vmatpush1.msra.mxu0 %v5003
    %5720 = vmatprep.subr.mxu0 0.0
    %5721 = vmatpush1.msra.mxu0 %v5004
    %5722 = vmatprep.subr.mxu0 0.0
    %5723 = vmatpush1.msra.mxu0 %v5005
    %5724 = vmatprep.subr.mxu0 0.0
    %5725 = vmatpush1.msra.mxu0 %v5006
    %5726 = vmatprep.subr.mxu0 0.0
    %5727 = vmatpush1.msra.mxu0 %v5007
    %5728 = vmatprep.subr.mxu0 0.0
    %5729 = vmatpush1.msra.mxu0 %v5008
    %5730 = vmatprep.subr.mxu0 0.0
    %5731 = vmatpush1.msra.mxu0 %v5009
    %5732 = vmatprep.subr.mxu0 0.0
    %5733 = vmatpush1.msra.mxu0 %v5010
    %5734 = vmatprep.subr.mxu0 0.0
    %5735 = vmatpush1.msra.mxu0 %v5011
    %5736 = vmatprep.subr.mxu0 0.0
    %5737 = vmatpush1.msra.mxu0 %v5012
    %5738 = vmatprep.subr.mxu0 0.0
    %5739 = vmatpush1.msra.mxu0 %v5013
    %5740 = vmatprep.subr.mxu0 0.0
    %5741 = vmatpush1.msra.mxu0 %v5014
    %5742 = vmatprep.subr.mxu0 0.0
    %5743 = vmatpush1.msra.mxu0 %v5015
    %5744 = vmatprep.subr.mxu0 0.0
    %5745 = vmatpush1.msra.mxu0 %v5016
    %5746 = vmatprep.subr.mxu0 0.0
    %5747 = vmatpush1.msra.mxu0 %v5017
    %5748 = vmatprep.subr.mxu0 0.0
    %5749 = vmatpush1.msra.mxu0 %v5018
    %5750 = vmatprep.subr.mxu0 0.0
    %5751 = vmatpush1.msra.mxu0 %v5019
    %5752 = vmatprep.subr.mxu0 0.0
    %5753 = vmatpush1.msra.mxu0 %v5020
    %5754 = vmatprep.subr.mxu0 0.0
    %5755 = vmatpush1.msra.mxu0 %v5021
    %5756 = vmatprep.subr.mxu0 0.0
    %5757 = vmatpush1.msra.mxu0 %v5022
    %5758 = vmatprep.subr.mxu0 0.0
    %5759 = vmatpush1.msra.mxu0 %v5023
    %5760 = vmatprep.subr.mxu0 0.0
    %5761 = vmatpush1.msra.mxu0 %v5024
    %5762 = vmatprep.subr.mxu0 0.0
    %5763 = vmatpush1.msra.mxu0 %v5025
    %5764 = vmatprep.subr.mxu0 0.0
    %5765 = vmatpush1.msra.mxu0 %v5026
    %5766 = vmatprep.subr.mxu0 0.0
    %5767 = vmatpush1.msra.mxu0 %v5027
    %5768 = vmatprep.subr.mxu0 0.0
    %5769 = vmatpush1.msra.mxu0 %v5028
    %5770 = vmatprep.subr.mxu0 0.0
    %5771 = vmatpush1.msra.mxu0 %v5029
    %5772 = vmatprep.subr.mxu0 0.0
    %5773 = vmatpush1.msra.mxu0 %v5030
    %5774 = vmatprep.subr.mxu0 0.0
    %5775 = vmatpush1.msra.mxu0 %v5031
    %5776 = vmatprep.subr.mxu0 0.0
    %5777 = vmatpush1.msra.mxu0 %v5032
    %5778 = vmatprep.subr.mxu0 0.0
    %5779 = vmatpush1.msra.mxu0 %v5033
    %5780 = vmatprep.mubr.f32.mxu0 %v4657
    %5781 = vmatmul.mubr.f32.gmra.mrb[0].mxu0 %v4656
    %v5782 = vpop.f32.mrb[0].mxu0
    %v5783 = vadd.f32 %v5558, %v5782
    %v5784 = vpop.f32.mrb[0].mxu0
    %5785 = vmatprep.mubr.f32.mxu0 %v4665
    %5786 = vmatmul.mubr.f32.gmra.mrb[0].mxu0 %v4664
    %v5787 = vpop.f32.mrb[0].mxu0
    %v5788 = vadd.f32 %v5563, %v5787
    %v5789 = vpop.f32.mrb[0].mxu0
    %5790 = vmatprep.mubr.f32.mxu0 %v4673
    %5791 = vmatmul.mubr.f32.gmra.mrb[0].mxu0 %v4672
    %v5792 = vpop.f32.mrb[0].mxu0
    %v5793 = vadd.f32 %v5568, %v5792
    %v5794 = vpop.f32.mrb[0].mxu0
    %5795 = vmatprep.mubr.f32.mxu0 %v4681
    %5796 = vmatmul.mubr.f32.gmra.mrb[0].mxu0 %v4680
    %v5797 = vpop.f32.mrb[0].mxu0
    %v5798 = vadd.f32 %v5573, %v5797
    %v5799 = vpop.f32.mrb[0].mxu0
    %5800 = vmatprep.mubr.f32.mxu0 %v4689
    %5801 = vmatmul.mubr.f32.gmra.mrb[0].mxu0 %v4688
    %v5802 = vpop.f32.mrb[0].mxu0
    %v5803 = vadd.f32 %v5578, %v5802
    %v5804 = vpop.f32.mrb[0].mxu0
    %5805 = vmatprep.mubr.f32.mxu0 %v4697
    %5806 = vmatmul.mubr.f32.gmra.mrb[0].mxu0 %v4696
    %v5807 = vpop.f32.mrb[0].mxu0
    %v5808 = vadd.f32 %v5583, %v5807
    %v5809 = vpop.f32.mrb[0].mxu0
    %5810 = vmatprep.mubr.f32.mxu0 %v4705
    %5811 = vmatmul.mubr.f32.gmra.mrb[0].mxu0 %v4704
    %v5812 = vpop.f32.mrb[0].mxu0
    %v5813 = vadd.f32 %v5588, %v5812
    %v5814 = vpop.f32.mrb[0].mxu0
    %5815 = vmatprep.mubr.f32.mxu0 %v4713
    %5816 = vmatmul.mubr.f32.gmra.mrb[0].mxu0 %v4712
    %v5817 = vpop.f32.mrb[0].mxu0
    %v5818 = vadd.f32 %v5593, %v5817
    %v5819 = vpop.f32.mrb[0].mxu0
    %5820 = vmatprep.mubr.f32.mxu0 %v4721
    %5821 = vmatmul.mubr.f32.gmra.mrb[0].mxu0 %v4720
    %v5822 = vpop.f32.mrb[0].mxu0
    %v5823 = vadd.f32 %v5598, %v5822
    %v5824 = vpop.f32.mrb[0].mxu0
    %5825 = vmatprep.mubr.f32.mxu0 %v4729
    %5826 = vmatmul.mubr.f32.gmra.mrb[0].mxu0 %v4728
    %v5827 = vpop.f32.mrb[0].mxu0
    %v5828 = vadd.f32 %v5603, %v5827
    %v5829 = vpop.f32.mrb[0].mxu0
    %5830 = vmatprep.mubr.f32.mxu0 %v4737
    %5831 = vmatmul.mubr.f32.gmra.mrb[0].mxu0 %v4736
    %v5832 = vpop.f32.mrb[0].mxu0
    %v5833 = vadd.f32 %v5608, %v5832
    %v5834 = vpop.f32.mrb[0].mxu0
    %5835 = vmatprep.mubr.f32.mxu0 %v4745
    %5836 = vmatmul.mubr.f32.gmra.mrb[0].mxu0 %v4744
    %v5837 = vpop.f32.mrb[0].mxu0
    %v5838 = vadd.f32 %v5613, %v5837
    %v5839 = vpop.f32.mrb[0].mxu0
    %5840 = vmatprep.mubr.f32.mxu0 %v4753
    %5841 = vmatmul.mubr.f32.gmra.mrb[0].mxu0 %v4752
    %v5842 = vpop.f32.mrb[0].mxu0
    %v5843 = vadd.f32 %v5618, %v5842
    %v5844 = vpop.f32.mrb[0].mxu0
    %5845 = vmatprep.mubr.f32.mxu0 %v4761
    %5846 = vmatmul.mubr.f32.gmra.mrb[0].mxu0 %v4760
    %v5847 = vpop.f32.mrb[0].mxu0
    %v5848 = vadd.f32 %v5623, %v5847
    %v5849 = vpop.f32.mrb[0].mxu0
    %5850 = vmatprep.mubr.f32.mxu0 %v4769
    %5851 = vmatmul.mubr.f32.gmra.mrb[0].mxu0 %v4768
    %v5852 = vpop.f32.mrb[0].mxu0
    %v5853 = vadd.f32 %v5628, %v5852
    %v5854 = vpop.f32.mrb[0].mxu0
    %5855 = vmatprep.mubr.f32.mxu0 %v4777
    %5856 = vmatmul.mubr.f32.gmra.mrb[0].mxu0 %v4776
    %v5857 = vpop.f32.mrb[0].mxu0
    %v5858 = vadd.f32 %v5633, %v5857
    %v5859 = vpop.f32.mrb[0].mxu0
    %5860 = vmatprep.mubr.f32.mxu0 %v4785
    %5861 = vmatmul.mubr.f32.gmra.mrb[0].mxu0 %v4784
    %v5862 = vpop.f32.mrb[0].mxu0
    %v5863 = vadd.f32 %v5638, %v5862
    %v5864 = vpop.f32.mrb[0].mxu0
    %5865 = vmatprep.mubr.f32.mxu0 %v4793
    %5866 = vmatmul.mubr.f32.gmra.mrb[0].mxu0 %v4792
    %v5867 = vpop.f32.mrb[0].mxu0
    %v5868 = vadd.f32 %v5643, %v5867
    %v5869 = vpop.f32.mrb[0].mxu0
    %5870 = vmatprep.mubr.f32.mxu0 %v4801
    %5871 = vmatmul.mubr.f32.gmra.mrb[0].mxu0 %v4800
    %v5872 = vpop.f32.mrb[0].mxu0
    %v5873 = vadd.f32 %v5648, %v5872
    %v5874 = vpop.f32.mrb[0].mxu0
    %5875 = vmatprep.mubr.f32.mxu0 %v4809
    %5876 = vmatmul.mubr.f32.gmra.mrb[0].mxu0 %v4808
    %v5877 = vpop.f32.mrb[0].mxu0
    %v5878 = vadd.f32 %v5653, %v5877
    %v5879 = vpop.f32.mrb[0].mxu0
    %5880 = vmatprep.mubr.f32.mxu0 %v4817
    %5881 = vmatmul.mubr.f32.gmra.mrb[0].mxu0 %v4816
    %v5882 = vpop.f32.mrb[0].mxu0
    %v5883 = vadd.f32 %v5658, %v5882
    %v5884 = vpop.f32.mrb[0].mxu0
    %5885 = vmatprep.mubr.f32.mxu0 %v4825
    %5886 = vmatmul.mubr.f32.gmra.mrb[0].mxu0 %v4824
    %v5887 = vpop.f32.mrb[0].mxu0
    %v5888 = vadd.f32 %v5663, %v5887
    %v5889 = vpop.f32.mrb[0].mxu0
    %5890 = vmatprep.mubr.f32.mxu0 %v4833
    %5891 = vmatmul.mubr.f32.gmra.mrb[0].mxu0 %v4832
    %v5892 = vpop.f32.mrb[0].mxu0
    %v5893 = vadd.f32 %v5668, %v5892
    %v5894 = vpop.f32.mrb[0].mxu0
    %5895 = vmatprep.mubr.f32.mxu0 %v4841
    %5896 = vmatmul.mubr.f32.gmra.mrb[0].mxu0 %v4840
    %v5897 = vpop.f32.mrb[0].mxu0
    %v5898 = vadd.f32 %v5673, %v5897
    %v5899 = vpop.f32.mrb[0].mxu0
    %5900 = vmatprep.mubr.f32.mxu0 %v4849
    %5901 = vmatmul.mubr.f32.gmra.mrb[0].mxu0 %v4848
    %v5902 = vpop.f32.mrb[0].mxu0
    %v5903 = vadd.f32 %v5678, %v5902
    %v5904 = vpop.f32.mrb[0].mxu0
    %5905 = vmatprep.mubr.f32.mxu0 %v4857
    %5906 = vmatmul.mubr.f32.gmra.mrb[0].mxu0 %v4856
    %v5907 = vpop.f32.mrb[0].mxu0
    %v5908 = vadd.f32 %v5683, %v5907
    %v5909 = vpop.f32.mrb[0].mxu0
    %5910 = vmatprep.mubr.f32.mxu0 %v4865
    %5911 = vmatmul.mubr.f32.gmra.mrb[0].mxu0 %v4864
    %v5912 = vpop.f32.mrb[0].mxu0
    %v5913 = vadd.f32 %v5688, %v5912
    %v5914 = vpop.f32.mrb[0].mxu0
    %5915 = vmatprep.mubr.f32.mxu0 %v4873
    %5916 = vmatmul.mubr.f32.gmra.mrb[0].mxu0 %v4872
    %v5917 = vpop.f32.mrb[0].mxu0
    %v5918 = vadd.f32 %v5693, %v5917
    %v5919 = vpop.f32.mrb[0].mxu0
    %5920 = vmatprep.mubr.f32.mxu0 %v4881
    %5921 = vmatmul.mubr.f32.gmra.mrb[0].mxu0 %v4880
    %v5922 = vpop.f32.mrb[0].mxu0
    %v5923 = vadd.f32 %v5698, %v5922
    %v5924 = vpop.f32.mrb[0].mxu0
    %5925 = vmatprep.mubr.f32.mxu0 %v4889
    %5926 = vmatmul.mubr.f32.gmra.mrb[0].mxu0 %v4888
    %v5927 = vpop.f32.mrb[0].mxu0
    %v5928 = vadd.f32 %v5703, %v5927
    %v5929 = vpop.f32.mrb[0].mxu0
    %5930 = vmatprep.mubr.f32.mxu0 %v4897
    %5931 = vmatmul.mubr.f32.gmra.mrb[0].mxu0 %v4896
    %v5932 = vpop.f32.mrb[0].mxu0
    %v5933 = vadd.f32 %v5708, %v5932
    %v5934 = vpop.f32.mrb[0].mxu0
    %5935 = vmatprep.mubr.f32.mxu0 %v4905
    %5936 = vmatmul.mubr.f32.gmra.mrb[0].mxu0 %v4904
    %v5937 = vpop.f32.mrb[0].mxu0
    %v5938 = vadd.f32 %v5713, %v5937
    %v5939 = vpop.f32.mrb[0].mxu0
    %5940 = vdwg.mxu0
    %v5941 = vsub.f32 0.0, %v5783
    %v5942 = vsub.f32 0.0, %v5788
    %v5943 = vsub.f32 0.0, %v5793
    %v5944 = vsub.f32 0.0, %v5798
    %v5945 = vsub.f32 0.0, %v5803
    %v5946 = vsub.f32 0.0, %v5808
    %v5947 = vsub.f32 0.0, %v5813
    %v5948 = vsub.f32 0.0, %v5818
    %v5949 = vsub.f32 0.0, %v5823
    %v5950 = vsub.f32 0.0, %v5828
    %v5951 = vsub.f32 0.0, %v5833
    %v5952 = vsub.f32 0.0, %v5838
    %v5953 = vsub.f32 0.0, %v5843
    %v5954 = vsub.f32 0.0, %v5848
    %v5955 = vsub.f32 0.0, %v5853
    %v5956 = vsub.f32 0.0, %v5858
    %v5957 = vsub.f32 0.0, %v5863
    %v5958 = vsub.f32 0.0, %v5868
    %v5959 = vsub.f32 0.0, %v5873
    %v5960 = vsub.f32 0.0, %v5878
    %v5961 = vsub.f32 0.0, %v5883
    %v5962 = vsub.f32 0.0, %v5888
    %v5963 = vsub.f32 0.0, %v5893
    %v5964 = vsub.f32 0.0, %v5898
    %v5965 = vsub.f32 0.0, %v5903
    %v5966 = vsub.f32 0.0, %v5908
    %v5967 = vsub.f32 0.0, %v5913
    %v5968 = vsub.f32 0.0, %v5918
    %v5969 = vsub.f32 0.0, %v5923
    %v5970 = vsub.f32 0.0, %v5928
    %v5971 = vsub.f32 0.0, %v5933
    %v5972 = vsub.f32 0.0, %v5938
    %v5973 = vmul.f32 %v5941, 1.442695
    %v5974 = vpow.pop %v5973
    %v5975 = vmul.f32 %v5942, 1.442695
    %v5976 = vpow.pop %v5975
    %v5977 = vmul.f32 %v5943, 1.442695
    %v5978 = vpow.pop %v5977
    %v5979 = vmul.f32 %v5944, 1.442695
    %v5980 = vpow.pop %v5979
    %v5981 = vmul.f32 %v5945, 1.442695
    %v5982 = vpow.pop %v5981
    %v5983 = vmul.f32 %v5946, 1.442695
    %v5984 = vpow.pop %v5983
    %v5985 = vmul.f32 %v5947, 1.442695
    %v5986 = vpow.pop %v5985
    %v5987 = vmul.f32 %v5948, 1.442695
    %v5988 = vpow.pop %v5987
    %v5989 = vmul.f32 %v5949, 1.442695
    %v5990 = vpow.pop %v5989
    %v5991 = vmul.f32 %v5950, 1.442695
    %v5992 = vpow.pop %v5991
    %v5993 = vmul.f32 %v5951, 1.442695
    %v5994 = vpow.pop %v5993
    %v5995 = vmul.f32 %v5952, 1.442695
    %v5996 = vpow.pop %v5995
    %v5997 = vmul.f32 %v5953, 1.442695
    %v5998 = vpow.pop %v5997
    %v5999 = vmul.f32 %v5954, 1.442695
    %v6000 = vpow.pop %v5999
    %v6001 = vmul.f32 %v5955, 1.442695
    %v6002 = vpow.pop %v6001
    %v6003 = vmul.f32 %v5956, 1.442695
    %v6004 = vpow.pop %v6003
    %v6005 = vmul.f32 %v5957, 1.442695
    %v6006 = vpow.pop %v6005
    %v6007 = vmul.f32 %v5958, 1.442695
    %v6008 = vpow.pop %v6007
    %v6009 = vmul.f32 %v5959, 1.442695
    %v6010 = vpow.pop %v6009
    %v6011 = vmul.f32 %v5960, 1.442695
    %v6012 = vpow.pop %v6011
    %v6013 = vmul.f32 %v5961, 1.442695
    %v6014 = vpow.pop %v6013
    %v6015 = vmul.f32 %v5962, 1.442695
    %v6016 = vpow.pop %v6015
    %v6017 = vmul.f32 %v5963, 1.442695
    %v6018 = vpow.pop %v6017
    %v6019 = vmul.f32 %v5964, 1.442695
    %v6020 = vpow.pop %v6019
    %v6021 = vmul.f32 %v5965, 1.442695
    %v6022 = vpow.pop %v6021
    %v6023 = vmul.f32 %v5966, 1.442695
    %v6024 = vpow.pop %v6023
    %v6025 = vmul.f32 %v5967, 1.442695
    %v6026 = vpow.pop %v6025
    %v6027 = vmul.f32 %v5968, 1.442695
    %v6028 = vpow.pop %v6027
    %v6029 = vmul.f32 %v5969, 1.442695
    %v6030 = vpow.pop %v6029
    %v6031 = vmul.f32 %v5970, 1.442695
    %v6032 = vpow.pop %v6031
    %v6033 = vmul.f32 %v5971, 1.442695
    %v6034 = vpow.pop %v6033
    %v6035 = vmul.f32 %v5972, 1.442695
    %v6036 = vpow.pop %v6035
    %v6037 = vadd.f32 %v5974, 1.0
    %v6038 = vadd.f32 %v5976, 1.0
    %v6039 = vadd.f32 %v5978, 1.0
    %v6040 = vadd.f32 %v5980, 1.0
    %v6041 = vadd.f32 %v5982, 1.0
    %v6042 = vadd.f32 %v5984, 1.0
    %v6043 = vadd.f32 %v5986, 1.0
    %v6044 = vadd.f32 %v5988, 1.0
    %v6045 = vadd.f32 %v5990, 1.0
    %v6046 = vadd.f32 %v5992, 1.0
    %v6047 = vadd.f32 %v5994, 1.0
    %v6048 = vadd.f32 %v5996, 1.0
    %v6049 = vadd.f32 %v5998, 1.0
    %v6050 = vadd.f32 %v6000, 1.0
    %v6051 = vadd.f32 %v6002, 1.0
    %v6052 = vadd.f32 %v6004, 1.0
    %v6053 = vadd.f32 %v6006, 1.0
    %v6054 = vadd.f32 %v6008, 1.0
    %v6055 = vadd.f32 %v6010, 1.0
    %v6056 = vadd.f32 %v6012, 1.0
    %v6057 = vadd.f32 %v6014, 1.0
    %v6058 = vadd.f32 %v6016, 1.0
    %v6059 = vadd.f32 %v6018, 1.0
    %v6060 = vadd.f32 %v6020, 1.0
    %v6061 = vadd.f32 %v6022, 1.0
    %v6062 = vadd.f32 %v6024, 1.0
    %v6063 = vadd.f32 %v6026, 1.0
    %v6064 = vadd.f32 %v6028, 1.0
    %v6065 = vadd.f32 %v6030, 1.0
    %v6066 = vadd.f32 %v6032, 1.0
    %v6067 = vadd.f32 %v6034, 1.0
    %v6068 = vadd.f32 %v6036, 1.0
    %v6069 = vrcp.pop %v6037
    %v6070 = vrcp.pop %v6038
    %v6071 = vrcp.pop %v6039
    %v6072 = vrcp.pop %v6040
    %v6073 = vrcp.pop %v6041
    %v6074 = vrcp.pop %v6042
    %v6075 = vrcp.pop %v6043
    %v6076 = vrcp.pop %v6044
    %v6077 = vrcp.pop %v6045
    %v6078 = vrcp.pop %v6046
    %v6079 = vrcp.pop %v6047
    %v6080 = vrcp.pop %v6048
    %v6081 = vrcp.pop %v6049
    %v6082 = vrcp.pop %v6050
    %v6083 = vrcp.pop %v6051
    %v6084 = vrcp.pop %v6052
    %v6085 = vrcp.pop %v6053
    %v6086 = vrcp.pop %v6054
    %v6087 = vrcp.pop %v6055
    %v6088 = vrcp.pop %v6056
    %v6089 = vrcp.pop %v6057
    %v6090 = vrcp.pop %v6058
    %v6091 = vrcp.pop %v6059
    %v6092 = vrcp.pop %v6060
    %v6093 = vrcp.pop %v6061
    %v6094 = vrcp.pop %v6062
    %v6095 = vrcp.pop %v6063
    %v6096 = vrcp.pop %v6064
    %v6097 = vrcp.pop %v6065
    %v6098 = vrcp.pop %v6066
    %v6099 = vrcp.pop %v6067
    %v6100 = vrcp.pop %v6068
    %v6101 = vld [vmem:[#allocation4] sm:$0xff]
    %v6102 = vld [vmem:[#allocation4 + $0x8] sm:$0xff]
    %v6103 = vld [vmem:[#allocation4 + $0x10] sm:$0xff]
    %v6104 = vld [vmem:[#allocation4 + $0x18] sm:$0xff]
    %v6105 = vld [vmem:[#allocation4 + $0x20] sm:$0xff]
    %v6106 = vld [vmem:[#allocation4 + $0x28] sm:$0xff]
    %v6107 = vld [vmem:[#allocation4 + $0x30] sm:$0xff]
    %v6108 = vld [vmem:[#allocation4 + $0x38] sm:$0xff]
    %v6109 = vld [vmem:[#allocation4 + $0x40] sm:$0xff]
    %v6110 = vld [vmem:[#allocation4 + $0x48] sm:$0xff]
    %v6111 = vld [vmem:[#allocation4 + $0x50] sm:$0xff]
    %v6112 = vld [vmem:[#allocation4 + $0x58] sm:$0xff]
    %v6113 = vld [vmem:[#allocation4 + $0x60] sm:$0xff]
    %v6114 = vld [vmem:[#allocation4 + $0x68] sm:$0xff]
    %v6115 = vld [vmem:[#allocation4 + $0x70] sm:$0xff]
    %v6116 = vld [vmem:[#allocation4 + $0x78] sm:$0xff]
    %vm6117 = vcmask 523264
    %v6119 = vsel %vm6117, %v6069, 0
    %v6122 = vsel %vm6117, %v6070, 0
    %v6125 = vsel %vm6117, %v6071, 0
    %v6128 = vsel %vm6117, %v6072, 0
    %v6131 = vsel %vm6117, %v6073, 0
    %v6134 = vsel %vm6117, %v6074, 0
    %v6137 = vsel %vm6117, %v6075, 0
    %v6140 = vsel %vm6117, %v6076, 0
    %v6143 = vsel %vm6117, %v6077, 0
    %v6146 = vsel %vm6117, %v6078, 0
    %v6149 = vsel %vm6117, %v6079, 0
    %v6152 = vsel %vm6117, %v6080, 0
    %v6155 = vsel %vm6117, %v6081, 0
    %v6158 = vsel %vm6117, %v6082, 0
    %v6161 = vsel %vm6117, %v6083, 0
    %v6164 = vsel %vm6117, %v6084, 0
    %v6167 = vsel %vm6117, %v6085, 0
    %v6170 = vsel %vm6117, %v6086, 0
    %v6173 = vsel %vm6117, %v6087, 0
    %v6176 = vsel %vm6117, %v6088, 0
    %v6179 = vsel %vm6117, %v6089, 0
    %v6182 = vsel %vm6117, %v6090, 0
    %v6185 = vsel %vm6117, %v6091, 0
    %v6188 = vsel %vm6117, %v6092, 0
    %v6191 = vsel %vm6117, %v6093, 0
    %v6194 = vsel %vm6117, %v6094, 0
    %v6197 = vsel %vm6117, %v6095, 0
    %v6200 = vsel %vm6117, %v6096, 0
    %v6203 = vsel %vm6117, %v6097, 0
    %v6206 = vsel %vm6117, %v6098, 0
    %v6209 = vsel %vm6117, %v6099, 0
    %v6212 = vsel %vm6117, %v6100, 0
    %6214 = vmatprep.subr.mxu0 %v6102
    %6215 = vmatpush1.msra.mxu0 %v6101
    %6216 = vmatprep.subr.mxu0 %v6104
    %6217 = vmatpush1.msra.mxu0 %v6103
    %6218 = vmatprep.subr.mxu0 %v6106
    %6219 = vmatpush1.msra.mxu0 %v6105
    %6220 = vmatprep.subr.mxu0 %v6108
    %6221 = vmatpush1.msra.mxu0 %v6107
    %6222 = vmatprep.subr.mxu0 %v6110
    %6223 = vmatpush1.msra.mxu0 %v6109
    %6224 = vmatprep.subr.mxu0 %v6112
    %6225 = vmatpush1.msra.mxu0 %v6111
    %6226 = vmatprep.subr.mxu0 %v6114
    %6227 = vmatpush1.msra.mxu0 %v6113
    %6228 = vmatprep.subr.mxu0 %v6116
    %6229 = vmatpush1.msra.mxu0 %v6115
    %6230 = vmatprep.subr.mxu0 0.0
    %6231 = vmatpush1.msra.mxu0 0.0
    %6232 = vmatprep.subr.mxu0 0.0
    %6233 = vmatpush1.msra.mxu0 0.0
    %6234 = vmatprep.subr.mxu0 0.0
    %6235 = vmatpush1.msra.mxu0 0.0
    %6236 = vmatprep.subr.mxu0 0.0
    %6237 = vmatpush1.msra.mxu0 0.0
    %6238 = vmatprep.subr.mxu0 0.0
    %6239 = vmatpush1.msra.mxu0 0.0
    %6240 = vmatprep.subr.mxu0 0.0
    %6241 = vmatpush1.msra.mxu0 0.0
    %6242 = vmatprep.subr.mxu0 0.0
    %6243 = vmatpush1.msra.mxu0 0.0
    %6244 = vmatprep.subr.mxu0 0.0
    %6245 = vmatpush1.msra.mxu0 0.0
    %6246 = vmatprep.subr.mxu0 0.0
    %6247 = vmatpush1.msra.mxu0 0.0
    %6248 = vmatprep.subr.mxu0 0.0
    %6249 = vmatpush1.msra.mxu0 0.0
    %6250 = vmatprep.subr.mxu0 0.0
    %6251 = vmatpush1.msra.mxu0 0.0
    %6252 = vmatprep.subr.mxu0 0.0
    %6253 = vmatpush1.msra.mxu0 0.0
    %6254 = vmatprep.subr.mxu0 0.0
    %6255 = vmatpush1.msra.mxu0 0.0
    %6256 = vmatprep.subr.mxu0 0.0
    %6257 = vmatpush1.msra.mxu0 0.0
    %6258 = vmatprep.subr.mxu0 0.0
    %6259 = vmatpush1.msra.mxu0 0.0
    %6260 = vmatprep.subr.mxu0 0.0
    %6261 = vmatpush1.msra.mxu0 0.0
    %6262 = vmatprep.subr.mxu0 0.0
    %6263 = vmatpush1.msra.mxu0 0.0
    %6264 = vmatprep.subr.mxu0 0.0
    %6265 = vmatpush1.msra.mxu0 0.0
    %6266 = vmatprep.subr.mxu0 0.0
    %6267 = vmatpush1.msra.mxu0 0.0
    %6268 = vmatprep.subr.mxu0 0.0
    %6269 = vmatpush1.msra.mxu0 0.0
    %6270 = vmatprep.subr.mxu0 0.0
    %6271 = vmatpush1.msra.mxu0 0.0
    %6272 = vmatprep.subr.mxu0 0.0
    %6273 = vmatpush1.msra.mxu0 0.0
    %6274 = vmatprep.subr.mxu0 0.0
    %6275 = vmatpush1.msra.mxu0 0.0
    %6276 = vmatprep.subr.mxu0 0.0
    %6277 = vmatpush1.msra.mxu0 0.0
    %6278 = vmatprep.mubr.f32.mxu0 0.0
    %6279 = vmatmul.mubr.f32.gmra.mrb[0].mxu0 %v6119
    %v6280 = vpop.f32.mrb[0].mxu0
    %v6281 = vadd.f32 0.0, %v6280
    %v6282 = vpop.f32.mrb[0].mxu0
    %v6283 = vadd.f32 0.0, %v6282
    %6284 = vmatprep.mubr.f32.mxu0 0.0
    %6285 = vmatmul.mubr.f32.gmra.mrb[0].mxu0 %v6122
    %v6286 = vpop.f32.mrb[0].mxu0
    %v6287 = vadd.f32 0.0, %v6286
    %v6288 = vpop.f32.mrb[0].mxu0
    %v6289 = vadd.f32 0.0, %v6288
    %6290 = vmatprep.mubr.f32.mxu0 0.0
    %6291 = vmatmul.mubr.f32.gmra.mrb[0].mxu0 %v6125
    %v6292 = vpop.f32.mrb[0].mxu0
    %v6293 = vadd.f32 0.0, %v6292
    %v6294 = vpop.f32.mrb[0].mxu0
    %v6295 = vadd.f32 0.0, %v6294
    %6296 = vmatprep.mubr.f32.mxu0 0.0
    %6297 = vmatmul.mubr.f32.gmra.mrb[0].mxu0 %v6128
    %v6298 = vpop.f32.mrb[0].mxu0
    %v6299 = vadd.f32 0.0, %v6298
    %v6300 = vpop.f32.mrb[0].mxu0
    %v6301 = vadd.f32 0.0, %v6300
    %6302 = vmatprep.mubr.f32.mxu0 0.0
    %6303 = vmatmul.mubr.f32.gmra.mrb[0].mxu0 %v6131
    %v6304 = vpop.f32.mrb[0].mxu0
    %v6305 = vadd.f32 0.0, %v6304
    %v6306 = vpop.f32.mrb[0].mxu0
    %v6307 = vadd.f32 0.0, %v6306
    %6308 = vmatprep.mubr.f32.mxu0 0.0
    %6309 = vmatmul.mubr.f32.gmra.mrb[0].mxu0 %v6134
    %v6310 = vpop.f32.mrb[0].mxu0
    %v6311 = vadd.f32 0.0, %v6310
    %v6312 = vpop.f32.mrb[0].mxu0
    %v6313 = vadd.f32 0.0, %v6312
    %6314 = vmatprep.mubr.f32.mxu0 0.0
    %6315 = vmatmul.mubr.f32.gmra.mrb[0].mxu0 %v6137
    %v6316 = vpop.f32.mrb[0].mxu0
    %v6317 = vadd.f32 0.0, %v6316
    %v6318 = vpop.f32.mrb[0].mxu0
    %v6319 = vadd.f32 0.0, %v6318
    %6320 = vmatprep.mubr.f32.mxu0 0.0
    %6321 = vmatmul.mubr.f32.gmra.mrb[0].mxu0 %v6140
    %v6322 = vpop.f32.mrb[0].mxu0
    %v6323 = vadd.f32 0.0, %v6322
    %v6324 = vpop.f32.mrb[0].mxu0
    %v6325 = vadd.f32 0.0, %v6324
    %6326 = vmatprep.mubr.f32.mxu0 0.0
    %6327 = vmatmul.mubr.f32.gmra.mrb[0].mxu0 %v6143
    %v6328 = vpop.f32.mrb[0].mxu0
    %v6329 = vadd.f32 0.0, %v6328
    %v6330 = vpop.f32.mrb[0].mxu0
    %v6331 = vadd.f32 0.0, %v6330
    %6332 = vmatprep.mubr.f32.mxu0 0.0
    %6333 = vmatmul.mubr.f32.gmra.mrb[0].mxu0 %v6146
    %v6334 = vpop.f32.mrb[0].mxu0
    %v6335 = vadd.f32 0.0, %v6334
    %v6336 = vpop.f32.mrb[0].mxu0
    %v6337 = vadd.f32 0.0, %v6336
    %6338 = vmatprep.mubr.f32.mxu0 0.0
    %6339 = vmatmul.mubr.f32.gmra.mrb[0].mxu0 %v6149
    %v6340 = vpop.f32.mrb[0].mxu0
    %v6341 = vadd.f32 0.0, %v6340
    %v6342 = vpop.f32.mrb[0].mxu0
    %v6343 = vadd.f32 0.0, %v6342
    %6344 = vmatprep.mubr.f32.mxu0 0.0
    %6345 = vmatmul.mubr.f32.gmra.mrb[0].mxu0 %v6152
    %v6346 = vpop.f32.mrb[0].mxu0
    %v6347 = vadd.f32 0.0, %v6346
    %v6348 = vpop.f32.mrb[0].mxu0
    %v6349 = vadd.f32 0.0, %v6348
    %6350 = vmatprep.mubr.f32.mxu0 0.0
    %6351 = vmatmul.mubr.f32.gmra.mrb[0].mxu0 %v6155
    %v6352 = vpop.f32.mrb[0].mxu0
    %v6353 = vadd.f32 0.0, %v6352
    %v6354 = vpop.f32.mrb[0].mxu0
    %v6355 = vadd.f32 0.0, %v6354
    %6356 = vmatprep.mubr.f32.mxu0 0.0
    %6357 = vmatmul.mubr.f32.gmra.mrb[0].mxu0 %v6158
    %v6358 = vpop.f32.mrb[0].mxu0
    %v6359 = vadd.f32 0.0, %v6358
    %v6360 = vpop.f32.mrb[0].mxu0
    %v6361 = vadd.f32 0.0, %v6360
    %6362 = vmatprep.mubr.f32.mxu0 0.0
    %6363 = vmatmul.mubr.f32.gmra.mrb[0].mxu0 %v6161
    %v6364 = vpop.f32.mrb[0].mxu0
    %v6365 = vadd.f32 0.0, %v6364
    %v6366 = vpop.f32.mrb[0].mxu0
    %v6367 = vadd.f32 0.0, %v6366
    %6368 = vmatprep.mubr.f32.mxu0 0.0
    %6369 = vmatmul.mubr.f32.gmra.mrb[0].mxu0 %v6164
    %v6370 = vpop.f32.mrb[0].mxu0
    %v6371 = vadd.f32 0.0, %v6370
    %v6372 = vpop.f32.mrb[0].mxu0
    %v6373 = vadd.f32 0.0, %v6372
    %6374 = vmatprep.mubr.f32.mxu0 0.0
    %6375 = vmatmul.mubr.f32.gmra.mrb[0].mxu0 %v6167
    %v6376 = vpop.f32.mrb[0].mxu0
    %v6377 = vadd.f32 0.0, %v6376
    %v6378 = vpop.f32.mrb[0].mxu0
    %v6379 = vadd.f32 0.0, %v6378
    %6380 = vmatprep.mubr.f32.mxu0 0.0
    %6381 = vmatmul.mubr.f32.gmra.mrb[0].mxu0 %v6170
    %v6382 = vpop.f32.mrb[0].mxu0
    %v6383 = vadd.f32 0.0, %v6382
    %v6384 = vpop.f32.mrb[0].mxu0
    %v6385 = vadd.f32 0.0, %v6384
    %6386 = vmatprep.mubr.f32.mxu0 0.0
    %6387 = vmatmul.mubr.f32.gmra.mrb[0].mxu0 %v6173
    %v6388 = vpop.f32.mrb[0].mxu0
    %v6389 = vadd.f32 0.0, %v6388
    %v6390 = vpop.f32.mrb[0].mxu0
    %v6391 = vadd.f32 0.0, %v6390
    %6392 = vmatprep.mubr.f32.mxu0 0.0
    %6393 = vmatmul.mubr.f32.gmra.mrb[0].mxu0 %v6176
    %v6394 = vpop.f32.mrb[0].mxu0
    %v6395 = vadd.f32 0.0, %v6394
    %v6396 = vpop.f32.mrb[0].mxu0
    %v6397 = vadd.f32 0.0, %v6396
    %6398 = vmatprep.mubr.f32.mxu0 0.0
    %6399 = vmatmul.mubr.f32.gmra.mrb[0].mxu0 %v6179
    %v6400 = vpop.f32.mrb[0].mxu0
    %v6401 = vadd.f32 0.0, %v6400
    %v6402 = vpop.f32.mrb[0].mxu0
    %v6403 = vadd.f32 0.0, %v6402
    %6404 = vmatprep.mubr.f32.mxu0 0.0
    %6405 = vmatmul.mubr.f32.gmra.mrb[0].mxu0 %v6182
    %v6406 = vpop.f32.mrb[0].mxu0
    %v6407 = vadd.f32 0.0, %v6406
    %v6408 = vpop.f32.mrb[0].mxu0
    %v6409 = vadd.f32 0.0, %v6408
    %6410 = vmatprep.mubr.f32.mxu0 0.0
    %6411 = vmatmul.mubr.f32.gmra.mrb[0].mxu0 %v6185
    %v6412 = vpop.f32.mrb[0].mxu0
    %v6413 = vadd.f32 0.0, %v6412
    %v6414 = vpop.f32.mrb[0].mxu0
    %v6415 = vadd.f32 0.0, %v6414
    %6416 = vmatprep.mubr.f32.mxu0 0.0
    %6417 = vmatmul.mubr.f32.gmra.mrb[0].mxu0 %v6188
    %v6418 = vpop.f32.mrb[0].mxu0
    %v6419 = vadd.f32 0.0, %v6418
    %v6420 = vpop.f32.mrb[0].mxu0
    %v6421 = vadd.f32 0.0, %v6420
    %6422 = vmatprep.mubr.f32.mxu0 0.0
    %6423 = vmatmul.mubr.f32.gmra.mrb[0].mxu0 %v6191
    %v6424 = vpop.f32.mrb[0].mxu0
    %v6425 = vadd.f32 0.0, %v6424
    %v6426 = vpop.f32.mrb[0].mxu0
    %v6427 = vadd.f32 0.0, %v6426
    %6428 = vmatprep.mubr.f32.mxu0 0.0
    %6429 = vmatmul.mubr.f32.gmra.mrb[0].mxu0 %v6194
    %v6430 = vpop.f32.mrb[0].mxu0
    %v6431 = vadd.f32 0.0, %v6430
    %v6432 = vpop.f32.mrb[0].mxu0
    %v6433 = vadd.f32 0.0, %v6432
    %6434 = vmatprep.mubr.f32.mxu0 0.0
    %6435 = vmatmul.mubr.f32.gmra.mrb[0].mxu0 %v6197
    %v6436 = vpop.f32.mrb[0].mxu0
    %v6437 = vadd.f32 0.0, %v6436
    %v6438 = vpop.f32.mrb[0].mxu0
    %v6439 = vadd.f32 0.0, %v6438
    %6440 = vmatprep.mubr.f32.mxu0 0.0
    %6441 = vmatmul.mubr.f32.gmra.mrb[0].mxu0 %v6200
    %v6442 = vpop.f32.mrb[0].mxu0
    %v6443 = vadd.f32 0.0, %v6442
    %v6444 = vpop.f32.mrb[0].mxu0
    %v6445 = vadd.f32 0.0, %v6444
    %6446 = vmatprep.mubr.f32.mxu0 0.0
    %6447 = vmatmul.mubr.f32.gmra.mrb[0].mxu0 %v6203
    %v6448 = vpop.f32.mrb[0].mxu0
    %v6449 = vadd.f32 0.0, %v6448
    %v6450 = vpop.f32.mrb[0].mxu0
    %v6451 = vadd.f32 0.0, %v6450
    %6452 = vmatprep.mubr.f32.mxu0 0.0
    %6453 = vmatmul.mubr.f32.gmra.mrb[0].mxu0 %v6206
    %v6454 = vpop.f32.mrb[0].mxu0
    %v6455 = vadd.f32 0.0, %v6454
    %v6456 = vpop.f32.mrb[0].mxu0
    %v6457 = vadd.f32 0.0, %v6456
    %6458 = vmatprep.mubr.f32.mxu0 0.0
    %6459 = vmatmul.mubr.f32.gmra.mrb[0].mxu0 %v6209
    %v6460 = vpop.f32.mrb[0].mxu0
    %v6461 = vadd.f32 0.0, %v6460
    %v6462 = vpop.f32.mrb[0].mxu0
    %v6463 = vadd.f32 0.0, %v6462
    %6464 = vmatprep.mubr.f32.mxu0 0.0
    %6465 = vmatmul.mubr.f32.gmra.mrb[0].mxu0 %v6212
    %v6466 = vpop.f32.mrb[0].mxu0
    %v6467 = vadd.f32 0.0, %v6466
    %v6468 = vpop.f32.mrb[0].mxu0
    %v6469 = vadd.f32 0.0, %v6468
    %6470 = vdwg.mxu0
    %6471 = vst [vmem:[%s9] sm:$0xff] %v6281
    %6472 = vst [vmem:[%s9 + $0x8] sm:$0xff] %v6283
    %6473 = vst [vmem:[%s9 + $0x10] sm:$0xff] %v6287
    %6474 = vst [vmem:[%s9 + $0x18] sm:$0xff] %v6289
    %6475 = vst [vmem:[%s9 + $0x20] sm:$0xff] %v6293
    %6476 = vst [vmem:[%s9 + $0x28] sm:$0xff] %v6295
    %6477 = vst [vmem:[%s9 + $0x30] sm:$0xff] %v6299
    %6478 = vst [vmem:[%s9 + $0x38] sm:$0xff] %v6301
    %6479 = vst [vmem:[%s9 + $0x40] sm:$0xff] %v6305
    %6480 = vst [vmem:[%s9 + $0x48] sm:$0xff] %v6307
    %6481 = vst [vmem:[%s9 + $0x50] sm:$0xff] %v6311
    %6482 = vst [vmem:[%s9 + $0x58] sm:$0xff] %v6313
    %6483 = vst [vmem:[%s9 + $0x60] sm:$0xff] %v6317
    %6484 = vst [vmem:[%s9 + $0x68] sm:$0xff] %v6319
    %6485 = vst [vmem:[%s9 + $0x70] sm:$0xff] %v6323
    %6486 = vst [vmem:[%s9 + $0x78] sm:$0xff] %v6325
    %6487 = vst [vmem:[%s9 + $0x80] sm:$0xff] %v6329
    %6488 = vst [vmem:[%s9 + $0x88] sm:$0xff] %v6331
    %6489 = vst [vmem:[%s9 + $0x90] sm:$0xff] %v6335
    %6490 = vst [vmem:[%s9 + $0x98] sm:$0xff] %v6337
    %6491 = vst [vmem:[%s9 + $0xa0] sm:$0xff] %v6341
    %6492 = vst [vmem:[%s9 + $0xa8] sm:$0xff] %v6343
    %6493 = vst [vmem:[%s9 + $0xb0] sm:$0xff] %v6347
    %6494 = vst [vmem:[%s9 + $0xb8] sm:$0xff] %v6349
    %6495 = vst [vmem:[%s9 + $0xc0] sm:$0xff] %v6353
    %6496 = vst [vmem:[%s9 + $0xc8] sm:$0xff] %v6355
    %6497 = vst [vmem:[%s9 + $0xd0] sm:$0xff] %v6359
    %6498 = vst [vmem:[%s9 + $0xd8] sm:$0xff] %v6361
    %6499 = vst [vmem:[%s9 + $0xe0] sm:$0xff] %v6365
    %6500 = vst [vmem:[%s9 + $0xe8] sm:$0xff] %v6367
    %6501 = vst [vmem:[%s9 + $0xf0] sm:$0xff] %v6371
    %6502 = vst [vmem:[%s9 + $0xf8] sm:$0xff] %v6373
    %6503 = vst [vmem:[%s9 + $0x100] sm:$0xff] %v6377
    %6504 = vst [vmem:[%s9 + $0x108] sm:$0xff] %v6379
    %6505 = vst [vmem:[%s9 + $0x110] sm:$0xff] %v6383
    %6506 = vst [vmem:[%s9 + $0x118] sm:$0xff] %v6385
    %6507 = vst [vmem:[%s9 + $0x120] sm:$0xff] %v6389
    %6508 = vst [vmem:[%s9 + $0x128] sm:$0xff] %v6391
    %6509 = vst [vmem:[%s9 + $0x130] sm:$0xff] %v6395
    %6510 = vst [vmem:[%s9 + $0x138] sm:$0xff] %v6397
    %6511 = vst [vmem:[%s9 + $0x140] sm:$0xff] %v6401
    %6512 = vst [vmem:[%s9 + $0x148] sm:$0xff] %v6403
    %6513 = vst [vmem:[%s9 + $0x150] sm:$0xff] %v6407
    %6514 = vst [vmem:[%s9 + $0x158] sm:$0xff] %v6409
    %6515 = vst [vmem:[%s9 + $0x160] sm:$0xff] %v6413
    %6516 = vst [vmem:[%s9 + $0x168] sm:$0xff] %v6415
    %6517 = vst [vmem:[%s9 + $0x170] sm:$0xff] %v6419
    %6518 = vst [vmem:[%s9 + $0x178] sm:$0xff] %v6421
    %6519 = vst [vmem:[%s9 + $0x180] sm:$0xff] %v6425
    %6520 = vst [vmem:[%s9 + $0x188] sm:$0xff] %v6427
    %6521 = vst [vmem:[%s9 + $0x190] sm:$0xff] %v6431
    %6522 = vst [vmem:[%s9 + $0x198] sm:$0xff] %v6433
    %6523 = vst [vmem:[%s9 + $0x1a0] sm:$0xff] %v6437
    %6524 = vst [vmem:[%s9 + $0x1a8] sm:$0xff] %v6439
    %6525 = vst [vmem:[%s9 + $0x1b0] sm:$0xff] %v6443
    %6526 = vst [vmem:[%s9 + $0x1b8] sm:$0xff] %v6445
    %6527 = vst [vmem:[%s9 + $0x1c0] sm:$0xff] %v6449
    %6528 = vst [vmem:[%s9 + $0x1c8] sm:$0xff] %v6451
    %6529 = vst [vmem:[%s9 + $0x1d0] sm:$0xff] %v6455
    %6530 = vst [vmem:[%s9 + $0x1d8] sm:$0xff] %v6457
    %6531 = vst [vmem:[%s9 + $0x1e0] sm:$0xff] %v6461
    %6532 = vst [vmem:[%s9 + $0x1e8] sm:$0xff] %v6463
    %6533 = vst [vmem:[%s9 + $0x1f0] sm:$0xff] %v6467
    %6534 = vst [vmem:[%s9 + $0x1f8] sm:$0xff] %v6469
    // Predicated region
    $region46: #{_lambda_.1} parent=1 // pred_check
      _
    $region47: #{_lambda_.1} parent=1 // pred_check_branch
      %6536 = sbr.rel (0) target = $region49
    $region48: #{_lambda_.1} parent=1 // pred_region
      _
    $region49: #{_lambda_.1} parent=1 // pred_fallthru
      _
    // Predicated region
    $region50: #{_lambda_.1} parent=1 // pred_check
      _
    $region51: #{_lambda_.1} parent=1 // pred_check_branch
      %6538 = sbr.rel (0) target = $region53
    $region52: #{_lambda_.1} parent=1 // pred_region
      _
    $region53: #{_lambda_.1} parent=1 // pred_fallthru
      _
    %6539 = vsyncpa [#allocation3], 1
    %6540 = vsyncpa [#allocation5], 1

</llo_original>
